<compile_context>
chip_gen: v7x
topology: tpu7x:2x2x1
jax: 0.10.0
libtpu: 0.0.40
codegen_flags: <defaults>
</compile_context>

<pallas_src>
import jax
import jax.numpy as jnp
from jax.experimental import pallas as pl
from jax.experimental.pallas import tpu as pltpu  # noqa: F401  (kept for parity)


# ----------------------------------------------------------------------------
# Fused kernel: 3-layer LSTM (layer-time wavefront) + FC head.
# ----------------------------------------------------------------------------
def _lstm_model_kernel(x_ref,
                       w0x_ref, w0h_ref, b0_ref,
                       w1x_ref, w1h_ref, b1_ref,
                       w2x_ref, w2h_ref, b2_ref,
                       wfc_ref, bfc_ref,
                       out_ref):
    """Refs:
      x_ref:    (T, B, D)   time-major input
      w*x_ref:  (D_in, 4H)  input->gates weight (pre-transposed), per layer
      w*h_ref:  (H, 4H)     hidden->gates weight (pre-transposed), per layer
      b*_ref:   (1, 4H)     b_ih + b_hh, per layer
      wfc_ref:  (H, O)      FC weight (pre-transposed);  bfc_ref: (1, O)
      out_ref:  (B, O)
    """
    H = w0h_ref.shape[0]
    B = out_ref.shape[0]
    T = x_ref.shape[0]

    # Hoist weight loads and bias broadcasts out of the unrolled step loop.
    w0x = w0x_ref[...]; w0h = w0h_ref[...]
    w1x = w1x_ref[...]; w1h = w1h_ref[...]
    w2x = w2x_ref[...]; w2h = w2h_ref[...]
    b0 = jnp.broadcast_to(b0_ref[...], (B, 4 * H))
    b1 = jnp.broadcast_to(b1_ref[...], (B, 4 * H))
    b2 = jnp.broadcast_to(b2_ref[...], (B, 4 * H))

    def cell(gates, c_prev):
        # Two full-vreg EUP passes over all 4H lanes, then cheap slices.
        sig = jax.nn.sigmoid(gates)          # i, f, o live in this pass
        tnh = jnp.tanh(gates)                # g lives in this pass
        i_g = sig[:, 0 * H:1 * H]
        f_g = sig[:, 1 * H:2 * H]
        g_g = tnh[:, 2 * H:3 * H]
        o_g = sig[:, 3 * H:4 * H]
        c_new = f_g * c_prev + i_g * g_g
        h_new = o_g * jnp.tanh(c_new)
        return h_new, c_new

    def gates_of(x_in, w_x, h_prev, w_h, bias):
        # NOTE: for bit-closer parity with PyTorch CPU f32 one could add
        # precision=jax.lax.Precision.HIGHEST to these dots (cheap here).
        return (jnp.dot(x_in, w_x, preferred_element_type=jnp.float32)
                + jnp.dot(h_prev, w_h, preferred_element_type=jnp.float32)
                + bias)

    zeros = jnp.zeros((B, H), jnp.float32)
    h0, c0 = zeros, zeros
    h1, c1 = zeros, zeros
    h2, c2 = zeros, zeros
    h0_pipe = zeros          # layer-0 output, delayed one step for layer 1
    h1_pipe = zeros          # layer-1 output, delayed one step for layer 2

    # Wavefront: step s runs layer 0 @ t=s, layer 1 @ t=s-1, layer 2 @ t=s-2.
    # Static unroll (T small); `if` conditions are Python-static, no predication.
    for s in range(T + 2):                     # T + L - 1 steps, L = 3
        x1_in = h0_pipe                        # layer-0 output from step s-1
        x2_in = h1_pipe                        # layer-1 output from step s-1

        if s < T:                              # layer 0 at t = s
            h0, c0 = cell(gates_of(x_ref[s], w0x, h0, w0h, b0), c0)
            h0_pipe = h0
        if 1 <= s <= T:                        # layer 1 at t = s - 1
            h1, c1 = cell(gates_of(x1_in, w1x, h1, w1h, b1), c1)
            h1_pipe = h1
        if s >= 2:                             # layer 2 at t = s - 2
            h2, c2 = cell(gates_of(x2_in, w2x, h2, w2h, b2), c2)

    # FC head on the last hidden state of the top layer: (B, O)
    out_ref[...] = (jnp.dot(h2, wfc_ref[...], preferred_element_type=jnp.float32)
                    + bfc_ref[...])


# ----------------------------------------------------------------------------
# Wrapper: batch-first input, single pallas_call, .view(-1) on the output.
# ----------------------------------------------------------------------------
@jax.jit
def lstm_model_forward(x_btd, params):
    """x_btd: (B, T, D) batch-first, same as the PyTorch module."""
    B, T, D = x_btd.shape
    l0, l1, l2 = params["lstm"]
    H = l0["whh_t"].shape[0]
    O = params["fc"]["w_t"].shape[1]

    x_tbd = jnp.transpose(x_btd, (1, 0, 2)).astype(jnp.float32)   # (T, B, D)

    def full(shape):
        return pl.BlockSpec(shape, lambda: (0,) * len(shape))

    out = pl.pallas_call(
        _lstm_model_kernel,
        out_shape=jax.ShapeDtypeStruct((B, O), jnp.float32),
        in_specs=[
            full((T, B, D)),                                       # x
            full((D, 4 * H)), full((H, 4 * H)), full((1, 4 * H)),  # layer 0
            full((H, 4 * H)), full((H, 4 * H)), full((1, 4 * H)),  # layer 1
            full((H, 4 * H)), full((H, 4 * H)), full((1, 4 * H)),  # layer 2
            full((H, O)), full((1, O)),                            # fc
        ],
        out_specs=full((B, O)),
    )(x_tbd,
      l0["wih_t"], l0["whh_t"], l0["bias"],
      l1["wih_t"], l1["whh_t"], l1["bias"],
      l2["wih_t"], l2["whh_t"], l2["bias"],
      params["fc"]["w_t"], params["fc"]["b"])
    return out.reshape(-1)                                         # .view(-1)


# ----------------------------------------------------------------------------
# Parameter init mimicking PyTorch's U(-1/sqrt(H), 1/sqrt(H)).
# ----------------------------------------------------------------------------
def init_params(key, input_dim, hidden_dim, layer_dim, output_dim):
    bound = 1.0 / jnp.sqrt(jnp.float32(hidden_dim))
    layers = []
    for layer in range(layer_dim):
        d_in = input_dim if layer == 0 else hidden_dim
        key, k1, k2, k3, k4 = jax.random.split(key, 5)
        w_ih = jax.random.uniform(k1, (4 * hidden_dim, d_in), jnp.float32,
                                  -bound, bound)
        w_hh = jax.random.uniform(k2, (4 * hidden_dim, hidden_dim), jnp.float32,
                                  -bound, bound)
        b_ih = jax.random.uniform(k3, (4 * hidden_dim,), jnp.float32,
                                  -bound, bound)
        b_hh = jax.random.uniform(k4, (4 * hidden_dim,), jnp.float32,
                                  -bound, bound)
        layers.append({
            "wih_t": w_ih.T,                                # (d_in, 4H)
            "whh_t": w_hh.T,                                # (H, 4H)
            "bias": (b_ih + b_hh).reshape(1, 4 * hidden_dim),
        })
    key, kf1, kf2 = jax.random.split(key, 3)
    w_fc = jax.random.uniform(kf1, (output_dim, hidden_dim), jnp.float32,
                              -bound, bound)
    b_fc = jax.random.uniform(kf2, (output_dim,), jnp.float32,
                              -bound, bound)
    return {
        "lstm": layers,
        "fc": {"w_t": w_fc.T, "b": b_fc.reshape(1, output_dim)},
    }


def _reference_forward(x_btd, params):
    """Pure-JAX reference (lax.scan, layer-by-layer) for correctness check."""
    def layer_scan(x_tbd, layer):
        H = layer["whh_t"].shape[0]
        B = x_tbd.shape[1]

        def step(carry, x_t):
            h, c = carry
            gates = x_t @ layer["wih_t"] + h @ layer["whh_t"] + layer["bias"]
            i = jax.nn.sigmoid(gates[:, 0 * H:1 * H])
            f = jax.nn.sigmoid(gates[:, 1 * H:2 * H])
            g = jnp.tanh(gates[:, 2 * H:3 * H])
            o = jax.nn.sigmoid(gates[:, 3 * H:4 * H])
            c = f * c + i * g
            h = o * jnp.tanh(c)
            return (h, c), h

        init = (jnp.zeros((B, H), jnp.float32), jnp.zeros((B, H), jnp.float32))
        _, hs = jax.lax.scan(step, init, x_tbd)
        return hs

    h = jnp.transpose(x_btd, (1, 0, 2)).astype(jnp.float32)
    for layer in params["lstm"]:
        h = layer_scan(h, layer)
    out = h[-1] @ params["fc"]["w_t"] + params["fc"]["b"]
    return out.reshape(-1)


if __name__ == "__main__":
    # Small shapes consistent with the module's forward: (batch, seq, features)
    B, T, D = 2, 8, 16
    H, L, O = 32, 3, 1

    key = jax.random.PRNGKey(0)
    key_x, key_p = jax.random.split(key)
    x = jax.random.normal(key_x, (B, T, D), dtype=jnp.float32)
    params = init_params(key_p, D, H, L, O)

    out = lstm_model_forward(x, params)
    out = jax.block_until_ready(out)

    ref = _reference_forward(x, params)
    assert out.shape == (B,)
    assert jnp.allclose(out, ref, atol=1e-4, rtol=1e-4), (out, ref)

    print("KERNEL_OK")
</pallas_src>

<mosaic_0001>
module attributes {stable_mosaic.version = 11 : i64} {
  func.func @_lstm_model_kernel(%arg0: memref<8x2x16xf32, #tpu.memory_space<vmem>>, %arg1: memref<16x128xf32, #tpu.memory_space<vmem>>, %arg2: memref<32x128xf32, #tpu.memory_space<vmem>>, %arg3: memref<1x128xf32, #tpu.memory_space<vmem>>, %arg4: memref<32x128xf32, #tpu.memory_space<vmem>>, %arg5: memref<32x128xf32, #tpu.memory_space<vmem>>, %arg6: memref<1x128xf32, #tpu.memory_space<vmem>>, %arg7: memref<32x128xf32, #tpu.memory_space<vmem>>, %arg8: memref<32x128xf32, #tpu.memory_space<vmem>>, %arg9: memref<1x128xf32, #tpu.memory_space<vmem>>, %arg10: memref<32x1xf32, #tpu.memory_space<vmem>>, %arg11: memref<1x1xf32, #tpu.memory_space<vmem>>, %arg12: memref<2x1xf32, #tpu.memory_space<vmem>>) attributes {dimension_semantics = [], scalar_prefetch = 0 : i64, scratch_operands = 0 : i64, tpu.core_type = #tpu.core_type<tc>} {
    %c0 = arith.constant 0 : index
    %c0_0 = arith.constant 0 : index
    %0 = vector.load %arg1[%c0, %c0_0] : memref<16x128xf32, #tpu.memory_space<vmem>>, vector<16x128xf32>
    %c0_1 = arith.constant 0 : index
    %c0_2 = arith.constant 0 : index
    %1 = vector.load %arg2[%c0_1, %c0_2] : memref<32x128xf32, #tpu.memory_space<vmem>>, vector<32x128xf32>
    %c0_3 = arith.constant 0 : index
    %c0_4 = arith.constant 0 : index
    %2 = vector.load %arg4[%c0_3, %c0_4] : memref<32x128xf32, #tpu.memory_space<vmem>>, vector<32x128xf32>
    %c0_5 = arith.constant 0 : index
    %c0_6 = arith.constant 0 : index
    %3 = vector.load %arg5[%c0_5, %c0_6] : memref<32x128xf32, #tpu.memory_space<vmem>>, vector<32x128xf32>
    %c0_7 = arith.constant 0 : index
    %c0_8 = arith.constant 0 : index
    %4 = vector.load %arg7[%c0_7, %c0_8] : memref<32x128xf32, #tpu.memory_space<vmem>>, vector<32x128xf32>
    %c0_9 = arith.constant 0 : index
    %c0_10 = arith.constant 0 : index
    %5 = vector.load %arg8[%c0_9, %c0_10] : memref<32x128xf32, #tpu.memory_space<vmem>>, vector<32x128xf32>
    %c0_11 = arith.constant 0 : index
    %c0_12 = arith.constant 0 : index
    %6 = vector.load %arg3[%c0_11, %c0_12] : memref<1x128xf32, #tpu.memory_space<vmem>>, vector<1x128xf32>
    %7 = vector.shape_cast %6 : vector<1x128xf32> to vector<1x128xf32>
    %8 = vector.broadcast %7 : vector<1x128xf32> to vector<2x128xf32>
    %c0_13 = arith.constant 0 : index
    %c0_14 = arith.constant 0 : index
    %9 = vector.load %arg6[%c0_13, %c0_14] : memref<1x128xf32, #tpu.memory_space<vmem>>, vector<1x128xf32>
    %10 = vector.shape_cast %9 : vector<1x128xf32> to vector<1x128xf32>
    %11 = vector.broadcast %10 : vector<1x128xf32> to vector<2x128xf32>
    %c0_15 = arith.constant 0 : index
    %c0_16 = arith.constant 0 : index
    %12 = vector.load %arg9[%c0_15, %c0_16] : memref<1x128xf32, #tpu.memory_space<vmem>>, vector<1x128xf32>
    %13 = vector.shape_cast %12 : vector<1x128xf32> to vector<1x128xf32>
    %14 = vector.broadcast %13 : vector<1x128xf32> to vector<2x128xf32>
    %cst = arith.constant 0.000000e+00 : f32
    %15 = vector.broadcast %cst : f32 to vector<2x32xf32>
    %c0_17 = arith.constant 0 : index
    %c0_18 = arith.constant 0 : index
    %c0_19 = arith.constant 0 : index
    %16 = vector.load %arg0[%c0_17, %c0_18, %c0_19] : memref<8x2x16xf32, #tpu.memory_space<vmem>>, vector<1x2x16xf32>
    %17 = vector.shape_cast %16 : vector<1x2x16xf32> to vector<2x16xf32>
    %cst_20 = arith.constant dense<0.000000e+00> : vector<2x128xf32>
    %18 = tpu.matmul %17, %0, %cst_20 {dimension_numbers = #tpu.dot_dimension_numbers<[1], [0], [0], [1], [0, 0, 1, 1], [], []>} : vector<2x16xf32>, vector<16x128xf32>, vector<2x128xf32> -> vector<2x128xf32>
    %cst_21 = arith.constant dense<0.000000e+00> : vector<2x128xf32>
    %19 = tpu.matmul %15, %1, %cst_21 {dimension_numbers = #tpu.dot_dimension_numbers<[1], [0], [0], [1], [0, 0, 1, 1], [], []>} : vector<2x32xf32>, vector<32x128xf32>, vector<2x128xf32> -> vector<2x128xf32>
    %20 = arith.addf %18, %19 : vector<2x128xf32>
    %21 = arith.addf %20, %8 : vector<2x128xf32>
    %22 = arith.negf %21 : vector<2x128xf32>
    %23 = math.exp %22 : vector<2x128xf32>
    %cst_22 = arith.constant 1.000000e+00 : f32
    %24 = vector.broadcast %cst_22 : f32 to vector<2x128xf32>
    %25 = arith.addf %24, %23 : vector<2x128xf32>
    %26 = arith.divf %24, %25 : vector<2x128xf32>
    %27 = math.tanh %21 : vector<2x128xf32>
    %28 = vector.extract_strided_slice %26 {offsets = [0, 0], sizes = [2, 32], strides = [1, 1]} : vector<2x128xf32> to vector<2x32xf32>
    %29 = vector.extract_strided_slice %26 {offsets = [0, 32], sizes = [2, 32], strides = [1, 1]} : vector<2x128xf32> to vector<2x32xf32>
    %30 = vector.extract_strided_slice %27 {offsets = [0, 64], sizes = [2, 32], strides = [1, 1]} : vector<2x128xf32> to vector<2x32xf32>
    %31 = vector.extract_strided_slice %26 {offsets = [0, 96], sizes = [2, 32], strides = [1, 1]} : vector<2x128xf32> to vector<2x32xf32>
    %32 = arith.mulf %29, %15 : vector<2x32xf32>
    %33 = arith.mulf %28, %30 : vector<2x32xf32>
    %34 = arith.addf %32, %33 : vector<2x32xf32>
    %35 = math.tanh %34 : vector<2x32xf32>
    %36 = arith.mulf %31, %35 : vector<2x32xf32>
    %c1 = arith.constant 1 : index
    %c0_23 = arith.constant 0 : index
    %c0_24 = arith.constant 0 : index
    %37 = vector.load %arg0[%c1, %c0_23, %c0_24] : memref<8x2x16xf32, #tpu.memory_space<vmem>>, vector<1x2x16xf32>
    %38 = vector.shape_cast %37 : vector<1x2x16xf32> to vector<2x16xf32>
    %cst_25 = arith.constant dense<0.000000e+00> : vector<2x128xf32>
    %39 = tpu.matmul %38, %0, %cst_25 {dimension_numbers = #tpu.dot_dimension_numbers<[1], [0], [0], [1], [0, 0, 1, 1], [], []>} : vector<2x16xf32>, vector<16x128xf32>, vector<2x128xf32> -> vector<2x128xf32>
    %cst_26 = arith.constant dense<0.000000e+00> : vector<2x128xf32>
    %40 = tpu.matmul %36, %1, %cst_26 {dimension_numbers = #tpu.dot_dimension_numbers<[1], [0], [0], [1], [0, 0, 1, 1], [], []>} : vector<2x32xf32>, vector<32x128xf32>, vector<2x128xf32> -> vector<2x128xf32>
    %41 = arith.addf %39, %40 : vector<2x128xf32>
    %42 = arith.addf %41, %8 : vector<2x128xf32>
    %43 = arith.negf %42 : vector<2x128xf32>
    %44 = math.exp %43 : vector<2x128xf32>
    %cst_27 = arith.constant 1.000000e+00 : f32
    %45 = vector.broadcast %cst_27 : f32 to vector<2x128xf32>
    %46 = arith.addf %45, %44 : vector<2x128xf32>
    %47 = arith.divf %45, %46 : vector<2x128xf32>
    %48 = math.tanh %42 : vector<2x128xf32>
    %49 = vector.extract_strided_slice %47 {offsets = [0, 0], sizes = [2, 32], strides = [1, 1]} : vector<2x128xf32> to vector<2x32xf32>
    %50 = vector.extract_strided_slice %47 {offsets = [0, 32], sizes = [2, 32], strides = [1, 1]} : vector<2x128xf32> to vector<2x32xf32>
    %51 = vector.extract_strided_slice %48 {offsets = [0, 64], sizes = [2, 32], strides = [1, 1]} : vector<2x128xf32> to vector<2x32xf32>
    %52 = vector.extract_strided_slice %47 {offsets = [0, 96], sizes = [2, 32], strides = [1, 1]} : vector<2x128xf32> to vector<2x32xf32>
    %53 = arith.mulf %50, %34 : vector<2x32xf32>
    %54 = arith.mulf %49, %51 : vector<2x32xf32>
    %55 = arith.addf %53, %54 : vector<2x32xf32>
    %56 = math.tanh %55 : vector<2x32xf32>
    %57 = arith.mulf %52, %56 : vector<2x32xf32>
    %cst_28 = arith.constant dense<0.000000e+00> : vector<2x128xf32>
    %58 = tpu.matmul %36, %2, %cst_28 {dimension_numbers = #tpu.dot_dimension_numbers<[1], [0], [0], [1], [0, 0, 1, 1], [], []>} : vector<2x32xf32>, vector<32x128xf32>, vector<2x128xf32> -> vector<2x128xf32>
    %cst_29 = arith.constant dense<0.000000e+00> : vector<2x128xf32>
    %59 = tpu.matmul %15, %3, %cst_29 {dimension_numbers = #tpu.dot_dimension_numbers<[1], [0], [0], [1], [0, 0, 1, 1], [], []>} : vector<2x32xf32>, vector<32x128xf32>, vector<2x128xf32> -> vector<2x128xf32>
    %60 = arith.addf %58, %59 : vector<2x128xf32>
    %61 = arith.addf %60, %11 : vector<2x128xf32>
    %62 = arith.negf %61 : vector<2x128xf32>
    %63 = math.exp %62 : vector<2x128xf32>
    %cst_30 = arith.constant 1.000000e+00 : f32
    %64 = vector.broadcast %cst_30 : f32 to vector<2x128xf32>
    %65 = arith.addf %64, %63 : vector<2x128xf32>
    %66 = arith.divf %64, %65 : vector<2x128xf32>
    %67 = math.tanh %61 : vector<2x128xf32>
    %68 = vector.extract_strided_slice %66 {offsets = [0, 0], sizes = [2, 32], strides = [1, 1]} : vector<2x128xf32> to vector<2x32xf32>
    %69 = vector.extract_strided_slice %66 {offsets = [0, 32], sizes = [2, 32], strides = [1, 1]} : vector<2x128xf32> to vector<2x32xf32>
    %70 = vector.extract_strided_slice %67 {offsets = [0, 64], sizes = [2, 32], strides = [1, 1]} : vector<2x128xf32> to vector<2x32xf32>
    %71 = vector.extract_strided_slice %66 {offsets = [0, 96], sizes = [2, 32], strides = [1, 1]} : vector<2x128xf32> to vector<2x32xf32>
    %72 = arith.mulf %69, %15 : vector<2x32xf32>
    %73 = arith.mulf %68, %70 : vector<2x32xf32>
    %74 = arith.addf %72, %73 : vector<2x32xf32>
    %75 = math.tanh %74 : vector<2x32xf32>
    %76 = arith.mulf %71, %75 : vector<2x32xf32>
    %c2 = arith.constant 2 : index
    %c0_31 = arith.constant 0 : index
    %c0_32 = arith.constant 0 : index
    %77 = vector.load %arg0[%c2, %c0_31, %c0_32] : memref<8x2x16xf32, #tpu.memory_space<vmem>>, vector<1x2x16xf32>
    %78 = vector.shape_cast %77 : vector<1x2x16xf32> to vector<2x16xf32>
    %cst_33 = arith.constant dense<0.000000e+00> : vector<2x128xf32>
    %79 = tpu.matmul %78, %0, %cst_33 {dimension_numbers = #tpu.dot_dimension_numbers<[1], [0], [0], [1], [0, 0, 1, 1], [], []>} : vector<2x16xf32>, vector<16x128xf32>, vector<2x128xf32> -> vector<2x128xf32>
    %cst_34 = arith.constant dense<0.000000e+00> : vector<2x128xf32>
    %80 = tpu.matmul %57, %1, %cst_34 {dimension_numbers = #tpu.dot_dimension_numbers<[1], [0], [0], [1], [0, 0, 1, 1], [], []>} : vector<2x32xf32>, vector<32x128xf32>, vector<2x128xf32> -> vector<2x128xf32>
    %81 = arith.addf %79, %80 : vector<2x128xf32>
    %82 = arith.addf %81, %8 : vector<2x128xf32>
    %83 = arith.negf %82 : vector<2x128xf32>
    %84 = math.exp %83 : vector<2x128xf32>
    %cst_35 = arith.constant 1.000000e+00 : f32
    %85 = vector.broadcast %cst_35 : f32 to vector<2x128xf32>
    %86 = arith.addf %85, %84 : vector<2x128xf32>
    %87 = arith.divf %85, %86 : vector<2x128xf32>
    %88 = math.tanh %82 : vector<2x128xf32>
    %89 = vector.extract_strided_slice %87 {offsets = [0, 0], sizes = [2, 32], strides = [1, 1]} : vector<2x128xf32> to vector<2x32xf32>
    %90 = vector.extract_strided_slice %87 {offsets = [0, 32], sizes = [2, 32], strides = [1, 1]} : vector<2x128xf32> to vector<2x32xf32>
    %91 = vector.extract_strided_slice %88 {offsets = [0, 64], sizes = [2, 32], strides = [1, 1]} : vector<2x128xf32> to vector<2x32xf32>
    %92 = vector.extract_strided_slice %87 {offsets = [0, 96], sizes = [2, 32], strides = [1, 1]} : vector<2x128xf32> to vector<2x32xf32>
    %93 = arith.mulf %90, %55 : vector<2x32xf32>
    %94 = arith.mulf %89, %91 : vector<2x32xf32>
    %95 = arith.addf %93, %94 : vector<2x32xf32>
    %96 = math.tanh %95 : vector<2x32xf32>
    %97 = arith.mulf %92, %96 : vector<2x32xf32>
    %cst_36 = arith.constant dense<0.000000e+00> : vector<2x128xf32>
    %98 = tpu.matmul %57, %2, %cst_36 {dimension_numbers = #tpu.dot_dimension_numbers<[1], [0], [0], [1], [0, 0, 1, 1], [], []>} : vector<2x32xf32>, vector<32x128xf32>, vector<2x128xf32> -> vector<2x128xf32>
    %cst_37 = arith.constant dense<0.000000e+00> : vector<2x128xf32>
    %99 = tpu.matmul %76, %3, %cst_37 {dimension_numbers = #tpu.dot_dimension_numbers<[1], [0], [0], [1], [0, 0, 1, 1], [], []>} : vector<2x32xf32>, vector<32x128xf32>, vector<2x128xf32> -> vector<2x128xf32>
    %100 = arith.addf %98, %99 : vector<2x128xf32>
    %101 = arith.addf %100, %11 : vector<2x128xf32>
    %102 = arith.negf %101 : vector<2x128xf32>
    %103 = math.exp %102 : vector<2x128xf32>
    %cst_38 = arith.constant 1.000000e+00 : f32
    %104 = vector.broadcast %cst_38 : f32 to vector<2x128xf32>
    %105 = arith.addf %104, %103 : vector<2x128xf32>
    %106 = arith.divf %104, %105 : vector<2x128xf32>
    %107 = math.tanh %101 : vector<2x128xf32>
    %108 = vector.extract_strided_slice %106 {offsets = [0, 0], sizes = [2, 32], strides = [1, 1]} : vector<2x128xf32> to vector<2x32xf32>
    %109 = vector.extract_strided_slice %106 {offsets = [0, 32], sizes = [2, 32], strides = [1, 1]} : vector<2x128xf32> to vector<2x32xf32>
    %110 = vector.extract_strided_slice %107 {offsets = [0, 64], sizes = [2, 32], strides = [1, 1]} : vector<2x128xf32> to vector<2x32xf32>
    %111 = vector.extract_strided_slice %106 {offsets = [0, 96], sizes = [2, 32], strides = [1, 1]} : vector<2x128xf32> to vector<2x32xf32>
    %112 = arith.mulf %109, %74 : vector<2x32xf32>
    %113 = arith.mulf %108, %110 : vector<2x32xf32>
    %114 = arith.addf %112, %113 : vector<2x32xf32>
    %115 = math.tanh %114 : vector<2x32xf32>
    %116 = arith.mulf %111, %115 : vector<2x32xf32>
    %cst_39 = arith.constant dense<0.000000e+00> : vector<2x128xf32>
    %117 = tpu.matmul %76, %4, %cst_39 {dimension_numbers = #tpu.dot_dimension_numbers<[1], [0], [0], [1], [0, 0, 1, 1], [], []>} : vector<2x32xf32>, vector<32x128xf32>, vector<2x128xf32> -> vector<2x128xf32>
    %cst_40 = arith.constant dense<0.000000e+00> : vector<2x128xf32>
    %118 = tpu.matmul %15, %5, %cst_40 {dimension_numbers = #tpu.dot_dimension_numbers<[1], [0], [0], [1], [0, 0, 1, 1], [], []>} : vector<2x32xf32>, vector<32x128xf32>, vector<2x128xf32> -> vector<2x128xf32>
    %119 = arith.addf %117, %118 : vector<2x128xf32>
    %120 = arith.addf %119, %14 : vector<2x128xf32>
    %121 = arith.negf %120 : vector<2x128xf32>
    %122 = math.exp %121 : vector<2x128xf32>
    %cst_41 = arith.constant 1.000000e+00 : f32
    %123 = vector.broadcast %cst_41 : f32 to vector<2x128xf32>
    %124 = arith.addf %123, %122 : vector<2x128xf32>
    %125 = arith.divf %123, %124 : vector<2x128xf32>
    %126 = math.tanh %120 : vector<2x128xf32>
    %127 = vector.extract_strided_slice %125 {offsets = [0, 0], sizes = [2, 32], strides = [1, 1]} : vector<2x128xf32> to vector<2x32xf32>
    %128 = vector.extract_strided_slice %125 {offsets = [0, 32], sizes = [2, 32], strides = [1, 1]} : vector<2x128xf32> to vector<2x32xf32>
    %129 = vector.extract_strided_slice %126 {offsets = [0, 64], sizes = [2, 32], strides = [1, 1]} : vector<2x128xf32> to vector<2x32xf32>
    %130 = vector.extract_strided_slice %125 {offsets = [0, 96], sizes = [2, 32], strides = [1, 1]} : vector<2x128xf32> to vector<2x32xf32>
    %131 = arith.mulf %128, %15 : vector<2x32xf32>
    %132 = arith.mulf %127, %129 : vector<2x32xf32>
    %133 = arith.addf %131, %132 : vector<2x32xf32>
    %134 = math.tanh %133 : vector<2x32xf32>
    %135 = arith.mulf %130, %134 : vector<2x32xf32>
    %c3 = arith.constant 3 : index
    %c0_42 = arith.constant 0 : index
    %c0_43 = arith.constant 0 : index
    %136 = vector.load %arg0[%c3, %c0_42, %c0_43] : memref<8x2x16xf32, #tpu.memory_space<vmem>>, vector<1x2x16xf32>
    %137 = vector.shape_cast %136 : vector<1x2x16xf32> to vector<2x16xf32>
    %cst_44 = arith.constant dense<0.000000e+00> : vector<2x128xf32>
    %138 = tpu.matmul %137, %0, %cst_44 {dimension_numbers = #tpu.dot_dimension_numbers<[1], [0], [0], [1], [0, 0, 1, 1], [], []>} : vector<2x16xf32>, vector<16x128xf32>, vector<2x128xf32> -> vector<2x128xf32>
    %cst_45 = arith.constant dense<0.000000e+00> : vector<2x128xf32>
    %139 = tpu.matmul %97, %1, %cst_45 {dimension_numbers = #tpu.dot_dimension_numbers<[1], [0], [0], [1], [0, 0, 1, 1], [], []>} : vector<2x32xf32>, vector<32x128xf32>, vector<2x128xf32> -> vector<2x128xf32>
    %140 = arith.addf %138, %139 : vector<2x128xf32>
    %141 = arith.addf %140, %8 : vector<2x128xf32>
    %142 = arith.negf %141 : vector<2x128xf32>
    %143 = math.exp %142 : vector<2x128xf32>
    %cst_46 = arith.constant 1.000000e+00 : f32
    %144 = vector.broadcast %cst_46 : f32 to vector<2x128xf32>
    %145 = arith.addf %144, %143 : vector<2x128xf32>
    %146 = arith.divf %144, %145 : vector<2x128xf32>
    %147 = math.tanh %141 : vector<2x128xf32>
    %148 = vector.extract_strided_slice %146 {offsets = [0, 0], sizes = [2, 32], strides = [1, 1]} : vector<2x128xf32> to vector<2x32xf32>
    %149 = vector.extract_strided_slice %146 {offsets = [0, 32], sizes = [2, 32], strides = [1, 1]} : vector<2x128xf32> to vector<2x32xf32>
    %150 = vector.extract_strided_slice %147 {offsets = [0, 64], sizes = [2, 32], strides = [1, 1]} : vector<2x128xf32> to vector<2x32xf32>
    %151 = vector.extract_strided_slice %146 {offsets = [0, 96], sizes = [2, 32], strides = [1, 1]} : vector<2x128xf32> to vector<2x32xf32>
    %152 = arith.mulf %149, %95 : vector<2x32xf32>
    %153 = arith.mulf %148, %150 : vector<2x32xf32>
    %154 = arith.addf %152, %153 : vector<2x32xf32>
    %155 = math.tanh %154 : vector<2x32xf32>
    %156 = arith.mulf %151, %155 : vector<2x32xf32>
    %cst_47 = arith.constant dense<0.000000e+00> : vector<2x128xf32>
    %157 = tpu.matmul %97, %2, %cst_47 {dimension_numbers = #tpu.dot_dimension_numbers<[1], [0], [0], [1], [0, 0, 1, 1], [], []>} : vector<2x32xf32>, vector<32x128xf32>, vector<2x128xf32> -> vector<2x128xf32>
    %cst_48 = arith.constant dense<0.000000e+00> : vector<2x128xf32>
    %158 = tpu.matmul %116, %3, %cst_48 {dimension_numbers = #tpu.dot_dimension_numbers<[1], [0], [0], [1], [0, 0, 1, 1], [], []>} : vector<2x32xf32>, vector<32x128xf32>, vector<2x128xf32> -> vector<2x128xf32>
    %159 = arith.addf %157, %158 : vector<2x128xf32>
    %160 = arith.addf %159, %11 : vector<2x128xf32>
    %161 = arith.negf %160 : vector<2x128xf32>
    %162 = math.exp %161 : vector<2x128xf32>
    %cst_49 = arith.constant 1.000000e+00 : f32
    %163 = vector.broadcast %cst_49 : f32 to vector<2x128xf32>
    %164 = arith.addf %163, %162 : vector<2x128xf32>
    %165 = arith.divf %163, %164 : vector<2x128xf32>
    %166 = math.tanh %160 : vector<2x128xf32>
    %167 = vector.extract_strided_slice %165 {offsets = [0, 0], sizes = [2, 32], strides = [1, 1]} : vector<2x128xf32> to vector<2x32xf32>
    %168 = vector.extract_strided_slice %165 {offsets = [0, 32], sizes = [2, 32], strides = [1, 1]} : vector<2x128xf32> to vector<2x32xf32>
    %169 = vector.extract_strided_slice %166 {offsets = [0, 64], sizes = [2, 32], strides = [1, 1]} : vector<2x128xf32> to vector<2x32xf32>
    %170 = vector.extract_strided_slice %165 {offsets = [0, 96], sizes = [2, 32], strides = [1, 1]} : vector<2x128xf32> to vector<2x32xf32>
    %171 = arith.mulf %168, %114 : vector<2x32xf32>
    %172 = arith.mulf %167, %169 : vector<2x32xf32>
    %173 = arith.addf %171, %172 : vector<2x32xf32>
    %174 = math.tanh %173 : vector<2x32xf32>
    %175 = arith.mulf %170, %174 : vector<2x32xf32>
    %cst_50 = arith.constant dense<0.000000e+00> : vector<2x128xf32>
    %176 = tpu.matmul %116, %4, %cst_50 {dimension_numbers = #tpu.dot_dimension_numbers<[1], [0], [0], [1], [0, 0, 1, 1], [], []>} : vector<2x32xf32>, vector<32x128xf32>, vector<2x128xf32> -> vector<2x128xf32>
    %cst_51 = arith.constant dense<0.000000e+00> : vector<2x128xf32>
    %177 = tpu.matmul %135, %5, %cst_51 {dimension_numbers = #tpu.dot_dimension_numbers<[1], [0], [0], [1], [0, 0, 1, 1], [], []>} : vector<2x32xf32>, vector<32x128xf32>, vector<2x128xf32> -> vector<2x128xf32>
    %178 = arith.addf %176, %177 : vector<2x128xf32>
    %179 = arith.addf %178, %14 : vector<2x128xf32>
    %180 = arith.negf %179 : vector<2x128xf32>
    %181 = math.exp %180 : vector<2x128xf32>
    %cst_52 = arith.constant 1.000000e+00 : f32
    %182 = vector.broadcast %cst_52 : f32 to vector<2x128xf32>
    %183 = arith.addf %182, %181 : vector<2x128xf32>
    %184 = arith.divf %182, %183 : vector<2x128xf32>
    %185 = math.tanh %179 : vector<2x128xf32>
    %186 = vector.extract_strided_slice %184 {offsets = [0, 0], sizes = [2, 32], strides = [1, 1]} : vector<2x128xf32> to vector<2x32xf32>
    %187 = vector.extract_strided_slice %184 {offsets = [0, 32], sizes = [2, 32], strides = [1, 1]} : vector<2x128xf32> to vector<2x32xf32>
    %188 = vector.extract_strided_slice %185 {offsets = [0, 64], sizes = [2, 32], strides = [1, 1]} : vector<2x128xf32> to vector<2x32xf32>
    %189 = vector.extract_strided_slice %184 {offsets = [0, 96], sizes = [2, 32], strides = [1, 1]} : vector<2x128xf32> to vector<2x32xf32>
    %190 = arith.mulf %187, %133 : vector<2x32xf32>
    %191 = arith.mulf %186, %188 : vector<2x32xf32>
    %192 = arith.addf %190, %191 : vector<2x32xf32>
    %193 = math.tanh %192 : vector<2x32xf32>
    %194 = arith.mulf %189, %193 : vector<2x32xf32>
    %c4 = arith.constant 4 : index
    %c0_53 = arith.constant 0 : index
    %c0_54 = arith.constant 0 : index
    %195 = vector.load %arg0[%c4, %c0_53, %c0_54] : memref<8x2x16xf32, #tpu.memory_space<vmem>>, vector<1x2x16xf32>
    %196 = vector.shape_cast %195 : vector<1x2x16xf32> to vector<2x16xf32>
    %cst_55 = arith.constant dense<0.000000e+00> : vector<2x128xf32>
    %197 = tpu.matmul %196, %0, %cst_55 {dimension_numbers = #tpu.dot_dimension_numbers<[1], [0], [0], [1], [0, 0, 1, 1], [], []>} : vector<2x16xf32>, vector<16x128xf32>, vector<2x128xf32> -> vector<2x128xf32>
    %cst_56 = arith.constant dense<0.000000e+00> : vector<2x128xf32>
    %198 = tpu.matmul %156, %1, %cst_56 {dimension_numbers = #tpu.dot_dimension_numbers<[1], [0], [0], [1], [0, 0, 1, 1], [], []>} : vector<2x32xf32>, vector<32x128xf32>, vector<2x128xf32> -> vector<2x128xf32>
    %199 = arith.addf %197, %198 : vector<2x128xf32>
    %200 = arith.addf %199, %8 : vector<2x128xf32>
    %201 = arith.negf %200 : vector<2x128xf32>
    %202 = math.exp %201 : vector<2x128xf32>
    %cst_57 = arith.constant 1.000000e+00 : f32
    %203 = vector.broadcast %cst_57 : f32 to vector<2x128xf32>
    %204 = arith.addf %203, %202 : vector<2x128xf32>
    %205 = arith.divf %203, %204 : vector<2x128xf32>
    %206 = math.tanh %200 : vector<2x128xf32>
    %207 = vector.extract_strided_slice %205 {offsets = [0, 0], sizes = [2, 32], strides = [1, 1]} : vector<2x128xf32> to vector<2x32xf32>
    %208 = vector.extract_strided_slice %205 {offsets = [0, 32], sizes = [2, 32], strides = [1, 1]} : vector<2x128xf32> to vector<2x32xf32>
    %209 = vector.extract_strided_slice %206 {offsets = [0, 64], sizes = [2, 32], strides = [1, 1]} : vector<2x128xf32> to vector<2x32xf32>
    %210 = vector.extract_strided_slice %205 {offsets = [0, 96], sizes = [2, 32], strides = [1, 1]} : vector<2x128xf32> to vector<2x32xf32>
    %211 = arith.mulf %208, %154 : vector<2x32xf32>
    %212 = arith.mulf %207, %209 : vector<2x32xf32>
    %213 = arith.addf %211, %212 : vector<2x32xf32>
    %214 = math.tanh %213 : vector<2x32xf32>
    %215 = arith.mulf %210, %214 : vector<2x32xf32>
    %cst_58 = arith.constant dense<0.000000e+00> : vector<2x128xf32>
    %216 = tpu.matmul %156, %2, %cst_58 {dimension_numbers = #tpu.dot_dimension_numbers<[1], [0], [0], [1], [0, 0, 1, 1], [], []>} : vector<2x32xf32>, vector<32x128xf32>, vector<2x128xf32> -> vector<2x128xf32>
    %cst_59 = arith.constant dense<0.000000e+00> : vector<2x128xf32>
    %217 = tpu.matmul %175, %3, %cst_59 {dimension_numbers = #tpu.dot_dimension_numbers<[1], [0], [0], [1], [0, 0, 1, 1], [], []>} : vector<2x32xf32>, vector<32x128xf32>, vector<2x128xf32> -> vector<2x128xf32>
    %218 = arith.addf %216, %217 : vector<2x128xf32>
    %219 = arith.addf %218, %11 : vector<2x128xf32>
    %220 = arith.negf %219 : vector<2x128xf32>
    %221 = math.exp %220 : vector<2x128xf32>
    %cst_60 = arith.constant 1.000000e+00 : f32
    %222 = vector.broadcast %cst_60 : f32 to vector<2x128xf32>
    %223 = arith.addf %222, %221 : vector<2x128xf32>
    %224 = arith.divf %222, %223 : vector<2x128xf32>
    %225 = math.tanh %219 : vector<2x128xf32>
    %226 = vector.extract_strided_slice %224 {offsets = [0, 0], sizes = [2, 32], strides = [1, 1]} : vector<2x128xf32> to vector<2x32xf32>
    %227 = vector.extract_strided_slice %224 {offsets = [0, 32], sizes = [2, 32], strides = [1, 1]} : vector<2x128xf32> to vector<2x32xf32>
    %228 = vector.extract_strided_slice %225 {offsets = [0, 64], sizes = [2, 32], strides = [1, 1]} : vector<2x128xf32> to vector<2x32xf32>
    %229 = vector.extract_strided_slice %224 {offsets = [0, 96], sizes = [2, 32], strides = [1, 1]} : vector<2x128xf32> to vector<2x32xf32>
    %230 = arith.mulf %227, %173 : vector<2x32xf32>
    %231 = arith.mulf %226, %228 : vector<2x32xf32>
    %232 = arith.addf %230, %231 : vector<2x32xf32>
    %233 = math.tanh %232 : vector<2x32xf32>
    %234 = arith.mulf %229, %233 : vector<2x32xf32>
    %cst_61 = arith.constant dense<0.000000e+00> : vector<2x128xf32>
    %235 = tpu.matmul %175, %4, %cst_61 {dimension_numbers = #tpu.dot_dimension_numbers<[1], [0], [0], [1], [0, 0, 1, 1], [], []>} : vector<2x32xf32>, vector<32x128xf32>, vector<2x128xf32> -> vector<2x128xf32>
    %cst_62 = arith.constant dense<0.000000e+00> : vector<2x128xf32>
    %236 = tpu.matmul %194, %5, %cst_62 {dimension_numbers = #tpu.dot_dimension_numbers<[1], [0], [0], [1], [0, 0, 1, 1], [], []>} : vector<2x32xf32>, vector<32x128xf32>, vector<2x128xf32> -> vector<2x128xf32>
    %237 = arith.addf %235, %236 : vector<2x128xf32>
    %238 = arith.addf %237, %14 : vector<2x128xf32>
    %239 = arith.negf %238 : vector<2x128xf32>
    %240 = math.exp %239 : vector<2x128xf32>
    %cst_63 = arith.constant 1.000000e+00 : f32
    %241 = vector.broadcast %cst_63 : f32 to vector<2x128xf32>
    %242 = arith.addf %241, %240 : vector<2x128xf32>
    %243 = arith.divf %241, %242 : vector<2x128xf32>
    %244 = math.tanh %238 : vector<2x128xf32>
    %245 = vector.extract_strided_slice %243 {offsets = [0, 0], sizes = [2, 32], strides = [1, 1]} : vector<2x128xf32> to vector<2x32xf32>
    %246 = vector.extract_strided_slice %243 {offsets = [0, 32], sizes = [2, 32], strides = [1, 1]} : vector<2x128xf32> to vector<2x32xf32>
    %247 = vector.extract_strided_slice %244 {offsets = [0, 64], sizes = [2, 32], strides = [1, 1]} : vector<2x128xf32> to vector<2x32xf32>
    %248 = vector.extract_strided_slice %243 {offsets = [0, 96], sizes = [2, 32], strides = [1, 1]} : vector<2x128xf32> to vector<2x32xf32>
    %249 = arith.mulf %246, %192 : vector<2x32xf32>
    %250 = arith.mulf %245, %247 : vector<2x32xf32>
    %251 = arith.addf %249, %250 : vector<2x32xf32>
    %252 = math.tanh %251 : vector<2x32xf32>
    %253 = arith.mulf %248, %252 : vector<2x32xf32>
    %c5 = arith.constant 5 : index
    %c0_64 = arith.constant 0 : index
    %c0_65 = arith.constant 0 : index
    %254 = vector.load %arg0[%c5, %c0_64, %c0_65] : memref<8x2x16xf32, #tpu.memory_space<vmem>>, vector<1x2x16xf32>
    %255 = vector.shape_cast %254 : vector<1x2x16xf32> to vector<2x16xf32>
    %cst_66 = arith.constant dense<0.000000e+00> : vector<2x128xf32>
    %256 = tpu.matmul %255, %0, %cst_66 {dimension_numbers = #tpu.dot_dimension_numbers<[1], [0], [0], [1], [0, 0, 1, 1], [], []>} : vector<2x16xf32>, vector<16x128xf32>, vector<2x128xf32> -> vector<2x128xf32>
    %cst_67 = arith.constant dense<0.000000e+00> : vector<2x128xf32>
    %257 = tpu.matmul %215, %1, %cst_67 {dimension_numbers = #tpu.dot_dimension_numbers<[1], [0], [0], [1], [0, 0, 1, 1], [], []>} : vector<2x32xf32>, vector<32x128xf32>, vector<2x128xf32> -> vector<2x128xf32>
    %258 = arith.addf %256, %257 : vector<2x128xf32>
    %259 = arith.addf %258, %8 : vector<2x128xf32>
    %260 = arith.negf %259 : vector<2x128xf32>
    %261 = math.exp %260 : vector<2x128xf32>
    %cst_68 = arith.constant 1.000000e+00 : f32
    %262 = vector.broadcast %cst_68 : f32 to vector<2x128xf32>
    %263 = arith.addf %262, %261 : vector<2x128xf32>
    %264 = arith.divf %262, %263 : vector<2x128xf32>
    %265 = math.tanh %259 : vector<2x128xf32>
    %266 = vector.extract_strided_slice %264 {offsets = [0, 0], sizes = [2, 32], strides = [1, 1]} : vector<2x128xf32> to vector<2x32xf32>
    %267 = vector.extract_strided_slice %264 {offsets = [0, 32], sizes = [2, 32], strides = [1, 1]} : vector<2x128xf32> to vector<2x32xf32>
    %268 = vector.extract_strided_slice %265 {offsets = [0, 64], sizes = [2, 32], strides = [1, 1]} : vector<2x128xf32> to vector<2x32xf32>
    %269 = vector.extract_strided_slice %264 {offsets = [0, 96], sizes = [2, 32], strides = [1, 1]} : vector<2x128xf32> to vector<2x32xf32>
    %270 = arith.mulf %267, %213 : vector<2x32xf32>
    %271 = arith.mulf %266, %268 : vector<2x32xf32>
    %272 = arith.addf %270, %271 : vector<2x32xf32>
    %273 = math.tanh %272 : vector<2x32xf32>
    %274 = arith.mulf %269, %273 : vector<2x32xf32>
    %cst_69 = arith.constant dense<0.000000e+00> : vector<2x128xf32>
    %275 = tpu.matmul %215, %2, %cst_69 {dimension_numbers = #tpu.dot_dimension_numbers<[1], [0], [0], [1], [0, 0, 1, 1], [], []>} : vector<2x32xf32>, vector<32x128xf32>, vector<2x128xf32> -> vector<2x128xf32>
    %cst_70 = arith.constant dense<0.000000e+00> : vector<2x128xf32>
    %276 = tpu.matmul %234, %3, %cst_70 {dimension_numbers = #tpu.dot_dimension_numbers<[1], [0], [0], [1], [0, 0, 1, 1], [], []>} : vector<2x32xf32>, vector<32x128xf32>, vector<2x128xf32> -> vector<2x128xf32>
    %277 = arith.addf %275, %276 : vector<2x128xf32>
    %278 = arith.addf %277, %11 : vector<2x128xf32>
    %279 = arith.negf %278 : vector<2x128xf32>
    %280 = math.exp %279 : vector<2x128xf32>
    %cst_71 = arith.constant 1.000000e+00 : f32
    %281 = vector.broadcast %cst_71 : f32 to vector<2x128xf32>
    %282 = arith.addf %281, %280 : vector<2x128xf32>
    %283 = arith.divf %281, %282 : vector<2x128xf32>
    %284 = math.tanh %278 : vector<2x128xf32>
    %285 = vector.extract_strided_slice %283 {offsets = [0, 0], sizes = [2, 32], strides = [1, 1]} : vector<2x128xf32> to vector<2x32xf32>
    %286 = vector.extract_strided_slice %283 {offsets = [0, 32], sizes = [2, 32], strides = [1, 1]} : vector<2x128xf32> to vector<2x32xf32>
    %287 = vector.extract_strided_slice %284 {offsets = [0, 64], sizes = [2, 32], strides = [1, 1]} : vector<2x128xf32> to vector<2x32xf32>
    %288 = vector.extract_strided_slice %283 {offsets = [0, 96], sizes = [2, 32], strides = [1, 1]} : vector<2x128xf32> to vector<2x32xf32>
    %289 = arith.mulf %286, %232 : vector<2x32xf32>
    %290 = arith.mulf %285, %287 : vector<2x32xf32>
    %291 = arith.addf %289, %290 : vector<2x32xf32>
    %292 = math.tanh %291 : vector<2x32xf32>
    %293 = arith.mulf %288, %292 : vector<2x32xf32>
    %cst_72 = arith.constant dense<0.000000e+00> : vector<2x128xf32>
    %294 = tpu.matmul %234, %4, %cst_72 {dimension_numbers = #tpu.dot_dimension_numbers<[1], [0], [0], [1], [0, 0, 1, 1], [], []>} : vector<2x32xf32>, vector<32x128xf32>, vector<2x128xf32> -> vector<2x128xf32>
    %cst_73 = arith.constant dense<0.000000e+00> : vector<2x128xf32>
    %295 = tpu.matmul %253, %5, %cst_73 {dimension_numbers = #tpu.dot_dimension_numbers<[1], [0], [0], [1], [0, 0, 1, 1], [], []>} : vector<2x32xf32>, vector<32x128xf32>, vector<2x128xf32> -> vector<2x128xf32>
    %296 = arith.addf %294, %295 : vector<2x128xf32>
    %297 = arith.addf %296, %14 : vector<2x128xf32>
    %298 = arith.negf %297 : vector<2x128xf32>
    %299 = math.exp %298 : vector<2x128xf32>
    %cst_74 = arith.constant 1.000000e+00 : f32
    %300 = vector.broadcast %cst_74 : f32 to vector<2x128xf32>
    %301 = arith.addf %300, %299 : vector<2x128xf32>
    %302 = arith.divf %300, %301 : vector<2x128xf32>
    %303 = math.tanh %297 : vector<2x128xf32>
    %304 = vector.extract_strided_slice %302 {offsets = [0, 0], sizes = [2, 32], strides = [1, 1]} : vector<2x128xf32> to vector<2x32xf32>
    %305 = vector.extract_strided_slice %302 {offsets = [0, 32], sizes = [2, 32], strides = [1, 1]} : vector<2x128xf32> to vector<2x32xf32>
    %306 = vector.extract_strided_slice %303 {offsets = [0, 64], sizes = [2, 32], strides = [1, 1]} : vector<2x128xf32> to vector<2x32xf32>
    %307 = vector.extract_strided_slice %302 {offsets = [0, 96], sizes = [2, 32], strides = [1, 1]} : vector<2x128xf32> to vector<2x32xf32>
    %308 = arith.mulf %305, %251 : vector<2x32xf32>
    %309 = arith.mulf %304, %306 : vector<2x32xf32>
    %310 = arith.addf %308, %309 : vector<2x32xf32>
    %311 = math.tanh %310 : vector<2x32xf32>
    %312 = arith.mulf %307, %311 : vector<2x32xf32>
    %c6 = arith.constant 6 : index
    %c0_75 = arith.constant 0 : index
    %c0_76 = arith.constant 0 : index
    %313 = vector.load %arg0[%c6, %c0_75, %c0_76] : memref<8x2x16xf32, #tpu.memory_space<vmem>>, vector<1x2x16xf32>
    %314 = vector.shape_cast %313 : vector<1x2x16xf32> to vector<2x16xf32>
    %cst_77 = arith.constant dense<0.000000e+00> : vector<2x128xf32>
    %315 = tpu.matmul %314, %0, %cst_77 {dimension_numbers = #tpu.dot_dimension_numbers<[1], [0], [0], [1], [0, 0, 1, 1], [], []>} : vector<2x16xf32>, vector<16x128xf32>, vector<2x128xf32> -> vector<2x128xf32>
    %cst_78 = arith.constant dense<0.000000e+00> : vector<2x128xf32>
    %316 = tpu.matmul %274, %1, %cst_78 {dimension_numbers = #tpu.dot_dimension_numbers<[1], [0], [0], [1], [0, 0, 1, 1], [], []>} : vector<2x32xf32>, vector<32x128xf32>, vector<2x128xf32> -> vector<2x128xf32>
    %317 = arith.addf %315, %316 : vector<2x128xf32>
    %318 = arith.addf %317, %8 : vector<2x128xf32>
    %319 = arith.negf %318 : vector<2x128xf32>
    %320 = math.exp %319 : vector<2x128xf32>
    %cst_79 = arith.constant 1.000000e+00 : f32
    %321 = vector.broadcast %cst_79 : f32 to vector<2x128xf32>
    %322 = arith.addf %321, %320 : vector<2x128xf32>
    %323 = arith.divf %321, %322 : vector<2x128xf32>
    %324 = math.tanh %318 : vector<2x128xf32>
    %325 = vector.extract_strided_slice %323 {offsets = [0, 0], sizes = [2, 32], strides = [1, 1]} : vector<2x128xf32> to vector<2x32xf32>
    %326 = vector.extract_strided_slice %323 {offsets = [0, 32], sizes = [2, 32], strides = [1, 1]} : vector<2x128xf32> to vector<2x32xf32>
    %327 = vector.extract_strided_slice %324 {offsets = [0, 64], sizes = [2, 32], strides = [1, 1]} : vector<2x128xf32> to vector<2x32xf32>
    %328 = vector.extract_strided_slice %323 {offsets = [0, 96], sizes = [2, 32], strides = [1, 1]} : vector<2x128xf32> to vector<2x32xf32>
    %329 = arith.mulf %326, %272 : vector<2x32xf32>
    %330 = arith.mulf %325, %327 : vector<2x32xf32>
    %331 = arith.addf %329, %330 : vector<2x32xf32>
    %332 = math.tanh %331 : vector<2x32xf32>
    %333 = arith.mulf %328, %332 : vector<2x32xf32>
    %cst_80 = arith.constant dense<0.000000e+00> : vector<2x128xf32>
    %334 = tpu.matmul %274, %2, %cst_80 {dimension_numbers = #tpu.dot_dimension_numbers<[1], [0], [0], [1], [0, 0, 1, 1], [], []>} : vector<2x32xf32>, vector<32x128xf32>, vector<2x128xf32> -> vector<2x128xf32>
    %cst_81 = arith.constant dense<0.000000e+00> : vector<2x128xf32>
    %335 = tpu.matmul %293, %3, %cst_81 {dimension_numbers = #tpu.dot_dimension_numbers<[1], [0], [0], [1], [0, 0, 1, 1], [], []>} : vector<2x32xf32>, vector<32x128xf32>, vector<2x128xf32> -> vector<2x128xf32>
    %336 = arith.addf %334, %335 : vector<2x128xf32>
    %337 = arith.addf %336, %11 : vector<2x128xf32>
    %338 = arith.negf %337 : vector<2x128xf32>
    %339 = math.exp %338 : vector<2x128xf32>
    %cst_82 = arith.constant 1.000000e+00 : f32
    %340 = vector.broadcast %cst_82 : f32 to vector<2x128xf32>
    %341 = arith.addf %340, %339 : vector<2x128xf32>
    %342 = arith.divf %340, %341 : vector<2x128xf32>
    %343 = math.tanh %337 : vector<2x128xf32>
    %344 = vector.extract_strided_slice %342 {offsets = [0, 0], sizes = [2, 32], strides = [1, 1]} : vector<2x128xf32> to vector<2x32xf32>
    %345 = vector.extract_strided_slice %342 {offsets = [0, 32], sizes = [2, 32], strides = [1, 1]} : vector<2x128xf32> to vector<2x32xf32>
    %346 = vector.extract_strided_slice %343 {offsets = [0, 64], sizes = [2, 32], strides = [1, 1]} : vector<2x128xf32> to vector<2x32xf32>
    %347 = vector.extract_strided_slice %342 {offsets = [0, 96], sizes = [2, 32], strides = [1, 1]} : vector<2x128xf32> to vector<2x32xf32>
    %348 = arith.mulf %345, %291 : vector<2x32xf32>
    %349 = arith.mulf %344, %346 : vector<2x32xf32>
    %350 = arith.addf %348, %349 : vector<2x32xf32>
    %351 = math.tanh %350 : vector<2x32xf32>
    %352 = arith.mulf %347, %351 : vector<2x32xf32>
    %cst_83 = arith.constant dense<0.000000e+00> : vector<2x128xf32>
    %353 = tpu.matmul %293, %4, %cst_83 {dimension_numbers = #tpu.dot_dimension_numbers<[1], [0], [0], [1], [0, 0, 1, 1], [], []>} : vector<2x32xf32>, vector<32x128xf32>, vector<2x128xf32> -> vector<2x128xf32>
    %cst_84 = arith.constant dense<0.000000e+00> : vector<2x128xf32>
    %354 = tpu.matmul %312, %5, %cst_84 {dimension_numbers = #tpu.dot_dimension_numbers<[1], [0], [0], [1], [0, 0, 1, 1], [], []>} : vector<2x32xf32>, vector<32x128xf32>, vector<2x128xf32> -> vector<2x128xf32>
    %355 = arith.addf %353, %354 : vector<2x128xf32>
    %356 = arith.addf %355, %14 : vector<2x128xf32>
    %357 = arith.negf %356 : vector<2x128xf32>
    %358 = math.exp %357 : vector<2x128xf32>
    %cst_85 = arith.constant 1.000000e+00 : f32
    %359 = vector.broadcast %cst_85 : f32 to vector<2x128xf32>
    %360 = arith.addf %359, %358 : vector<2x128xf32>
    %361 = arith.divf %359, %360 : vector<2x128xf32>
    %362 = math.tanh %356 : vector<2x128xf32>
    %363 = vector.extract_strided_slice %361 {offsets = [0, 0], sizes = [2, 32], strides = [1, 1]} : vector<2x128xf32> to vector<2x32xf32>
    %364 = vector.extract_strided_slice %361 {offsets = [0, 32], sizes = [2, 32], strides = [1, 1]} : vector<2x128xf32> to vector<2x32xf32>
    %365 = vector.extract_strided_slice %362 {offsets = [0, 64], sizes = [2, 32], strides = [1, 1]} : vector<2x128xf32> to vector<2x32xf32>
    %366 = vector.extract_strided_slice %361 {offsets = [0, 96], sizes = [2, 32], strides = [1, 1]} : vector<2x128xf32> to vector<2x32xf32>
    %367 = arith.mulf %364, %310 : vector<2x32xf32>
    %368 = arith.mulf %363, %365 : vector<2x32xf32>
    %369 = arith.addf %367, %368 : vector<2x32xf32>
    %370 = math.tanh %369 : vector<2x32xf32>
    %371 = arith.mulf %366, %370 : vector<2x32xf32>
    %c7 = arith.constant 7 : index
    %c0_86 = arith.constant 0 : index
    %c0_87 = arith.constant 0 : index
    %372 = vector.load %arg0[%c7, %c0_86, %c0_87] : memref<8x2x16xf32, #tpu.memory_space<vmem>>, vector<1x2x16xf32>
    %373 = vector.shape_cast %372 : vector<1x2x16xf32> to vector<2x16xf32>
    %cst_88 = arith.constant dense<0.000000e+00> : vector<2x128xf32>
    %374 = tpu.matmul %373, %0, %cst_88 {dimension_numbers = #tpu.dot_dimension_numbers<[1], [0], [0], [1], [0, 0, 1, 1], [], []>} : vector<2x16xf32>, vector<16x128xf32>, vector<2x128xf32> -> vector<2x128xf32>
    %cst_89 = arith.constant dense<0.000000e+00> : vector<2x128xf32>
    %375 = tpu.matmul %333, %1, %cst_89 {dimension_numbers = #tpu.dot_dimension_numbers<[1], [0], [0], [1], [0, 0, 1, 1], [], []>} : vector<2x32xf32>, vector<32x128xf32>, vector<2x128xf32> -> vector<2x128xf32>
    %376 = arith.addf %374, %375 : vector<2x128xf32>
    %377 = arith.addf %376, %8 : vector<2x128xf32>
    %378 = arith.negf %377 : vector<2x128xf32>
    %379 = math.exp %378 : vector<2x128xf32>
    %cst_90 = arith.constant 1.000000e+00 : f32
    %380 = vector.broadcast %cst_90 : f32 to vector<2x128xf32>
    %381 = arith.addf %380, %379 : vector<2x128xf32>
    %382 = arith.divf %380, %381 : vector<2x128xf32>
    %383 = math.tanh %377 : vector<2x128xf32>
    %384 = vector.extract_strided_slice %382 {offsets = [0, 0], sizes = [2, 32], strides = [1, 1]} : vector<2x128xf32> to vector<2x32xf32>
    %385 = vector.extract_strided_slice %382 {offsets = [0, 32], sizes = [2, 32], strides = [1, 1]} : vector<2x128xf32> to vector<2x32xf32>
    %386 = vector.extract_strided_slice %383 {offsets = [0, 64], sizes = [2, 32], strides = [1, 1]} : vector<2x128xf32> to vector<2x32xf32>
    %387 = vector.extract_strided_slice %382 {offsets = [0, 96], sizes = [2, 32], strides = [1, 1]} : vector<2x128xf32> to vector<2x32xf32>
    %388 = arith.mulf %385, %331 : vector<2x32xf32>
    %389 = arith.mulf %384, %386 : vector<2x32xf32>
    %390 = arith.addf %388, %389 : vector<2x32xf32>
    %391 = math.tanh %390 : vector<2x32xf32>
    %392 = arith.mulf %387, %391 : vector<2x32xf32>
    %cst_91 = arith.constant dense<0.000000e+00> : vector<2x128xf32>
    %393 = tpu.matmul %333, %2, %cst_91 {dimension_numbers = #tpu.dot_dimension_numbers<[1], [0], [0], [1], [0, 0, 1, 1], [], []>} : vector<2x32xf32>, vector<32x128xf32>, vector<2x128xf32> -> vector<2x128xf32>
    %cst_92 = arith.constant dense<0.000000e+00> : vector<2x128xf32>
    %394 = tpu.matmul %352, %3, %cst_92 {dimension_numbers = #tpu.dot_dimension_numbers<[1], [0], [0], [1], [0, 0, 1, 1], [], []>} : vector<2x32xf32>, vector<32x128xf32>, vector<2x128xf32> -> vector<2x128xf32>
    %395 = arith.addf %393, %394 : vector<2x128xf32>
    %396 = arith.addf %395, %11 : vector<2x128xf32>
    %397 = arith.negf %396 : vector<2x128xf32>
    %398 = math.exp %397 : vector<2x128xf32>
    %cst_93 = arith.constant 1.000000e+00 : f32
    %399 = vector.broadcast %cst_93 : f32 to vector<2x128xf32>
    %400 = arith.addf %399, %398 : vector<2x128xf32>
    %401 = arith.divf %399, %400 : vector<2x128xf32>
    %402 = math.tanh %396 : vector<2x128xf32>
    %403 = vector.extract_strided_slice %401 {offsets = [0, 0], sizes = [2, 32], strides = [1, 1]} : vector<2x128xf32> to vector<2x32xf32>
    %404 = vector.extract_strided_slice %401 {offsets = [0, 32], sizes = [2, 32], strides = [1, 1]} : vector<2x128xf32> to vector<2x32xf32>
    %405 = vector.extract_strided_slice %402 {offsets = [0, 64], sizes = [2, 32], strides = [1, 1]} : vector<2x128xf32> to vector<2x32xf32>
    %406 = vector.extract_strided_slice %401 {offsets = [0, 96], sizes = [2, 32], strides = [1, 1]} : vector<2x128xf32> to vector<2x32xf32>
    %407 = arith.mulf %404, %350 : vector<2x32xf32>
    %408 = arith.mulf %403, %405 : vector<2x32xf32>
    %409 = arith.addf %407, %408 : vector<2x32xf32>
    %410 = math.tanh %409 : vector<2x32xf32>
    %411 = arith.mulf %406, %410 : vector<2x32xf32>
    %cst_94 = arith.constant dense<0.000000e+00> : vector<2x128xf32>
    %412 = tpu.matmul %352, %4, %cst_94 {dimension_numbers = #tpu.dot_dimension_numbers<[1], [0], [0], [1], [0, 0, 1, 1], [], []>} : vector<2x32xf32>, vector<32x128xf32>, vector<2x128xf32> -> vector<2x128xf32>
    %cst_95 = arith.constant dense<0.000000e+00> : vector<2x128xf32>
    %413 = tpu.matmul %371, %5, %cst_95 {dimension_numbers = #tpu.dot_dimension_numbers<[1], [0], [0], [1], [0, 0, 1, 1], [], []>} : vector<2x32xf32>, vector<32x128xf32>, vector<2x128xf32> -> vector<2x128xf32>
    %414 = arith.addf %412, %413 : vector<2x128xf32>
    %415 = arith.addf %414, %14 : vector<2x128xf32>
    %416 = arith.negf %415 : vector<2x128xf32>
    %417 = math.exp %416 : vector<2x128xf32>
    %cst_96 = arith.constant 1.000000e+00 : f32
    %418 = vector.broadcast %cst_96 : f32 to vector<2x128xf32>
    %419 = arith.addf %418, %417 : vector<2x128xf32>
    %420 = arith.divf %418, %419 : vector<2x128xf32>
    %421 = math.tanh %415 : vector<2x128xf32>
    %422 = vector.extract_strided_slice %420 {offsets = [0, 0], sizes = [2, 32], strides = [1, 1]} : vector<2x128xf32> to vector<2x32xf32>
    %423 = vector.extract_strided_slice %420 {offsets = [0, 32], sizes = [2, 32], strides = [1, 1]} : vector<2x128xf32> to vector<2x32xf32>
    %424 = vector.extract_strided_slice %421 {offsets = [0, 64], sizes = [2, 32], strides = [1, 1]} : vector<2x128xf32> to vector<2x32xf32>
    %425 = vector.extract_strided_slice %420 {offsets = [0, 96], sizes = [2, 32], strides = [1, 1]} : vector<2x128xf32> to vector<2x32xf32>
    %426 = arith.mulf %423, %369 : vector<2x32xf32>
    %427 = arith.mulf %422, %424 : vector<2x32xf32>
    %428 = arith.addf %426, %427 : vector<2x32xf32>
    %429 = math.tanh %428 : vector<2x32xf32>
    %430 = arith.mulf %425, %429 : vector<2x32xf32>
    %cst_97 = arith.constant dense<0.000000e+00> : vector<2x128xf32>
    %431 = tpu.matmul %392, %2, %cst_97 {dimension_numbers = #tpu.dot_dimension_numbers<[1], [0], [0], [1], [0, 0, 1, 1], [], []>} : vector<2x32xf32>, vector<32x128xf32>, vector<2x128xf32> -> vector<2x128xf32>
    %cst_98 = arith.constant dense<0.000000e+00> : vector<2x128xf32>
    %432 = tpu.matmul %411, %3, %cst_98 {dimension_numbers = #tpu.dot_dimension_numbers<[1], [0], [0], [1], [0, 0, 1, 1], [], []>} : vector<2x32xf32>, vector<32x128xf32>, vector<2x128xf32> -> vector<2x128xf32>
    %433 = arith.addf %431, %432 : vector<2x128xf32>
    %434 = arith.addf %433, %11 : vector<2x128xf32>
    %435 = arith.negf %434 : vector<2x128xf32>
    %436 = math.exp %435 : vector<2x128xf32>
    %cst_99 = arith.constant 1.000000e+00 : f32
    %437 = vector.broadcast %cst_99 : f32 to vector<2x128xf32>
    %438 = arith.addf %437, %436 : vector<2x128xf32>
    %439 = arith.divf %437, %438 : vector<2x128xf32>
    %440 = math.tanh %434 : vector<2x128xf32>
    %441 = vector.extract_strided_slice %439 {offsets = [0, 0], sizes = [2, 32], strides = [1, 1]} : vector<2x128xf32> to vector<2x32xf32>
    %442 = vector.extract_strided_slice %439 {offsets = [0, 32], sizes = [2, 32], strides = [1, 1]} : vector<2x128xf32> to vector<2x32xf32>
    %443 = vector.extract_strided_slice %440 {offsets = [0, 64], sizes = [2, 32], strides = [1, 1]} : vector<2x128xf32> to vector<2x32xf32>
    %444 = vector.extract_strided_slice %439 {offsets = [0, 96], sizes = [2, 32], strides = [1, 1]} : vector<2x128xf32> to vector<2x32xf32>
    %445 = arith.mulf %442, %409 : vector<2x32xf32>
    %446 = arith.mulf %441, %443 : vector<2x32xf32>
    %447 = arith.addf %445, %446 : vector<2x32xf32>
    %448 = math.tanh %447 : vector<2x32xf32>
    %449 = arith.mulf %444, %448 : vector<2x32xf32>
    %cst_100 = arith.constant dense<0.000000e+00> : vector<2x128xf32>
    %450 = tpu.matmul %411, %4, %cst_100 {dimension_numbers = #tpu.dot_dimension_numbers<[1], [0], [0], [1], [0, 0, 1, 1], [], []>} : vector<2x32xf32>, vector<32x128xf32>, vector<2x128xf32> -> vector<2x128xf32>
    %cst_101 = arith.constant dense<0.000000e+00> : vector<2x128xf32>
    %451 = tpu.matmul %430, %5, %cst_101 {dimension_numbers = #tpu.dot_dimension_numbers<[1], [0], [0], [1], [0, 0, 1, 1], [], []>} : vector<2x32xf32>, vector<32x128xf32>, vector<2x128xf32> -> vector<2x128xf32>
    %452 = arith.addf %450, %451 : vector<2x128xf32>
    %453 = arith.addf %452, %14 : vector<2x128xf32>
    %454 = arith.negf %453 : vector<2x128xf32>
    %455 = math.exp %454 : vector<2x128xf32>
    %cst_102 = arith.constant 1.000000e+00 : f32
    %456 = vector.broadcast %cst_102 : f32 to vector<2x128xf32>
    %457 = arith.addf %456, %455 : vector<2x128xf32>
    %458 = arith.divf %456, %457 : vector<2x128xf32>
    %459 = math.tanh %453 : vector<2x128xf32>
    %460 = vector.extract_strided_slice %458 {offsets = [0, 0], sizes = [2, 32], strides = [1, 1]} : vector<2x128xf32> to vector<2x32xf32>
    %461 = vector.extract_strided_slice %458 {offsets = [0, 32], sizes = [2, 32], strides = [1, 1]} : vector<2x128xf32> to vector<2x32xf32>
    %462 = vector.extract_strided_slice %459 {offsets = [0, 64], sizes = [2, 32], strides = [1, 1]} : vector<2x128xf32> to vector<2x32xf32>
    %463 = vector.extract_strided_slice %458 {offsets = [0, 96], sizes = [2, 32], strides = [1, 1]} : vector<2x128xf32> to vector<2x32xf32>
    %464 = arith.mulf %461, %428 : vector<2x32xf32>
    %465 = arith.mulf %460, %462 : vector<2x32xf32>
    %466 = arith.addf %464, %465 : vector<2x32xf32>
    %467 = math.tanh %466 : vector<2x32xf32>
    %468 = arith.mulf %463, %467 : vector<2x32xf32>
    %cst_103 = arith.constant dense<0.000000e+00> : vector<2x128xf32>
    %469 = tpu.matmul %449, %4, %cst_103 {dimension_numbers = #tpu.dot_dimension_numbers<[1], [0], [0], [1], [0, 0, 1, 1], [], []>} : vector<2x32xf32>, vector<32x128xf32>, vector<2x128xf32> -> vector<2x128xf32>
    %cst_104 = arith.constant dense<0.000000e+00> : vector<2x128xf32>
    %470 = tpu.matmul %468, %5, %cst_104 {dimension_numbers = #tpu.dot_dimension_numbers<[1], [0], [0], [1], [0, 0, 1, 1], [], []>} : vector<2x32xf32>, vector<32x128xf32>, vector<2x128xf32> -> vector<2x128xf32>
    %471 = arith.addf %469, %470 : vector<2x128xf32>
    %472 = arith.addf %471, %14 : vector<2x128xf32>
    %473 = arith.negf %472 : vector<2x128xf32>
    %474 = math.exp %473 : vector<2x128xf32>
    %cst_105 = arith.constant 1.000000e+00 : f32
    %475 = vector.broadcast %cst_105 : f32 to vector<2x128xf32>
    %476 = arith.addf %475, %474 : vector<2x128xf32>
    %477 = arith.divf %475, %476 : vector<2x128xf32>
    %478 = math.tanh %472 : vector<2x128xf32>
    %479 = vector.extract_strided_slice %477 {offsets = [0, 0], sizes = [2, 32], strides = [1, 1]} : vector<2x128xf32> to vector<2x32xf32>
    %480 = vector.extract_strided_slice %477 {offsets = [0, 32], sizes = [2, 32], strides = [1, 1]} : vector<2x128xf32> to vector<2x32xf32>
    %481 = vector.extract_strided_slice %478 {offsets = [0, 64], sizes = [2, 32], strides = [1, 1]} : vector<2x128xf32> to vector<2x32xf32>
    %482 = vector.extract_strided_slice %477 {offsets = [0, 96], sizes = [2, 32], strides = [1, 1]} : vector<2x128xf32> to vector<2x32xf32>
    %483 = arith.mulf %480, %466 : vector<2x32xf32>
    %484 = arith.mulf %479, %481 : vector<2x32xf32>
    %485 = arith.addf %483, %484 : vector<2x32xf32>
    %486 = math.tanh %485 : vector<2x32xf32>
    %487 = arith.mulf %482, %486 : vector<2x32xf32>
    %c0_106 = arith.constant 0 : index
    %c0_107 = arith.constant 0 : index
    %488 = vector.load %arg10[%c0_106, %c0_107] : memref<32x1xf32, #tpu.memory_space<vmem>>, vector<32x1xf32>
    %cst_108 = arith.constant dense<0.000000e+00> : vector<2x1xf32>
    %489 = tpu.matmul %487, %488, %cst_108 {dimension_numbers = #tpu.dot_dimension_numbers<[1], [0], [0], [1], [0, 0, 1, 1], [], []>} : vector<2x32xf32>, vector<32x1xf32>, vector<2x1xf32> -> vector<2x1xf32>
    %c0_109 = arith.constant 0 : index
    %c0_110 = arith.constant 0 : index
    %490 = vector.load %arg11[%c0_109, %c0_110] : memref<1x1xf32, #tpu.memory_space<vmem>>, vector<1x1xf32>
    %491 = vector.broadcast %490 : vector<1x1xf32> to vector<2x1xf32>
    %492 = arith.addf %489, %491 : vector<2x1xf32>
    %c0_111 = arith.constant 0 : index
    %c0_112 = arith.constant 0 : index
    %493 = vector.load %arg12[%c0_111, %c0_112] : memref<2x1xf32, #tpu.memory_space<vmem>>, vector<2x1xf32>
    tpu.vector_store %arg12[%c0_111, %c0_112], %492 {strides = array<i32>} : memref<2x1xf32, #tpu.memory_space<vmem>>, vector<2x1xf32>,
    return
  }
}

</mosaic_0001>

<llo_original>
// kernel: lstm_model_forward.1
$region0: #{lstm_model_forward.1}
  #allocation0 [shape = 'u32[]', space=smem, size = 0x4, offset = 0x4, fixed_abs, tag = 'smem constant byte address 0x4 - core index']
  #allocation1 [shape = 'u32[144,128]{1,0:T(1,128)}', space=vmem, size = 0x12000, scoped, tag = 'internal scratch']
  #allocation2 [shape = 'f32[1,1]{1,0:T(1,128)S(1)}', space=vmem, size = 0x200, scoped, tag = 'scoped memory for lstm_model_forward.1']
  %s0 = inlined_call_operand.vmem [shape: f32[8,2,16], index: 0, kind: input, shape index: {}]
  %s1 = inlined_call_operand.hbm [shape: f32[16,128], index: 1, kind: input, shape index: {}]
  %s2 = inlined_call_operand.vmem [shape: f32[32,128], index: 2, kind: input, shape index: {}]
  %s3 = inlined_call_operand.vmem [shape: f32[1,128], index: 3, kind: input, shape index: {}]
  %s4 = inlined_call_operand.vmem [shape: f32[32,128], index: 4, kind: input, shape index: {}]
  %s5 = inlined_call_operand.hbm [shape: f32[32,128], index: 5, kind: input, shape index: {}]
  %s6 = inlined_call_operand.vmem [shape: f32[1,128], index: 6, kind: input, shape index: {}]
  %s7 = inlined_call_operand.vmem [shape: f32[32,128], index: 7, kind: input, shape index: {}]
  %s8 = inlined_call_operand.hbm [shape: f32[32,128], index: 8, kind: input, shape index: {}]
  %s9 = inlined_call_operand.vmem [shape: f32[1,128], index: 9, kind: input, shape index: {}]
  %s10 = inlined_call_operand.vmem [shape: f32[32,1], index: 10, kind: input, shape index: {}]
  %s11 = inlined_call_operand.<no memory space> [shape: f32[1,1], index: 11, kind: input, shape index: {}]
  %s12 = inlined_call_operand.vmem [shape: f32[2,1], index: 12, kind: output, shape index: {}]
  %s13 = sld [smem:[#allocation0]]
  $region70: #{lstm_model_forward.1} parent=0
    _
  %s15 = ssub.s32 1, %s13
  %s16 = scalar_select 0, %s15, %s13
  %v17 = vstv %s11
  %18 = vst [vmem:[#allocation2] sm:$0x1] %v17
  $region1: #{lstm_model_forward.1} parent=0
    #allocation3 [shape = 'u8[8192]{0}', space=vmem, size = 0x2000, scoped, tag = 'input window, operand 1, single buffered']
    #allocation4 [shape = 's32[1]{0}', space=sflag, size = 0x4, scoped, tag = 'scoped memory for lstm_model_forward.1']
    #allocation5 [shape = 'u8[16384]{0}', space=vmem, size = 0x4000, scoped, tag = 'input window, operand 5, single buffered']
    #allocation6 [shape = 's32[1]{0}', space=sflag, size = 0x4, scoped, tag = 'scoped memory for lstm_model_forward.1']
    #allocation7 [shape = 'u8[16384]{0}', space=vmem, size = 0x4000, scoped, tag = 'input window, operand 8, single buffered']
    %19 = vsyncpa [#allocation4], 0
    %20 = vsyncpa [#allocation6], 0
    // Predicated region
    $region2: #{lstm_model_forward.1} parent=1 // pred_check
      _
    $region3: #{lstm_model_forward.1} parent=1 // pred_check_branch
      %22 = sbr.rel (0) target = $region5
    $region4: #{lstm_model_forward.1} parent=1 // pred_region
      _
    $region5: #{lstm_model_forward.1} parent=1 // pred_fallthru
      _
    // Predicated region
    $region6: #{lstm_model_forward.1} parent=1 // pred_check
      _
    $region7: #{lstm_model_forward.1} parent=1 // pred_check_branch
      %24 = sbr.rel (0) target = $region9
    $region8: #{lstm_model_forward.1} parent=1 // pred_region
      %s26 = ssub.s32 256, 256
      %27 = vsyncadd [#allocation4], %s26
      %s28 = sshll.u32 [#allocation3], 4
      %s29 = int_to_ptr.vmem [resolvable:$true] %s28
      %34 = dma.hbm_to_vmem [thread:$0]  %s1, 256, %s29, [#allocation4], 128, 128, 8
    $region9: #{lstm_model_forward.1} parent=1 // pred_fallthru
      _
    // Predicated region
    $region10: #{lstm_model_forward.1} parent=1 // pred_check
      _
    $region11: #{lstm_model_forward.1} parent=1 // pred_check_branch
      %36 = sbr.rel (0) target = $region13
    $region12: #{lstm_model_forward.1} parent=1 // pred_region
      _
    $region13: #{lstm_model_forward.1} parent=1 // pred_fallthru
      _
    // Predicated region
    $region14: #{lstm_model_forward.1} parent=1 // pred_check
      _
    $region15: #{lstm_model_forward.1} parent=1 // pred_check_branch
      %38 = sbr.rel (0) target = $region17
    $region16: #{lstm_model_forward.1} parent=1 // pred_region
      _
    $region17: #{lstm_model_forward.1} parent=1 // pred_fallthru
      _
    // Predicated region
    $region18: #{lstm_model_forward.1} parent=1 // pred_check
      _
    $region19: #{lstm_model_forward.1} parent=1 // pred_check_branch
      %40 = sbr.rel (0) target = $region21
    $region20: #{lstm_model_forward.1} parent=1 // pred_region
      _
    $region21: #{lstm_model_forward.1} parent=1 // pred_fallthru
      _
    // Predicated region
    $region22: #{lstm_model_forward.1} parent=1 // pred_check
      _
    $region23: #{lstm_model_forward.1} parent=1 // pred_check_branch
      %42 = sbr.rel (0) target = $region25
    $region24: #{lstm_model_forward.1} parent=1 // pred_region
      %s44 = ssub.s32 512, 512
      %45 = vsyncadd [#allocation6], %s44
      %s46 = sshll.u32 [#allocation5], 4
      %s47 = int_to_ptr.vmem [resolvable:$true] %s46
      %52 = dma.hbm_to_vmem [thread:$0]  %s5, 512, %s47, [#allocation6], 128, 128, 8
    $region25: #{lstm_model_forward.1} parent=1 // pred_fallthru
      _
    // Predicated region
    $region26: #{lstm_model_forward.1} parent=1 // pred_check
      _
    $region27: #{lstm_model_forward.1} parent=1 // pred_check_branch
      %54 = sbr.rel (0) target = $region29
    $region28: #{lstm_model_forward.1} parent=1 // pred_region
      _
    $region29: #{lstm_model_forward.1} parent=1 // pred_fallthru
      _
    // Predicated region
    $region30: #{lstm_model_forward.1} parent=1 // pred_check
      _
    $region31: #{lstm_model_forward.1} parent=1 // pred_check_branch
      %56 = sbr.rel (0) target = $region33
    $region32: #{lstm_model_forward.1} parent=1 // pred_region
      _
    $region33: #{lstm_model_forward.1} parent=1 // pred_fallthru
      _
    // Predicated region
    $region34: #{lstm_model_forward.1} parent=1 // pred_check
      _
    $region35: #{lstm_model_forward.1} parent=1 // pred_check_branch
      %58 = sbr.rel (0) target = $region37
    $region36: #{lstm_model_forward.1} parent=1 // pred_region
      %s60 = ssub.s32 512, 512
      %61 = vsyncadd [#allocation6], %s60
      %s62 = sshll.u32 [#allocation7], 4
      %s63 = int_to_ptr.vmem [resolvable:$true] %s62
      %68 = dma.hbm_to_vmem [thread:$0]  %s8, 512, %s63, [#allocation6], 128, 128, 8
    $region37: #{lstm_model_forward.1} parent=1 // pred_fallthru
      _
    // Predicated region
    $region38: #{lstm_model_forward.1} parent=1 // pred_check
      _
    $region39: #{lstm_model_forward.1} parent=1 // pred_check_branch
      %70 = sbr.rel (0) target = $region41
    $region40: #{lstm_model_forward.1} parent=1 // pred_region
      _
    $region41: #{lstm_model_forward.1} parent=1 // pred_fallthru
      _
    // Predicated region
    $region42: #{lstm_model_forward.1} parent=1 // pred_check
      _
    $region43: #{lstm_model_forward.1} parent=1 // pred_check_branch
      %72 = sbr.rel (0) target = $region45
    $region44: #{lstm_model_forward.1} parent=1 // pred_region
      _
    $region45: #{lstm_model_forward.1} parent=1 // pred_fallthru
      _
    // Predicated region
    $region46: #{lstm_model_forward.1} parent=1 // pred_check
      _
    $region47: #{lstm_model_forward.1} parent=1 // pred_check_branch
      %74 = sbr.rel (0) target = $region49
    $region48: #{lstm_model_forward.1} parent=1 // pred_region
      _
    $region49: #{lstm_model_forward.1} parent=1 // pred_fallthru
      _
    // Predicated region
    $region50: #{lstm_model_forward.1} parent=1 // pred_check
      _
    $region51: #{lstm_model_forward.1} parent=1 // pred_check_branch
      %76 = sbr.rel (0) target = $region53
    $region52: #{lstm_model_forward.1} parent=1 // pred_region
      %77 = dma.done [#allocation4], 256
    $region53: #{lstm_model_forward.1} parent=1 // pred_fallthru
      _
    // Predicated region
    $region54: #{lstm_model_forward.1} parent=1 // pred_check
      _
    $region55: #{lstm_model_forward.1} parent=1 // pred_check_branch
      %79 = sbr.rel (0) target = $region57
    $region56: #{lstm_model_forward.1} parent=1 // pred_region
      %80 = dma.done [#allocation6], 512
    $region57: #{lstm_model_forward.1} parent=1 // pred_fallthru
      _
    // Predicated region
    $region58: #{lstm_model_forward.1} parent=1 // pred_check
      _
    $region59: #{lstm_model_forward.1} parent=1 // pred_check_branch
      %82 = sbr.rel (0) target = $region61
    $region60: #{lstm_model_forward.1} parent=1 // pred_region
      %83 = dma.done [#allocation6], 512
    $region61: #{lstm_model_forward.1} parent=1 // pred_fallthru
      _
    %v84 = vld [vmem:[#allocation3] sm:$0xff]
    %v85 = vld [vmem:[#allocation3 + $0x8] sm:$0xff]
    %v86 = vld [vmem:[%s2] sm:$0xff]
    %v87 = vld [vmem:[%s2 + $0x8] sm:$0xff]
    %v88 = vld [vmem:[%s2 + $0x10] sm:$0xff]
    %v89 = vld [vmem:[%s2 + $0x18] sm:$0xff]
    %v90 = vld [vmem:[%s4] sm:$0xff]
    %v91 = vld [vmem:[%s4 + $0x8] sm:$0xff]
    %v92 = vld [vmem:[%s4 + $0x10] sm:$0xff]
    %v93 = vld [vmem:[%s4 + $0x18] sm:$0xff]
    %v94 = vld [vmem:[#allocation5] sm:$0xff]
    %v95 = vld [vmem:[#allocation5 + $0x8] sm:$0xff]
    %v96 = vld [vmem:[#allocation5 + $0x10] sm:$0xff]
    %v97 = vld [vmem:[#allocation5 + $0x18] sm:$0xff]
    %v98 = vld [vmem:[%s7] sm:$0xff]
    %v99 = vld [vmem:[%s7 + $0x8] sm:$0xff]
    %v100 = vld [vmem:[%s7 + $0x10] sm:$0xff]
    %v101 = vld [vmem:[%s7 + $0x18] sm:$0xff]
    %v102 = vld [vmem:[#allocation7] sm:$0xff]
    %v103 = vld [vmem:[#allocation7 + $0x8] sm:$0xff]
    %v104 = vld [vmem:[#allocation7 + $0x10] sm:$0xff]
    %v105 = vld [vmem:[#allocation7 + $0x18] sm:$0xff]
    %v106 = vld [vmem:[%s3] sm:$0x1]
    %v108 = vlaneseq
    %v109 = vshrl.u32 %v108, 7
    %v110 = vsub.s32 0, %v109
    %v111 = vrot.slane %v106, %v110
    %v113 = vld [vmem:[%s6] sm:$0x1]
    %v115 = vlaneseq
    %v116 = vshrl.u32 %v115, 7
    %v117 = vsub.s32 0, %v116
    %v118 = vrot.slane %v113, %v117
    %v120 = vld [vmem:[%s9] sm:$0x1]
    %v122 = vlaneseq
    %v123 = vshrl.u32 %v122, 7
    %v124 = vsub.s32 0, %v123
    %v125 = vrot.slane %v120, %v124
    %v127 = vld [vmem:[%s0] sm:$0x3]
    %vm128 = vcmask 261120
    %v130 = vsel %vm128, 0.0, 0
    %132 = vmatprep.subr.mxu0 0.0
    %133 = vmatpush1.msra.mxu0 %v86
    %134 = vmatprep.subr.mxu0 0.0
    %135 = vmatpush1.msra.mxu0 %v87
    %136 = vmatprep.subr.mxu0 0.0
    %137 = vmatpush1.msra.mxu0 %v88
    %138 = vmatprep.subr.mxu0 0.0
    %139 = vmatpush1.msra.mxu0 %v89
    %140 = vmatprep.subr.mxu0 0.0
    %141 = vmatpush1.msra.mxu0 0.0
    %142 = vmatprep.subr.mxu0 0.0
    %143 = vmatpush1.msra.mxu0 0.0
    %144 = vmatprep.subr.mxu0 0.0
    %145 = vmatpush1.msra.mxu0 0.0
    %146 = vmatprep.subr.mxu0 0.0
    %147 = vmatpush1.msra.mxu0 0.0
    %148 = vmatprep.subr.mxu0 0.0
    %149 = vmatpush1.msra.mxu0 0.0
    %150 = vmatprep.subr.mxu0 0.0
    %151 = vmatpush1.msra.mxu0 0.0
    %152 = vmatprep.subr.mxu0 0.0
    %153 = vmatpush1.msra.mxu0 0.0
    %154 = vmatprep.subr.mxu0 0.0
    %155 = vmatpush1.msra.mxu0 0.0
    %156 = vmatprep.subr.mxu0 0.0
    %157 = vmatpush1.msra.mxu0 0.0
    %158 = vmatprep.subr.mxu0 0.0
    %159 = vmatpush1.msra.mxu0 0.0
    %160 = vmatprep.subr.mxu0 0.0
    %161 = vmatpush1.msra.mxu0 0.0
    %162 = vmatprep.subr.mxu0 0.0
    %163 = vmatpush1.msra.mxu0 0.0
    %164 = vmatprep.subr.mxu0 0.0
    %165 = vmatpush1.msra.mxu0 0.0
    %166 = vmatprep.subr.mxu0 0.0
    %167 = vmatpush1.msra.mxu0 0.0
    %168 = vmatprep.subr.mxu0 0.0
    %169 = vmatpush1.msra.mxu0 0.0
    %170 = vmatprep.subr.mxu0 0.0
    %171 = vmatpush1.msra.mxu0 0.0
    %172 = vmatprep.subr.mxu0 0.0
    %173 = vmatpush1.msra.mxu0 0.0
    %174 = vmatprep.subr.mxu0 0.0
    %175 = vmatpush1.msra.mxu0 0.0
    %176 = vmatprep.subr.mxu0 0.0
    %177 = vmatpush1.msra.mxu0 0.0
    %178 = vmatprep.subr.mxu0 0.0
    %179 = vmatpush1.msra.mxu0 0.0
    %180 = vmatprep.subr.mxu0 0.0
    %181 = vmatpush1.msra.mxu0 0.0
    %182 = vmatprep.subr.mxu0 0.0
    %183 = vmatpush1.msra.mxu0 0.0
    %184 = vmatprep.subr.mxu0 0.0
    %185 = vmatpush1.msra.mxu0 0.0
    %186 = vmatprep.subr.mxu0 0.0
    %187 = vmatpush1.msra.mxu0 0.0
    %188 = vmatprep.subr.mxu0 0.0
    %189 = vmatpush1.msra.mxu0 0.0
    %190 = vmatprep.subr.mxu0 0.0
    %191 = vmatpush1.msra.mxu0 0.0
    %192 = vmatprep.subr.mxu0 0.0
    %193 = vmatpush1.msra.mxu0 0.0
    %194 = vmatprep.subr.mxu0 0.0
    %195 = vmatpush1.msra.mxu0 0.0
    %196 = vmatprep.mubr.f32.mxu0 0.0
    %197 = vmatmul.mubr.f32.gmra.mrb[0].mxu0 %v130
    %v198 = vpop.f32.mrb[0].mxu0
    %v199 = vadd.f32 0.0, %v198
    %v200 = vpop.f32.mrb[0].mxu0
    %201 = vdwg.mxu0
    %vm202 = vcmask 130048
    %v204 = vsel %vm202, %v127, 0
    %206 = vmatprep.subr.mxu0 0.0
    %207 = vmatpush1.msra.mxu0 %v84
    %208 = vmatprep.subr.mxu0 0.0
    %209 = vmatpush1.msra.mxu0 %v85
    %210 = vmatprep.subr.mxu0 0.0
    %211 = vmatpush1.msra.mxu0 0.0
    %212 = vmatprep.subr.mxu0 0.0
    %213 = vmatpush1.msra.mxu0 0.0
    %214 = vmatprep.subr.mxu0 0.0
    %215 = vmatpush1.msra.mxu0 0.0
    %216 = vmatprep.subr.mxu0 0.0
    %217 = vmatpush1.msra.mxu0 0.0
    %218 = vmatprep.subr.mxu0 0.0
    %219 = vmatpush1.msra.mxu0 0.0
    %220 = vmatprep.subr.mxu0 0.0
    %221 = vmatpush1.msra.mxu0 0.0
    %222 = vmatprep.subr.mxu0 0.0
    %223 = vmatpush1.msra.mxu0 0.0
    %224 = vmatprep.subr.mxu0 0.0
    %225 = vmatpush1.msra.mxu0 0.0
    %226 = vmatprep.subr.mxu0 0.0
    %227 = vmatpush1.msra.mxu0 0.0
    %228 = vmatprep.subr.mxu0 0.0
    %229 = vmatpush1.msra.mxu0 0.0
    %230 = vmatprep.subr.mxu0 0.0
    %231 = vmatpush1.msra.mxu0 0.0
    %232 = vmatprep.subr.mxu0 0.0
    %233 = vmatpush1.msra.mxu0 0.0
    %234 = vmatprep.subr.mxu0 0.0
    %235 = vmatpush1.msra.mxu0 0.0
    %236 = vmatprep.subr.mxu0 0.0
    %237 = vmatpush1.msra.mxu0 0.0
    %238 = vmatprep.subr.mxu0 0.0
    %239 = vmatpush1.msra.mxu0 0.0
    %240 = vmatprep.subr.mxu0 0.0
    %241 = vmatpush1.msra.mxu0 0.0
    %242 = vmatprep.subr.mxu0 0.0
    %243 = vmatpush1.msra.mxu0 0.0
    %244 = vmatprep.subr.mxu0 0.0
    %245 = vmatpush1.msra.mxu0 0.0
    %246 = vmatprep.subr.mxu0 0.0
    %247 = vmatpush1.msra.mxu0 0.0
    %248 = vmatprep.subr.mxu0 0.0
    %249 = vmatpush1.msra.mxu0 0.0
    %250 = vmatprep.subr.mxu0 0.0
    %251 = vmatpush1.msra.mxu0 0.0
    %252 = vmatprep.subr.mxu0 0.0
    %253 = vmatpush1.msra.mxu0 0.0
    %254 = vmatprep.subr.mxu0 0.0
    %255 = vmatpush1.msra.mxu0 0.0
    %256 = vmatprep.subr.mxu0 0.0
    %257 = vmatpush1.msra.mxu0 0.0
    %258 = vmatprep.subr.mxu0 0.0
    %259 = vmatpush1.msra.mxu0 0.0
    %260 = vmatprep.subr.mxu0 0.0
    %261 = vmatpush1.msra.mxu0 0.0
    %262 = vmatprep.subr.mxu0 0.0
    %263 = vmatpush1.msra.mxu0 0.0
    %264 = vmatprep.subr.mxu0 0.0
    %265 = vmatpush1.msra.mxu0 0.0
    %266 = vmatprep.subr.mxu0 0.0
    %267 = vmatpush1.msra.mxu0 0.0
    %268 = vmatprep.subr.mxu0 0.0
    %269 = vmatpush1.msra.mxu0 0.0
    %270 = vmatprep.mubr.f32.mxu0 0.0
    %271 = vmatmul.mubr.f32.gmra.mrb[0].mxu0 %v204
    %v272 = vpop.f32.mrb[0].mxu0
    %v273 = vadd.f32 %v199, %v272
    %v274 = vpop.f32.mrb[0].mxu0
    %275 = vdwg.mxu0
    %v276 = vadd.f32 %v273, %v111
    %v277 = vxor.u32 %v276, 2147483648
    %v278 = vmul.f32 %v277, 1.442695
    %v279 = vpow.pop %v278
    %v280 = vadd.f32 %v279, 1.0
    %v281 = vrcp.pop %v280
    %v282 = vmul.f32 1.0, %v281
    %v283 = vtanh.pop %v276
    %v284 = vmul.f32 %v282, 0.0
    %286 = vrot.lane.b32.xlu0 %v283, 64
    %v287 = vpop.permute.xlu0 %286
    %v289 = vmul.f32 %v282, %v287
    %291 = vrot.lane.b32.xlu0 %v289, 32
    %v292 = vpop.permute.xlu0 %291
    %v294 = vadd.f32 %v284, %v292
    %v295 = vtanh.pop %v294
    %297 = vrot.lane.b32.xlu0 %v295, 64
    %v298 = vpop.permute.xlu0 %297
    %v300 = vmul.f32 %v282, %v298
    %s301 = scalar_lea.vmem %s0, 2
    %v302 = vld [vmem:[%s301] sm:$0x3]
    %304 = vrot.lane.b32.xlu0 %v300, 32
    %v305 = vpop.permute.xlu0 %304
    %v306 = vsel %vm128, %v305, 0
    %308 = vmatprep.subr.mxu0 0.0
    %309 = vmatpush1.msra.mxu0 %v86
    %310 = vmatprep.subr.mxu0 0.0
    %311 = vmatpush1.msra.mxu0 %v87
    %312 = vmatprep.subr.mxu0 0.0
    %313 = vmatpush1.msra.mxu0 %v88
    %314 = vmatprep.subr.mxu0 0.0
    %315 = vmatpush1.msra.mxu0 %v89
    %316 = vmatprep.subr.mxu0 0.0
    %317 = vmatpush1.msra.mxu0 0.0
    %318 = vmatprep.subr.mxu0 0.0
    %319 = vmatpush1.msra.mxu0 0.0
    %320 = vmatprep.subr.mxu0 0.0
    %321 = vmatpush1.msra.mxu0 0.0
    %322 = vmatprep.subr.mxu0 0.0
    %323 = vmatpush1.msra.mxu0 0.0
    %324 = vmatprep.subr.mxu0 0.0
    %325 = vmatpush1.msra.mxu0 0.0
    %326 = vmatprep.subr.mxu0 0.0
    %327 = vmatpush1.msra.mxu0 0.0
    %328 = vmatprep.subr.mxu0 0.0
    %329 = vmatpush1.msra.mxu0 0.0
    %330 = vmatprep.subr.mxu0 0.0
    %331 = vmatpush1.msra.mxu0 0.0
    %332 = vmatprep.subr.mxu0 0.0
    %333 = vmatpush1.msra.mxu0 0.0
    %334 = vmatprep.subr.mxu0 0.0
    %335 = vmatpush1.msra.mxu0 0.0
    %336 = vmatprep.subr.mxu0 0.0
    %337 = vmatpush1.msra.mxu0 0.0
    %338 = vmatprep.subr.mxu0 0.0
    %339 = vmatpush1.msra.mxu0 0.0
    %340 = vmatprep.subr.mxu0 0.0
    %341 = vmatpush1.msra.mxu0 0.0
    %342 = vmatprep.subr.mxu0 0.0
    %343 = vmatpush1.msra.mxu0 0.0
    %344 = vmatprep.subr.mxu0 0.0
    %345 = vmatpush1.msra.mxu0 0.0
    %346 = vmatprep.subr.mxu0 0.0
    %347 = vmatpush1.msra.mxu0 0.0
    %348 = vmatprep.subr.mxu0 0.0
    %349 = vmatpush1.msra.mxu0 0.0
    %350 = vmatprep.subr.mxu0 0.0
    %351 = vmatpush1.msra.mxu0 0.0
    %352 = vmatprep.subr.mxu0 0.0
    %353 = vmatpush1.msra.mxu0 0.0
    %354 = vmatprep.subr.mxu0 0.0
    %355 = vmatpush1.msra.mxu0 0.0
    %356 = vmatprep.subr.mxu0 0.0
    %357 = vmatpush1.msra.mxu0 0.0
    %358 = vmatprep.subr.mxu0 0.0
    %359 = vmatpush1.msra.mxu0 0.0
    %360 = vmatprep.subr.mxu0 0.0
    %361 = vmatpush1.msra.mxu0 0.0
    %362 = vmatprep.subr.mxu0 0.0
    %363 = vmatpush1.msra.mxu0 0.0
    %364 = vmatprep.subr.mxu0 0.0
    %365 = vmatpush1.msra.mxu0 0.0
    %366 = vmatprep.subr.mxu0 0.0
    %367 = vmatpush1.msra.mxu0 0.0
    %368 = vmatprep.subr.mxu0 0.0
    %369 = vmatpush1.msra.mxu0 0.0
    %370 = vmatprep.subr.mxu0 0.0
    %371 = vmatpush1.msra.mxu0 0.0
    %372 = vmatprep.mubr.f32.mxu0 0.0
    %373 = vmatmul.mubr.f32.gmra.mrb[0].mxu0 %v306
    %v374 = vpop.f32.mrb[0].mxu0
    %v375 = vadd.f32 0.0, %v374
    %v376 = vpop.f32.mrb[0].mxu0
    %377 = vdwg.mxu0
    %v379 = vsel %vm202, %v302, 0
    %381 = vmatprep.subr.mxu0 0.0
    %382 = vmatpush1.msra.mxu0 %v84
    %383 = vmatprep.subr.mxu0 0.0
    %384 = vmatpush1.msra.mxu0 %v85
    %385 = vmatprep.subr.mxu0 0.0
    %386 = vmatpush1.msra.mxu0 0.0
    %387 = vmatprep.subr.mxu0 0.0
    %388 = vmatpush1.msra.mxu0 0.0
    %389 = vmatprep.subr.mxu0 0.0
    %390 = vmatpush1.msra.mxu0 0.0
    %391 = vmatprep.subr.mxu0 0.0
    %392 = vmatpush1.msra.mxu0 0.0
    %393 = vmatprep.subr.mxu0 0.0
    %394 = vmatpush1.msra.mxu0 0.0
    %395 = vmatprep.subr.mxu0 0.0
    %396 = vmatpush1.msra.mxu0 0.0
    %397 = vmatprep.subr.mxu0 0.0
    %398 = vmatpush1.msra.mxu0 0.0
    %399 = vmatprep.subr.mxu0 0.0
    %400 = vmatpush1.msra.mxu0 0.0
    %401 = vmatprep.subr.mxu0 0.0
    %402 = vmatpush1.msra.mxu0 0.0
    %403 = vmatprep.subr.mxu0 0.0
    %404 = vmatpush1.msra.mxu0 0.0
    %405 = vmatprep.subr.mxu0 0.0
    %406 = vmatpush1.msra.mxu0 0.0
    %407 = vmatprep.subr.mxu0 0.0
    %408 = vmatpush1.msra.mxu0 0.0
    %409 = vmatprep.subr.mxu0 0.0
    %410 = vmatpush1.msra.mxu0 0.0
    %411 = vmatprep.subr.mxu0 0.0
    %412 = vmatpush1.msra.mxu0 0.0
    %413 = vmatprep.subr.mxu0 0.0
    %414 = vmatpush1.msra.mxu0 0.0
    %415 = vmatprep.subr.mxu0 0.0
    %416 = vmatpush1.msra.mxu0 0.0
    %417 = vmatprep.subr.mxu0 0.0
    %418 = vmatpush1.msra.mxu0 0.0
    %419 = vmatprep.subr.mxu0 0.0
    %420 = vmatpush1.msra.mxu0 0.0
    %421 = vmatprep.subr.mxu0 0.0
    %422 = vmatpush1.msra.mxu0 0.0
    %423 = vmatprep.subr.mxu0 0.0
    %424 = vmatpush1.msra.mxu0 0.0
    %425 = vmatprep.subr.mxu0 0.0
    %426 = vmatpush1.msra.mxu0 0.0
    %427 = vmatprep.subr.mxu0 0.0
    %428 = vmatpush1.msra.mxu0 0.0
    %429 = vmatprep.subr.mxu0 0.0
    %430 = vmatpush1.msra.mxu0 0.0
    %431 = vmatprep.subr.mxu0 0.0
    %432 = vmatpush1.msra.mxu0 0.0
    %433 = vmatprep.subr.mxu0 0.0
    %434 = vmatpush1.msra.mxu0 0.0
    %435 = vmatprep.subr.mxu0 0.0
    %436 = vmatpush1.msra.mxu0 0.0
    %437 = vmatprep.subr.mxu0 0.0
    %438 = vmatpush1.msra.mxu0 0.0
    %439 = vmatprep.subr.mxu0 0.0
    %440 = vmatpush1.msra.mxu0 0.0
    %441 = vmatprep.subr.mxu0 0.0
    %442 = vmatpush1.msra.mxu0 0.0
    %443 = vmatprep.subr.mxu0 0.0
    %444 = vmatpush1.msra.mxu0 0.0
    %445 = vmatprep.mubr.f32.mxu0 0.0
    %446 = vmatmul.mubr.f32.gmra.mrb[0].mxu0 %v379
    %v447 = vpop.f32.mrb[0].mxu0
    %v448 = vadd.f32 %v375, %v447
    %v449 = vpop.f32.mrb[0].mxu0
    %450 = vdwg.mxu0
    %v451 = vadd.f32 %v448, %v111
    %v452 = vxor.u32 %v451, 2147483648
    %v453 = vmul.f32 %v452, 1.442695
    %v454 = vpow.pop %v453
    %v455 = vadd.f32 %v454, 1.0
    %v456 = vrcp.pop %v455
    %v457 = vmul.f32 1.0, %v456
    %v458 = vtanh.pop %v451
    %v459 = vmul.f32 %v457, %v294
    %461 = vrot.lane.b32.xlu0 %v458, 64
    %v462 = vpop.permute.xlu0 %461
    %v464 = vmul.f32 %v457, %v462
    %466 = vrot.lane.b32.xlu0 %v464, 32
    %v467 = vpop.permute.xlu0 %466
    %v469 = vadd.f32 %v459, %v467
    %v470 = vtanh.pop %v469
    %472 = vrot.lane.b32.xlu0 %v470, 64
    %v473 = vpop.permute.xlu0 %472
    %v475 = vmul.f32 %v457, %v473
    %476 = vmatprep.subr.mxu0 0.0
    %477 = vmatpush1.msra.mxu0 %v94
    %478 = vmatprep.subr.mxu0 0.0
    %479 = vmatpush1.msra.mxu0 %v95
    %480 = vmatprep.subr.mxu0 0.0
    %481 = vmatpush1.msra.mxu0 %v96
    %482 = vmatprep.subr.mxu0 0.0
    %483 = vmatpush1.msra.mxu0 %v97
    %484 = vmatprep.subr.mxu0 0.0
    %485 = vmatpush1.msra.mxu0 0.0
    %486 = vmatprep.subr.mxu0 0.0
    %487 = vmatpush1.msra.mxu0 0.0
    %488 = vmatprep.subr.mxu0 0.0
    %489 = vmatpush1.msra.mxu0 0.0
    %490 = vmatprep.subr.mxu0 0.0
    %491 = vmatpush1.msra.mxu0 0.0
    %492 = vmatprep.subr.mxu0 0.0
    %493 = vmatpush1.msra.mxu0 0.0
    %494 = vmatprep.subr.mxu0 0.0
    %495 = vmatpush1.msra.mxu0 0.0
    %496 = vmatprep.subr.mxu0 0.0
    %497 = vmatpush1.msra.mxu0 0.0
    %498 = vmatprep.subr.mxu0 0.0
    %499 = vmatpush1.msra.mxu0 0.0
    %500 = vmatprep.subr.mxu0 0.0
    %501 = vmatpush1.msra.mxu0 0.0
    %502 = vmatprep.subr.mxu0 0.0
    %503 = vmatpush1.msra.mxu0 0.0
    %504 = vmatprep.subr.mxu0 0.0
    %505 = vmatpush1.msra.mxu0 0.0
    %506 = vmatprep.subr.mxu0 0.0
    %507 = vmatpush1.msra.mxu0 0.0
    %508 = vmatprep.subr.mxu0 0.0
    %509 = vmatpush1.msra.mxu0 0.0
    %510 = vmatprep.subr.mxu0 0.0
    %511 = vmatpush1.msra.mxu0 0.0
    %512 = vmatprep.subr.mxu0 0.0
    %513 = vmatpush1.msra.mxu0 0.0
    %514 = vmatprep.subr.mxu0 0.0
    %515 = vmatpush1.msra.mxu0 0.0
    %516 = vmatprep.subr.mxu0 0.0
    %517 = vmatpush1.msra.mxu0 0.0
    %518 = vmatprep.subr.mxu0 0.0
    %519 = vmatpush1.msra.mxu0 0.0
    %520 = vmatprep.subr.mxu0 0.0
    %521 = vmatpush1.msra.mxu0 0.0
    %522 = vmatprep.subr.mxu0 0.0
    %523 = vmatpush1.msra.mxu0 0.0
    %524 = vmatprep.subr.mxu0 0.0
    %525 = vmatpush1.msra.mxu0 0.0
    %526 = vmatprep.subr.mxu0 0.0
    %527 = vmatpush1.msra.mxu0 0.0
    %528 = vmatprep.subr.mxu0 0.0
    %529 = vmatpush1.msra.mxu0 0.0
    %530 = vmatprep.subr.mxu0 0.0
    %531 = vmatpush1.msra.mxu0 0.0
    %532 = vmatprep.subr.mxu0 0.0
    %533 = vmatpush1.msra.mxu0 0.0
    %534 = vmatprep.subr.mxu0 0.0
    %535 = vmatpush1.msra.mxu0 0.0
    %536 = vmatprep.subr.mxu0 0.0
    %537 = vmatpush1.msra.mxu0 0.0
    %538 = vmatprep.subr.mxu0 0.0
    %539 = vmatpush1.msra.mxu0 0.0
    %540 = vmatprep.mubr.f32.mxu0 0.0
    %541 = vmatmul.mubr.f32.gmra.mrb[0].mxu0 %v130
    %v542 = vpop.f32.mrb[0].mxu0
    %v543 = vadd.f32 0.0, %v542
    %v544 = vpop.f32.mrb[0].mxu0
    %545 = vdwg.mxu0
    %546 = vmatprep.subr.mxu0 0.0
    %547 = vmatpush1.msra.mxu0 %v90
    %548 = vmatprep.subr.mxu0 0.0
    %549 = vmatpush1.msra.mxu0 %v91
    %550 = vmatprep.subr.mxu0 0.0
    %551 = vmatpush1.msra.mxu0 %v92
    %552 = vmatprep.subr.mxu0 0.0
    %553 = vmatpush1.msra.mxu0 %v93
    %554 = vmatprep.subr.mxu0 0.0
    %555 = vmatpush1.msra.mxu0 0.0
    %556 = vmatprep.subr.mxu0 0.0
    %557 = vmatpush1.msra.mxu0 0.0
    %558 = vmatprep.subr.mxu0 0.0
    %559 = vmatpush1.msra.mxu0 0.0
    %560 = vmatprep.subr.mxu0 0.0
    %561 = vmatpush1.msra.mxu0 0.0
    %562 = vmatprep.subr.mxu0 0.0
    %563 = vmatpush1.msra.mxu0 0.0
    %564 = vmatprep.subr.mxu0 0.0
    %565 = vmatpush1.msra.mxu0 0.0
    %566 = vmatprep.subr.mxu0 0.0
    %567 = vmatpush1.msra.mxu0 0.0
    %568 = vmatprep.subr.mxu0 0.0
    %569 = vmatpush1.msra.mxu0 0.0
    %570 = vmatprep.subr.mxu0 0.0
    %571 = vmatpush1.msra.mxu0 0.0
    %572 = vmatprep.subr.mxu0 0.0
    %573 = vmatpush1.msra.mxu0 0.0
    %574 = vmatprep.subr.mxu0 0.0
    %575 = vmatpush1.msra.mxu0 0.0
    %576 = vmatprep.subr.mxu0 0.0
    %577 = vmatpush1.msra.mxu0 0.0
    %578 = vmatprep.subr.mxu0 0.0
    %579 = vmatpush1.msra.mxu0 0.0
    %580 = vmatprep.subr.mxu0 0.0
    %581 = vmatpush1.msra.mxu0 0.0
    %582 = vmatprep.subr.mxu0 0.0
    %583 = vmatpush1.msra.mxu0 0.0
    %584 = vmatprep.subr.mxu0 0.0
    %585 = vmatpush1.msra.mxu0 0.0
    %586 = vmatprep.subr.mxu0 0.0
    %587 = vmatpush1.msra.mxu0 0.0
    %588 = vmatprep.subr.mxu0 0.0
    %589 = vmatpush1.msra.mxu0 0.0
    %590 = vmatprep.subr.mxu0 0.0
    %591 = vmatpush1.msra.mxu0 0.0
    %592 = vmatprep.subr.mxu0 0.0
    %593 = vmatpush1.msra.mxu0 0.0
    %594 = vmatprep.subr.mxu0 0.0
    %595 = vmatpush1.msra.mxu0 0.0
    %596 = vmatprep.subr.mxu0 0.0
    %597 = vmatpush1.msra.mxu0 0.0
    %598 = vmatprep.subr.mxu0 0.0
    %599 = vmatpush1.msra.mxu0 0.0
    %600 = vmatprep.subr.mxu0 0.0
    %601 = vmatpush1.msra.mxu0 0.0
    %602 = vmatprep.subr.mxu0 0.0
    %603 = vmatpush1.msra.mxu0 0.0
    %604 = vmatprep.subr.mxu0 0.0
    %605 = vmatpush1.msra.mxu0 0.0
    %606 = vmatprep.subr.mxu0 0.0
    %607 = vmatpush1.msra.mxu0 0.0
    %608 = vmatprep.subr.mxu0 0.0
    %609 = vmatpush1.msra.mxu0 0.0
    %610 = vmatprep.mubr.f32.mxu0 0.0
    %611 = vmatmul.mubr.f32.gmra.mrb[0].mxu0 %v306
    %v612 = vpop.f32.mrb[0].mxu0
    %v613 = vadd.f32 %v543, %v612
    %v614 = vpop.f32.mrb[0].mxu0
    %615 = vdwg.mxu0
    %v616 = vadd.f32 %v613, %v118
    %v617 = vxor.u32 %v616, 2147483648
    %v618 = vmul.f32 %v617, 1.442695
    %v619 = vpow.pop %v618
    %v620 = vadd.f32 %v619, 1.0
    %v621 = vrcp.pop %v620
    %v622 = vmul.f32 1.0, %v621
    %v623 = vtanh.pop %v616
    %v624 = vmul.f32 %v622, 0.0
    %626 = vrot.lane.b32.xlu0 %v623, 64
    %v627 = vpop.permute.xlu0 %626
    %v629 = vmul.f32 %v622, %v627
    %631 = vrot.lane.b32.xlu0 %v629, 32
    %v632 = vpop.permute.xlu0 %631
    %v634 = vadd.f32 %v624, %v632
    %v635 = vtanh.pop %v634
    %637 = vrot.lane.b32.xlu0 %v635, 64
    %v638 = vpop.permute.xlu0 %637
    %v640 = vmul.f32 %v622, %v638
    %s641 = scalar_lea.vmem %s0, 4
    %v642 = vld [vmem:[%s641] sm:$0x3]
    %644 = vrot.lane.b32.xlu0 %v475, 32
    %v645 = vpop.permute.xlu0 %644
    %v646 = vsel %vm128, %v645, 0
    %648 = vmatprep.subr.mxu0 0.0
    %649 = vmatpush1.msra.mxu0 %v86
    %650 = vmatprep.subr.mxu0 0.0
    %651 = vmatpush1.msra.mxu0 %v87
    %652 = vmatprep.subr.mxu0 0.0
    %653 = vmatpush1.msra.mxu0 %v88
    %654 = vmatprep.subr.mxu0 0.0
    %655 = vmatpush1.msra.mxu0 %v89
    %656 = vmatprep.subr.mxu0 0.0
    %657 = vmatpush1.msra.mxu0 0.0
    %658 = vmatprep.subr.mxu0 0.0
    %659 = vmatpush1.msra.mxu0 0.0
    %660 = vmatprep.subr.mxu0 0.0
    %661 = vmatpush1.msra.mxu0 0.0
    %662 = vmatprep.subr.mxu0 0.0
    %663 = vmatpush1.msra.mxu0 0.0
    %664 = vmatprep.subr.mxu0 0.0
    %665 = vmatpush1.msra.mxu0 0.0
    %666 = vmatprep.subr.mxu0 0.0
    %667 = vmatpush1.msra.mxu0 0.0
    %668 = vmatprep.subr.mxu0 0.0
    %669 = vmatpush1.msra.mxu0 0.0
    %670 = vmatprep.subr.mxu0 0.0
    %671 = vmatpush1.msra.mxu0 0.0
    %672 = vmatprep.subr.mxu0 0.0
    %673 = vmatpush1.msra.mxu0 0.0
    %674 = vmatprep.subr.mxu0 0.0
    %675 = vmatpush1.msra.mxu0 0.0
    %676 = vmatprep.subr.mxu0 0.0
    %677 = vmatpush1.msra.mxu0 0.0
    %678 = vmatprep.subr.mxu0 0.0
    %679 = vmatpush1.msra.mxu0 0.0
    %680 = vmatprep.subr.mxu0 0.0
    %681 = vmatpush1.msra.mxu0 0.0
    %682 = vmatprep.subr.mxu0 0.0
    %683 = vmatpush1.msra.mxu0 0.0
    %684 = vmatprep.subr.mxu0 0.0
    %685 = vmatpush1.msra.mxu0 0.0
    %686 = vmatprep.subr.mxu0 0.0
    %687 = vmatpush1.msra.mxu0 0.0
    %688 = vmatprep.subr.mxu0 0.0
    %689 = vmatpush1.msra.mxu0 0.0
    %690 = vmatprep.subr.mxu0 0.0
    %691 = vmatpush1.msra.mxu0 0.0
    %692 = vmatprep.subr.mxu0 0.0
    %693 = vmatpush1.msra.mxu0 0.0
    %694 = vmatprep.subr.mxu0 0.0
    %695 = vmatpush1.msra.mxu0 0.0
    %696 = vmatprep.subr.mxu0 0.0
    %697 = vmatpush1.msra.mxu0 0.0
    %698 = vmatprep.subr.mxu0 0.0
    %699 = vmatpush1.msra.mxu0 0.0
    %700 = vmatprep.subr.mxu0 0.0
    %701 = vmatpush1.msra.mxu0 0.0
    %702 = vmatprep.subr.mxu0 0.0
    %703 = vmatpush1.msra.mxu0 0.0
    %704 = vmatprep.subr.mxu0 0.0
    %705 = vmatpush1.msra.mxu0 0.0
    %706 = vmatprep.subr.mxu0 0.0
    %707 = vmatpush1.msra.mxu0 0.0
    %708 = vmatprep.subr.mxu0 0.0
    %709 = vmatpush1.msra.mxu0 0.0
    %710 = vmatprep.subr.mxu0 0.0
    %711 = vmatpush1.msra.mxu0 0.0
    %712 = vmatprep.mubr.f32.mxu0 0.0
    %713 = vmatmul.mubr.f32.gmra.mrb[0].mxu0 %v646
    %v714 = vpop.f32.mrb[0].mxu0
    %v715 = vadd.f32 0.0, %v714
    %v716 = vpop.f32.mrb[0].mxu0
    %717 = vdwg.mxu0
    %v719 = vsel %vm202, %v642, 0
    %721 = vmatprep.subr.mxu0 0.0
    %722 = vmatpush1.msra.mxu0 %v84
    %723 = vmatprep.subr.mxu0 0.0
    %724 = vmatpush1.msra.mxu0 %v85
    %725 = vmatprep.subr.mxu0 0.0
    %726 = vmatpush1.msra.mxu0 0.0
    %727 = vmatprep.subr.mxu0 0.0
    %728 = vmatpush1.msra.mxu0 0.0
    %729 = vmatprep.subr.mxu0 0.0
    %730 = vmatpush1.msra.mxu0 0.0
    %731 = vmatprep.subr.mxu0 0.0
    %732 = vmatpush1.msra.mxu0 0.0
    %733 = vmatprep.subr.mxu0 0.0
    %734 = vmatpush1.msra.mxu0 0.0
    %735 = vmatprep.subr.mxu0 0.0
    %736 = vmatpush1.msra.mxu0 0.0
    %737 = vmatprep.subr.mxu0 0.0
    %738 = vmatpush1.msra.mxu0 0.0
    %739 = vmatprep.subr.mxu0 0.0
    %740 = vmatpush1.msra.mxu0 0.0
    %741 = vmatprep.subr.mxu0 0.0
    %742 = vmatpush1.msra.mxu0 0.0
    %743 = vmatprep.subr.mxu0 0.0
    %744 = vmatpush1.msra.mxu0 0.0
    %745 = vmatprep.subr.mxu0 0.0
    %746 = vmatpush1.msra.mxu0 0.0
    %747 = vmatprep.subr.mxu0 0.0
    %748 = vmatpush1.msra.mxu0 0.0
    %749 = vmatprep.subr.mxu0 0.0
    %750 = vmatpush1.msra.mxu0 0.0
    %751 = vmatprep.subr.mxu0 0.0
    %752 = vmatpush1.msra.mxu0 0.0
    %753 = vmatprep.subr.mxu0 0.0
    %754 = vmatpush1.msra.mxu0 0.0
    %755 = vmatprep.subr.mxu0 0.0
    %756 = vmatpush1.msra.mxu0 0.0
    %757 = vmatprep.subr.mxu0 0.0
    %758 = vmatpush1.msra.mxu0 0.0
    %759 = vmatprep.subr.mxu0 0.0
    %760 = vmatpush1.msra.mxu0 0.0
    %761 = vmatprep.subr.mxu0 0.0
    %762 = vmatpush1.msra.mxu0 0.0
    %763 = vmatprep.subr.mxu0 0.0
    %764 = vmatpush1.msra.mxu0 0.0
    %765 = vmatprep.subr.mxu0 0.0
    %766 = vmatpush1.msra.mxu0 0.0
    %767 = vmatprep.subr.mxu0 0.0
    %768 = vmatpush1.msra.mxu0 0.0
    %769 = vmatprep.subr.mxu0 0.0
    %770 = vmatpush1.msra.mxu0 0.0
    %771 = vmatprep.subr.mxu0 0.0
    %772 = vmatpush1.msra.mxu0 0.0
    %773 = vmatprep.subr.mxu0 0.0
    %774 = vmatpush1.msra.mxu0 0.0
    %775 = vmatprep.subr.mxu0 0.0
    %776 = vmatpush1.msra.mxu0 0.0
    %777 = vmatprep.subr.mxu0 0.0
    %778 = vmatpush1.msra.mxu0 0.0
    %779 = vmatprep.subr.mxu0 0.0
    %780 = vmatpush1.msra.mxu0 0.0
    %781 = vmatprep.subr.mxu0 0.0
    %782 = vmatpush1.msra.mxu0 0.0
    %783 = vmatprep.subr.mxu0 0.0
    %784 = vmatpush1.msra.mxu0 0.0
    %785 = vmatprep.mubr.f32.mxu0 0.0
    %786 = vmatmul.mubr.f32.gmra.mrb[0].mxu0 %v719
    %v787 = vpop.f32.mrb[0].mxu0
    %v788 = vadd.f32 %v715, %v787
    %v789 = vpop.f32.mrb[0].mxu0
    %790 = vdwg.mxu0
    %v791 = vadd.f32 %v788, %v111
    %v792 = vxor.u32 %v791, 2147483648
    %v793 = vmul.f32 %v792, 1.442695
    %v794 = vpow.pop %v793
    %v795 = vadd.f32 %v794, 1.0
    %v796 = vrcp.pop %v795
    %v797 = vmul.f32 1.0, %v796
    %v798 = vtanh.pop %v791
    %v799 = vmul.f32 %v797, %v469
    %801 = vrot.lane.b32.xlu0 %v798, 64
    %v802 = vpop.permute.xlu0 %801
    %v804 = vmul.f32 %v797, %v802
    %806 = vrot.lane.b32.xlu0 %v804, 32
    %v807 = vpop.permute.xlu0 %806
    %v809 = vadd.f32 %v799, %v807
    %v810 = vtanh.pop %v809
    %812 = vrot.lane.b32.xlu0 %v810, 64
    %v813 = vpop.permute.xlu0 %812
    %v815 = vmul.f32 %v797, %v813
    %817 = vrot.lane.b32.xlu0 %v640, 32
    %v818 = vpop.permute.xlu0 %817
    %v819 = vsel %vm128, %v818, 0
    %821 = vmatprep.subr.mxu0 0.0
    %822 = vmatpush1.msra.mxu0 %v94
    %823 = vmatprep.subr.mxu0 0.0
    %824 = vmatpush1.msra.mxu0 %v95
    %825 = vmatprep.subr.mxu0 0.0
    %826 = vmatpush1.msra.mxu0 %v96
    %827 = vmatprep.subr.mxu0 0.0
    %828 = vmatpush1.msra.mxu0 %v97
    %829 = vmatprep.subr.mxu0 0.0
    %830 = vmatpush1.msra.mxu0 0.0
    %831 = vmatprep.subr.mxu0 0.0
    %832 = vmatpush1.msra.mxu0 0.0
    %833 = vmatprep.subr.mxu0 0.0
    %834 = vmatpush1.msra.mxu0 0.0
    %835 = vmatprep.subr.mxu0 0.0
    %836 = vmatpush1.msra.mxu0 0.0
    %837 = vmatprep.subr.mxu0 0.0
    %838 = vmatpush1.msra.mxu0 0.0
    %839 = vmatprep.subr.mxu0 0.0
    %840 = vmatpush1.msra.mxu0 0.0
    %841 = vmatprep.subr.mxu0 0.0
    %842 = vmatpush1.msra.mxu0 0.0
    %843 = vmatprep.subr.mxu0 0.0
    %844 = vmatpush1.msra.mxu0 0.0
    %845 = vmatprep.subr.mxu0 0.0
    %846 = vmatpush1.msra.mxu0 0.0
    %847 = vmatprep.subr.mxu0 0.0
    %848 = vmatpush1.msra.mxu0 0.0
    %849 = vmatprep.subr.mxu0 0.0
    %850 = vmatpush1.msra.mxu0 0.0
    %851 = vmatprep.subr.mxu0 0.0
    %852 = vmatpush1.msra.mxu0 0.0
    %853 = vmatprep.subr.mxu0 0.0
    %854 = vmatpush1.msra.mxu0 0.0
    %855 = vmatprep.subr.mxu0 0.0
    %856 = vmatpush1.msra.mxu0 0.0
    %857 = vmatprep.subr.mxu0 0.0
    %858 = vmatpush1.msra.mxu0 0.0
    %859 = vmatprep.subr.mxu0 0.0
    %860 = vmatpush1.msra.mxu0 0.0
    %861 = vmatprep.subr.mxu0 0.0
    %862 = vmatpush1.msra.mxu0 0.0
    %863 = vmatprep.subr.mxu0 0.0
    %864 = vmatpush1.msra.mxu0 0.0
    %865 = vmatprep.subr.mxu0 0.0
    %866 = vmatpush1.msra.mxu0 0.0
    %867 = vmatprep.subr.mxu0 0.0
    %868 = vmatpush1.msra.mxu0 0.0
    %869 = vmatprep.subr.mxu0 0.0
    %870 = vmatpush1.msra.mxu0 0.0
    %871 = vmatprep.subr.mxu0 0.0
    %872 = vmatpush1.msra.mxu0 0.0
    %873 = vmatprep.subr.mxu0 0.0
    %874 = vmatpush1.msra.mxu0 0.0
    %875 = vmatprep.subr.mxu0 0.0
    %876 = vmatpush1.msra.mxu0 0.0
    %877 = vmatprep.subr.mxu0 0.0
    %878 = vmatpush1.msra.mxu0 0.0
    %879 = vmatprep.subr.mxu0 0.0
    %880 = vmatpush1.msra.mxu0 0.0
    %881 = vmatprep.subr.mxu0 0.0
    %882 = vmatpush1.msra.mxu0 0.0
    %883 = vmatprep.subr.mxu0 0.0
    %884 = vmatpush1.msra.mxu0 0.0
    %885 = vmatprep.mubr.f32.mxu0 0.0
    %886 = vmatmul.mubr.f32.gmra.mrb[0].mxu0 %v819
    %v887 = vpop.f32.mrb[0].mxu0
    %v888 = vadd.f32 0.0, %v887
    %v889 = vpop.f32.mrb[0].mxu0
    %890 = vdwg.mxu0
    %891 = vmatprep.subr.mxu0 0.0
    %892 = vmatpush1.msra.mxu0 %v90
    %893 = vmatprep.subr.mxu0 0.0
    %894 = vmatpush1.msra.mxu0 %v91
    %895 = vmatprep.subr.mxu0 0.0
    %896 = vmatpush1.msra.mxu0 %v92
    %897 = vmatprep.subr.mxu0 0.0
    %898 = vmatpush1.msra.mxu0 %v93
    %899 = vmatprep.subr.mxu0 0.0
    %900 = vmatpush1.msra.mxu0 0.0
    %901 = vmatprep.subr.mxu0 0.0
    %902 = vmatpush1.msra.mxu0 0.0
    %903 = vmatprep.subr.mxu0 0.0
    %904 = vmatpush1.msra.mxu0 0.0
    %905 = vmatprep.subr.mxu0 0.0
    %906 = vmatpush1.msra.mxu0 0.0
    %907 = vmatprep.subr.mxu0 0.0
    %908 = vmatpush1.msra.mxu0 0.0
    %909 = vmatprep.subr.mxu0 0.0
    %910 = vmatpush1.msra.mxu0 0.0
    %911 = vmatprep.subr.mxu0 0.0
    %912 = vmatpush1.msra.mxu0 0.0
    %913 = vmatprep.subr.mxu0 0.0
    %914 = vmatpush1.msra.mxu0 0.0
    %915 = vmatprep.subr.mxu0 0.0
    %916 = vmatpush1.msra.mxu0 0.0
    %917 = vmatprep.subr.mxu0 0.0
    %918 = vmatpush1.msra.mxu0 0.0
    %919 = vmatprep.subr.mxu0 0.0
    %920 = vmatpush1.msra.mxu0 0.0
    %921 = vmatprep.subr.mxu0 0.0
    %922 = vmatpush1.msra.mxu0 0.0
    %923 = vmatprep.subr.mxu0 0.0
    %924 = vmatpush1.msra.mxu0 0.0
    %925 = vmatprep.subr.mxu0 0.0
    %926 = vmatpush1.msra.mxu0 0.0
    %927 = vmatprep.subr.mxu0 0.0
    %928 = vmatpush1.msra.mxu0 0.0
    %929 = vmatprep.subr.mxu0 0.0
    %930 = vmatpush1.msra.mxu0 0.0
    %931 = vmatprep.subr.mxu0 0.0
    %932 = vmatpush1.msra.mxu0 0.0
    %933 = vmatprep.subr.mxu0 0.0
    %934 = vmatpush1.msra.mxu0 0.0
    %935 = vmatprep.subr.mxu0 0.0
    %936 = vmatpush1.msra.mxu0 0.0
    %937 = vmatprep.subr.mxu0 0.0
    %938 = vmatpush1.msra.mxu0 0.0
    %939 = vmatprep.subr.mxu0 0.0
    %940 = vmatpush1.msra.mxu0 0.0
    %941 = vmatprep.subr.mxu0 0.0
    %942 = vmatpush1.msra.mxu0 0.0
    %943 = vmatprep.subr.mxu0 0.0
    %944 = vmatpush1.msra.mxu0 0.0
    %945 = vmatprep.subr.mxu0 0.0
    %946 = vmatpush1.msra.mxu0 0.0
    %947 = vmatprep.subr.mxu0 0.0
    %948 = vmatpush1.msra.mxu0 0.0
    %949 = vmatprep.subr.mxu0 0.0
    %950 = vmatpush1.msra.mxu0 0.0
    %951 = vmatprep.subr.mxu0 0.0
    %952 = vmatpush1.msra.mxu0 0.0
    %953 = vmatprep.subr.mxu0 0.0
    %954 = vmatpush1.msra.mxu0 0.0
    %955 = vmatprep.mubr.f32.mxu0 0.0
    %956 = vmatmul.mubr.f32.gmra.mrb[0].mxu0 %v646
    %v957 = vpop.f32.mrb[0].mxu0
    %v958 = vadd.f32 %v888, %v957
    %v959 = vpop.f32.mrb[0].mxu0
    %960 = vdwg.mxu0
    %v961 = vadd.f32 %v958, %v118
    %v962 = vxor.u32 %v961, 2147483648
    %v963 = vmul.f32 %v962, 1.442695
    %v964 = vpow.pop %v963
    %v965 = vadd.f32 %v964, 1.0
    %v966 = vrcp.pop %v965
    %v967 = vmul.f32 1.0, %v966
    %v968 = vtanh.pop %v961
    %v969 = vmul.f32 %v967, %v634
    %971 = vrot.lane.b32.xlu0 %v968, 64
    %v972 = vpop.permute.xlu0 %971
    %v974 = vmul.f32 %v967, %v972
    %976 = vrot.lane.b32.xlu0 %v974, 32
    %v977 = vpop.permute.xlu0 %976
    %v979 = vadd.f32 %v969, %v977
    %v980 = vtanh.pop %v979
    %982 = vrot.lane.b32.xlu0 %v980, 64
    %v983 = vpop.permute.xlu0 %982
    %v985 = vmul.f32 %v967, %v983
    %986 = vmatprep.subr.mxu0 0.0
    %987 = vmatpush1.msra.mxu0 %v102
    %988 = vmatprep.subr.mxu0 0.0
    %989 = vmatpush1.msra.mxu0 %v103
    %990 = vmatprep.subr.mxu0 0.0
    %991 = vmatpush1.msra.mxu0 %v104
    %992 = vmatprep.subr.mxu0 0.0
    %993 = vmatpush1.msra.mxu0 %v105
    %994 = vmatprep.subr.mxu0 0.0
    %995 = vmatpush1.msra.mxu0 0.0
    %996 = vmatprep.subr.mxu0 0.0
    %997 = vmatpush1.msra.mxu0 0.0
    %998 = vmatprep.subr.mxu0 0.0
    %999 = vmatpush1.msra.mxu0 0.0
    %1000 = vmatprep.subr.mxu0 0.0
    %1001 = vmatpush1.msra.mxu0 0.0
    %1002 = vmatprep.subr.mxu0 0.0
    %1003 = vmatpush1.msra.mxu0 0.0
    %1004 = vmatprep.subr.mxu0 0.0
    %1005 = vmatpush1.msra.mxu0 0.0
    %1006 = vmatprep.subr.mxu0 0.0
    %1007 = vmatpush1.msra.mxu0 0.0
    %1008 = vmatprep.subr.mxu0 0.0
    %1009 = vmatpush1.msra.mxu0 0.0
    %1010 = vmatprep.subr.mxu0 0.0
    %1011 = vmatpush1.msra.mxu0 0.0
    %1012 = vmatprep.subr.mxu0 0.0
    %1013 = vmatpush1.msra.mxu0 0.0
    %1014 = vmatprep.subr.mxu0 0.0
    %1015 = vmatpush1.msra.mxu0 0.0
    %1016 = vmatprep.subr.mxu0 0.0
    %1017 = vmatpush1.msra.mxu0 0.0
    %1018 = vmatprep.subr.mxu0 0.0
    %1019 = vmatpush1.msra.mxu0 0.0
    %1020 = vmatprep.subr.mxu0 0.0
    %1021 = vmatpush1.msra.mxu0 0.0
    %1022 = vmatprep.subr.mxu0 0.0
    %1023 = vmatpush1.msra.mxu0 0.0
    %1024 = vmatprep.subr.mxu0 0.0
    %1025 = vmatpush1.msra.mxu0 0.0
    %1026 = vmatprep.subr.mxu0 0.0
    %1027 = vmatpush1.msra.mxu0 0.0
    %1028 = vmatprep.subr.mxu0 0.0
    %1029 = vmatpush1.msra.mxu0 0.0
    %1030 = vmatprep.subr.mxu0 0.0
    %1031 = vmatpush1.msra.mxu0 0.0
    %1032 = vmatprep.subr.mxu0 0.0
    %1033 = vmatpush1.msra.mxu0 0.0
    %1034 = vmatprep.subr.mxu0 0.0
    %1035 = vmatpush1.msra.mxu0 0.0
    %1036 = vmatprep.subr.mxu0 0.0
    %1037 = vmatpush1.msra.mxu0 0.0
    %1038 = vmatprep.subr.mxu0 0.0
    %1039 = vmatpush1.msra.mxu0 0.0
    %1040 = vmatprep.subr.mxu0 0.0
    %1041 = vmatpush1.msra.mxu0 0.0
    %1042 = vmatprep.subr.mxu0 0.0
    %1043 = vmatpush1.msra.mxu0 0.0
    %1044 = vmatprep.subr.mxu0 0.0
    %1045 = vmatpush1.msra.mxu0 0.0
    %1046 = vmatprep.subr.mxu0 0.0
    %1047 = vmatpush1.msra.mxu0 0.0
    %1048 = vmatprep.subr.mxu0 0.0
    %1049 = vmatpush1.msra.mxu0 0.0
    %1050 = vmatprep.mubr.f32.mxu0 0.0
    %1051 = vmatmul.mubr.f32.gmra.mrb[0].mxu0 %v130
    %v1052 = vpop.f32.mrb[0].mxu0
    %v1053 = vadd.f32 0.0, %v1052
    %v1054 = vpop.f32.mrb[0].mxu0
    %1055 = vdwg.mxu0
    %1056 = vmatprep.subr.mxu0 0.0
    %1057 = vmatpush1.msra.mxu0 %v98
    %1058 = vmatprep.subr.mxu0 0.0
    %1059 = vmatpush1.msra.mxu0 %v99
    %1060 = vmatprep.subr.mxu0 0.0
    %1061 = vmatpush1.msra.mxu0 %v100
    %1062 = vmatprep.subr.mxu0 0.0
    %1063 = vmatpush1.msra.mxu0 %v101
    %1064 = vmatprep.subr.mxu0 0.0
    %1065 = vmatpush1.msra.mxu0 0.0
    %1066 = vmatprep.subr.mxu0 0.0
    %1067 = vmatpush1.msra.mxu0 0.0
    %1068 = vmatprep.subr.mxu0 0.0
    %1069 = vmatpush1.msra.mxu0 0.0
    %1070 = vmatprep.subr.mxu0 0.0
    %1071 = vmatpush1.msra.mxu0 0.0
    %1072 = vmatprep.subr.mxu0 0.0
    %1073 = vmatpush1.msra.mxu0 0.0
    %1074 = vmatprep.subr.mxu0 0.0
    %1075 = vmatpush1.msra.mxu0 0.0
    %1076 = vmatprep.subr.mxu0 0.0
    %1077 = vmatpush1.msra.mxu0 0.0
    %1078 = vmatprep.subr.mxu0 0.0
    %1079 = vmatpush1.msra.mxu0 0.0
    %1080 = vmatprep.subr.mxu0 0.0
    %1081 = vmatpush1.msra.mxu0 0.0
    %1082 = vmatprep.subr.mxu0 0.0
    %1083 = vmatpush1.msra.mxu0 0.0
    %1084 = vmatprep.subr.mxu0 0.0
    %1085 = vmatpush1.msra.mxu0 0.0
    %1086 = vmatprep.subr.mxu0 0.0
    %1087 = vmatpush1.msra.mxu0 0.0
    %1088 = vmatprep.subr.mxu0 0.0
    %1089 = vmatpush1.msra.mxu0 0.0
    %1090 = vmatprep.subr.mxu0 0.0
    %1091 = vmatpush1.msra.mxu0 0.0
    %1092 = vmatprep.subr.mxu0 0.0
    %1093 = vmatpush1.msra.mxu0 0.0
    %1094 = vmatprep.subr.mxu0 0.0
    %1095 = vmatpush1.msra.mxu0 0.0
    %1096 = vmatprep.subr.mxu0 0.0
    %1097 = vmatpush1.msra.mxu0 0.0
    %1098 = vmatprep.subr.mxu0 0.0
    %1099 = vmatpush1.msra.mxu0 0.0
    %1100 = vmatprep.subr.mxu0 0.0
    %1101 = vmatpush1.msra.mxu0 0.0
    %1102 = vmatprep.subr.mxu0 0.0
    %1103 = vmatpush1.msra.mxu0 0.0
    %1104 = vmatprep.subr.mxu0 0.0
    %1105 = vmatpush1.msra.mxu0 0.0
    %1106 = vmatprep.subr.mxu0 0.0
    %1107 = vmatpush1.msra.mxu0 0.0
    %1108 = vmatprep.subr.mxu0 0.0
    %1109 = vmatpush1.msra.mxu0 0.0
    %1110 = vmatprep.subr.mxu0 0.0
    %1111 = vmatpush1.msra.mxu0 0.0
    %1112 = vmatprep.subr.mxu0 0.0
    %1113 = vmatpush1.msra.mxu0 0.0
    %1114 = vmatprep.subr.mxu0 0.0
    %1115 = vmatpush1.msra.mxu0 0.0
    %1116 = vmatprep.subr.mxu0 0.0
    %1117 = vmatpush1.msra.mxu0 0.0
    %1118 = vmatprep.subr.mxu0 0.0
    %1119 = vmatpush1.msra.mxu0 0.0
    %1120 = vmatprep.mubr.f32.mxu0 0.0
    %1121 = vmatmul.mubr.f32.gmra.mrb[0].mxu0 %v819
    %v1122 = vpop.f32.mrb[0].mxu0
    %v1123 = vadd.f32 %v1053, %v1122
    %v1124 = vpop.f32.mrb[0].mxu0
    %1125 = vdwg.mxu0
    %v1126 = vadd.f32 %v1123, %v125
    %v1127 = vxor.u32 %v1126, 2147483648
    %v1128 = vmul.f32 %v1127, 1.442695
    %v1129 = vpow.pop %v1128
    %v1130 = vadd.f32 %v1129, 1.0
    %v1131 = vrcp.pop %v1130
    %v1132 = vmul.f32 1.0, %v1131
    %v1133 = vtanh.pop %v1126
    %v1134 = vmul.f32 %v1132, 0.0
    %1136 = vrot.lane.b32.xlu0 %v1133, 64
    %v1137 = vpop.permute.xlu0 %1136
    %v1139 = vmul.f32 %v1132, %v1137
    %1141 = vrot.lane.b32.xlu0 %v1139, 32
    %v1142 = vpop.permute.xlu0 %1141
    %v1144 = vadd.f32 %v1134, %v1142
    %v1145 = vtanh.pop %v1144
    %1147 = vrot.lane.b32.xlu0 %v1145, 64
    %v1148 = vpop.permute.xlu0 %1147
    %v1150 = vmul.f32 %v1132, %v1148
    %s1151 = scalar_lea.vmem %s0, 6
    %v1152 = vld [vmem:[%s1151] sm:$0x3]
    %1154 = vrot.lane.b32.xlu0 %v815, 32
    %v1155 = vpop.permute.xlu0 %1154
    %v1156 = vsel %vm128, %v1155, 0
    %1158 = vmatprep.subr.mxu0 0.0
    %1159 = vmatpush1.msra.mxu0 %v86
    %1160 = vmatprep.subr.mxu0 0.0
    %1161 = vmatpush1.msra.mxu0 %v87
    %1162 = vmatprep.subr.mxu0 0.0
    %1163 = vmatpush1.msra.mxu0 %v88
    %1164 = vmatprep.subr.mxu0 0.0
    %1165 = vmatpush1.msra.mxu0 %v89
    %1166 = vmatprep.subr.mxu0 0.0
    %1167 = vmatpush1.msra.mxu0 0.0
    %1168 = vmatprep.subr.mxu0 0.0
    %1169 = vmatpush1.msra.mxu0 0.0
    %1170 = vmatprep.subr.mxu0 0.0
    %1171 = vmatpush1.msra.mxu0 0.0
    %1172 = vmatprep.subr.mxu0 0.0
    %1173 = vmatpush1.msra.mxu0 0.0
    %1174 = vmatprep.subr.mxu0 0.0
    %1175 = vmatpush1.msra.mxu0 0.0
    %1176 = vmatprep.subr.mxu0 0.0
    %1177 = vmatpush1.msra.mxu0 0.0
    %1178 = vmatprep.subr.mxu0 0.0
    %1179 = vmatpush1.msra.mxu0 0.0
    %1180 = vmatprep.subr.mxu0 0.0
    %1181 = vmatpush1.msra.mxu0 0.0
    %1182 = vmatprep.subr.mxu0 0.0
    %1183 = vmatpush1.msra.mxu0 0.0
    %1184 = vmatprep.subr.mxu0 0.0
    %1185 = vmatpush1.msra.mxu0 0.0
    %1186 = vmatprep.subr.mxu0 0.0
    %1187 = vmatpush1.msra.mxu0 0.0
    %1188 = vmatprep.subr.mxu0 0.0
    %1189 = vmatpush1.msra.mxu0 0.0
    %1190 = vmatprep.subr.mxu0 0.0
    %1191 = vmatpush1.msra.mxu0 0.0
    %1192 = vmatprep.subr.mxu0 0.0
    %1193 = vmatpush1.msra.mxu0 0.0
    %1194 = vmatprep.subr.mxu0 0.0
    %1195 = vmatpush1.msra.mxu0 0.0
    %1196 = vmatprep.subr.mxu0 0.0
    %1197 = vmatpush1.msra.mxu0 0.0
    %1198 = vmatprep.subr.mxu0 0.0
    %1199 = vmatpush1.msra.mxu0 0.0
    %1200 = vmatprep.subr.mxu0 0.0
    %1201 = vmatpush1.msra.mxu0 0.0
    %1202 = vmatprep.subr.mxu0 0.0
    %1203 = vmatpush1.msra.mxu0 0.0
    %1204 = vmatprep.subr.mxu0 0.0
    %1205 = vmatpush1.msra.mxu0 0.0
    %1206 = vmatprep.subr.mxu0 0.0
    %1207 = vmatpush1.msra.mxu0 0.0
    %1208 = vmatprep.subr.mxu0 0.0
    %1209 = vmatpush1.msra.mxu0 0.0
    %1210 = vmatprep.subr.mxu0 0.0
    %1211 = vmatpush1.msra.mxu0 0.0
    %1212 = vmatprep.subr.mxu0 0.0
    %1213 = vmatpush1.msra.mxu0 0.0
    %1214 = vmatprep.subr.mxu0 0.0
    %1215 = vmatpush1.msra.mxu0 0.0
    %1216 = vmatprep.subr.mxu0 0.0
    %1217 = vmatpush1.msra.mxu0 0.0
    %1218 = vmatprep.subr.mxu0 0.0
    %1219 = vmatpush1.msra.mxu0 0.0
    %1220 = vmatprep.subr.mxu0 0.0
    %1221 = vmatpush1.msra.mxu0 0.0
    %1222 = vmatprep.mubr.f32.mxu0 0.0
    %1223 = vmatmul.mubr.f32.gmra.mrb[0].mxu0 %v1156
    %v1224 = vpop.f32.mrb[0].mxu0
    %v1225 = vadd.f32 0.0, %v1224
    %v1226 = vpop.f32.mrb[0].mxu0
    %1227 = vdwg.mxu0
    %v1229 = vsel %vm202, %v1152, 0
    %1231 = vmatprep.subr.mxu0 0.0
    %1232 = vmatpush1.msra.mxu0 %v84
    %1233 = vmatprep.subr.mxu0 0.0
    %1234 = vmatpush1.msra.mxu0 %v85
    %1235 = vmatprep.subr.mxu0 0.0
    %1236 = vmatpush1.msra.mxu0 0.0
    %1237 = vmatprep.subr.mxu0 0.0
    %1238 = vmatpush1.msra.mxu0 0.0
    %1239 = vmatprep.subr.mxu0 0.0
    %1240 = vmatpush1.msra.mxu0 0.0
    %1241 = vmatprep.subr.mxu0 0.0
    %1242 = vmatpush1.msra.mxu0 0.0
    %1243 = vmatprep.subr.mxu0 0.0
    %1244 = vmatpush1.msra.mxu0 0.0
    %1245 = vmatprep.subr.mxu0 0.0
    %1246 = vmatpush1.msra.mxu0 0.0
    %1247 = vmatprep.subr.mxu0 0.0
    %1248 = vmatpush1.msra.mxu0 0.0
    %1249 = vmatprep.subr.mxu0 0.0
    %1250 = vmatpush1.msra.mxu0 0.0
    %1251 = vmatprep.subr.mxu0 0.0
    %1252 = vmatpush1.msra.mxu0 0.0
    %1253 = vmatprep.subr.mxu0 0.0
    %1254 = vmatpush1.msra.mxu0 0.0
    %1255 = vmatprep.subr.mxu0 0.0
    %1256 = vmatpush1.msra.mxu0 0.0
    %1257 = vmatprep.subr.mxu0 0.0
    %1258 = vmatpush1.msra.mxu0 0.0
    %1259 = vmatprep.subr.mxu0 0.0
    %1260 = vmatpush1.msra.mxu0 0.0
    %1261 = vmatprep.subr.mxu0 0.0
    %1262 = vmatpush1.msra.mxu0 0.0
    %1263 = vmatprep.subr.mxu0 0.0
    %1264 = vmatpush1.msra.mxu0 0.0
    %1265 = vmatprep.subr.mxu0 0.0
    %1266 = vmatpush1.msra.mxu0 0.0
    %1267 = vmatprep.subr.mxu0 0.0
    %1268 = vmatpush1.msra.mxu0 0.0
    %1269 = vmatprep.subr.mxu0 0.0
    %1270 = vmatpush1.msra.mxu0 0.0
    %1271 = vmatprep.subr.mxu0 0.0
    %1272 = vmatpush1.msra.mxu0 0.0
    %1273 = vmatprep.subr.mxu0 0.0
    %1274 = vmatpush1.msra.mxu0 0.0
    %1275 = vmatprep.subr.mxu0 0.0
    %1276 = vmatpush1.msra.mxu0 0.0
    %1277 = vmatprep.subr.mxu0 0.0
    %1278 = vmatpush1.msra.mxu0 0.0
    %1279 = vmatprep.subr.mxu0 0.0
    %1280 = vmatpush1.msra.mxu0 0.0
    %1281 = vmatprep.subr.mxu0 0.0
    %1282 = vmatpush1.msra.mxu0 0.0
    %1283 = vmatprep.subr.mxu0 0.0
    %1284 = vmatpush1.msra.mxu0 0.0
    %1285 = vmatprep.subr.mxu0 0.0
    %1286 = vmatpush1.msra.mxu0 0.0
    %1287 = vmatprep.subr.mxu0 0.0
    %1288 = vmatpush1.msra.mxu0 0.0
    %1289 = vmatprep.subr.mxu0 0.0
    %1290 = vmatpush1.msra.mxu0 0.0
    %1291 = vmatprep.subr.mxu0 0.0
    %1292 = vmatpush1.msra.mxu0 0.0
    %1293 = vmatprep.subr.mxu0 0.0
    %1294 = vmatpush1.msra.mxu0 0.0
    %1295 = vmatprep.mubr.f32.mxu0 0.0
    %1296 = vmatmul.mubr.f32.gmra.mrb[0].mxu0 %v1229
    %v1297 = vpop.f32.mrb[0].mxu0
    %v1298 = vadd.f32 %v1225, %v1297
    %v1299 = vpop.f32.mrb[0].mxu0
    %1300 = vdwg.mxu0
    %v1301 = vadd.f32 %v1298, %v111
    %v1302 = vxor.u32 %v1301, 2147483648
    %v1303 = vmul.f32 %v1302, 1.442695
    %v1304 = vpow.pop %v1303
    %v1305 = vadd.f32 %v1304, 1.0
    %v1306 = vrcp.pop %v1305
    %v1307 = vmul.f32 1.0, %v1306
    %v1308 = vtanh.pop %v1301
    %v1309 = vmul.f32 %v1307, %v809
    %1311 = vrot.lane.b32.xlu0 %v1308, 64
    %v1312 = vpop.permute.xlu0 %1311
    %v1314 = vmul.f32 %v1307, %v1312
    %1316 = vrot.lane.b32.xlu0 %v1314, 32
    %v1317 = vpop.permute.xlu0 %1316
    %v1319 = vadd.f32 %v1309, %v1317
    %v1320 = vtanh.pop %v1319
    %1322 = vrot.lane.b32.xlu0 %v1320, 64
    %v1323 = vpop.permute.xlu0 %1322
    %v1325 = vmul.f32 %v1307, %v1323
    %1327 = vrot.lane.b32.xlu0 %v985, 32
    %v1328 = vpop.permute.xlu0 %1327
    %v1329 = vsel %vm128, %v1328, 0
    %1331 = vmatprep.subr.mxu0 0.0
    %1332 = vmatpush1.msra.mxu0 %v94
    %1333 = vmatprep.subr.mxu0 0.0
    %1334 = vmatpush1.msra.mxu0 %v95
    %1335 = vmatprep.subr.mxu0 0.0
    %1336 = vmatpush1.msra.mxu0 %v96
    %1337 = vmatprep.subr.mxu0 0.0
    %1338 = vmatpush1.msra.mxu0 %v97
    %1339 = vmatprep.subr.mxu0 0.0
    %1340 = vmatpush1.msra.mxu0 0.0
    %1341 = vmatprep.subr.mxu0 0.0
    %1342 = vmatpush1.msra.mxu0 0.0
    %1343 = vmatprep.subr.mxu0 0.0
    %1344 = vmatpush1.msra.mxu0 0.0
    %1345 = vmatprep.subr.mxu0 0.0
    %1346 = vmatpush1.msra.mxu0 0.0
    %1347 = vmatprep.subr.mxu0 0.0
    %1348 = vmatpush1.msra.mxu0 0.0
    %1349 = vmatprep.subr.mxu0 0.0
    %1350 = vmatpush1.msra.mxu0 0.0
    %1351 = vmatprep.subr.mxu0 0.0
    %1352 = vmatpush1.msra.mxu0 0.0
    %1353 = vmatprep.subr.mxu0 0.0
    %1354 = vmatpush1.msra.mxu0 0.0
    %1355 = vmatprep.subr.mxu0 0.0
    %1356 = vmatpush1.msra.mxu0 0.0
    %1357 = vmatprep.subr.mxu0 0.0
    %1358 = vmatpush1.msra.mxu0 0.0
    %1359 = vmatprep.subr.mxu0 0.0
    %1360 = vmatpush1.msra.mxu0 0.0
    %1361 = vmatprep.subr.mxu0 0.0
    %1362 = vmatpush1.msra.mxu0 0.0
    %1363 = vmatprep.subr.mxu0 0.0
    %1364 = vmatpush1.msra.mxu0 0.0
    %1365 = vmatprep.subr.mxu0 0.0
    %1366 = vmatpush1.msra.mxu0 0.0
    %1367 = vmatprep.subr.mxu0 0.0
    %1368 = vmatpush1.msra.mxu0 0.0
    %1369 = vmatprep.subr.mxu0 0.0
    %1370 = vmatpush1.msra.mxu0 0.0
    %1371 = vmatprep.subr.mxu0 0.0
    %1372 = vmatpush1.msra.mxu0 0.0
    %1373 = vmatprep.subr.mxu0 0.0
    %1374 = vmatpush1.msra.mxu0 0.0
    %1375 = vmatprep.subr.mxu0 0.0
    %1376 = vmatpush1.msra.mxu0 0.0
    %1377 = vmatprep.subr.mxu0 0.0
    %1378 = vmatpush1.msra.mxu0 0.0
    %1379 = vmatprep.subr.mxu0 0.0
    %1380 = vmatpush1.msra.mxu0 0.0
    %1381 = vmatprep.subr.mxu0 0.0
    %1382 = vmatpush1.msra.mxu0 0.0
    %1383 = vmatprep.subr.mxu0 0.0
    %1384 = vmatpush1.msra.mxu0 0.0
    %1385 = vmatprep.subr.mxu0 0.0
    %1386 = vmatpush1.msra.mxu0 0.0
    %1387 = vmatprep.subr.mxu0 0.0
    %1388 = vmatpush1.msra.mxu0 0.0
    %1389 = vmatprep.subr.mxu0 0.0
    %1390 = vmatpush1.msra.mxu0 0.0
    %1391 = vmatprep.subr.mxu0 0.0
    %1392 = vmatpush1.msra.mxu0 0.0
    %1393 = vmatprep.subr.mxu0 0.0
    %1394 = vmatpush1.msra.mxu0 0.0
    %1395 = vmatprep.mubr.f32.mxu0 0.0
    %1396 = vmatmul.mubr.f32.gmra.mrb[0].mxu0 %v1329
    %v1397 = vpop.f32.mrb[0].mxu0
    %v1398 = vadd.f32 0.0, %v1397
    %v1399 = vpop.f32.mrb[0].mxu0
    %1400 = vdwg.mxu0
    %1401 = vmatprep.subr.mxu0 0.0
    %1402 = vmatpush1.msra.mxu0 %v90
    %1403 = vmatprep.subr.mxu0 0.0
    %1404 = vmatpush1.msra.mxu0 %v91
    %1405 = vmatprep.subr.mxu0 0.0
    %1406 = vmatpush1.msra.mxu0 %v92
    %1407 = vmatprep.subr.mxu0 0.0
    %1408 = vmatpush1.msra.mxu0 %v93
    %1409 = vmatprep.subr.mxu0 0.0
    %1410 = vmatpush1.msra.mxu0 0.0
    %1411 = vmatprep.subr.mxu0 0.0
    %1412 = vmatpush1.msra.mxu0 0.0
    %1413 = vmatprep.subr.mxu0 0.0
    %1414 = vmatpush1.msra.mxu0 0.0
    %1415 = vmatprep.subr.mxu0 0.0
    %1416 = vmatpush1.msra.mxu0 0.0
    %1417 = vmatprep.subr.mxu0 0.0
    %1418 = vmatpush1.msra.mxu0 0.0
    %1419 = vmatprep.subr.mxu0 0.0
    %1420 = vmatpush1.msra.mxu0 0.0
    %1421 = vmatprep.subr.mxu0 0.0
    %1422 = vmatpush1.msra.mxu0 0.0
    %1423 = vmatprep.subr.mxu0 0.0
    %1424 = vmatpush1.msra.mxu0 0.0
    %1425 = vmatprep.subr.mxu0 0.0
    %1426 = vmatpush1.msra.mxu0 0.0
    %1427 = vmatprep.subr.mxu0 0.0
    %1428 = vmatpush1.msra.mxu0 0.0
    %1429 = vmatprep.subr.mxu0 0.0
    %1430 = vmatpush1.msra.mxu0 0.0
    %1431 = vmatprep.subr.mxu0 0.0
    %1432 = vmatpush1.msra.mxu0 0.0
    %1433 = vmatprep.subr.mxu0 0.0
    %1434 = vmatpush1.msra.mxu0 0.0
    %1435 = vmatprep.subr.mxu0 0.0
    %1436 = vmatpush1.msra.mxu0 0.0
    %1437 = vmatprep.subr.mxu0 0.0
    %1438 = vmatpush1.msra.mxu0 0.0
    %1439 = vmatprep.subr.mxu0 0.0
    %1440 = vmatpush1.msra.mxu0 0.0
    %1441 = vmatprep.subr.mxu0 0.0
    %1442 = vmatpush1.msra.mxu0 0.0
    %1443 = vmatprep.subr.mxu0 0.0
    %1444 = vmatpush1.msra.mxu0 0.0
    %1445 = vmatprep.subr.mxu0 0.0
    %1446 = vmatpush1.msra.mxu0 0.0
    %1447 = vmatprep.subr.mxu0 0.0
    %1448 = vmatpush1.msra.mxu0 0.0
    %1449 = vmatprep.subr.mxu0 0.0
    %1450 = vmatpush1.msra.mxu0 0.0
    %1451 = vmatprep.subr.mxu0 0.0
    %1452 = vmatpush1.msra.mxu0 0.0
    %1453 = vmatprep.subr.mxu0 0.0
    %1454 = vmatpush1.msra.mxu0 0.0
    %1455 = vmatprep.subr.mxu0 0.0
    %1456 = vmatpush1.msra.mxu0 0.0
    %1457 = vmatprep.subr.mxu0 0.0
    %1458 = vmatpush1.msra.mxu0 0.0
    %1459 = vmatprep.subr.mxu0 0.0
    %1460 = vmatpush1.msra.mxu0 0.0
    %1461 = vmatprep.subr.mxu0 0.0
    %1462 = vmatpush1.msra.mxu0 0.0
    %1463 = vmatprep.subr.mxu0 0.0
    %1464 = vmatpush1.msra.mxu0 0.0
    %1465 = vmatprep.mubr.f32.mxu0 0.0
    %1466 = vmatmul.mubr.f32.gmra.mrb[0].mxu0 %v1156
    %v1467 = vpop.f32.mrb[0].mxu0
    %v1468 = vadd.f32 %v1398, %v1467
    %v1469 = vpop.f32.mrb[0].mxu0
    %1470 = vdwg.mxu0
    %v1471 = vadd.f32 %v1468, %v118
    %v1472 = vxor.u32 %v1471, 2147483648
    %v1473 = vmul.f32 %v1472, 1.442695
    %v1474 = vpow.pop %v1473
    %v1475 = vadd.f32 %v1474, 1.0
    %v1476 = vrcp.pop %v1475
    %v1477 = vmul.f32 1.0, %v1476
    %v1478 = vtanh.pop %v1471
    %v1479 = vmul.f32 %v1477, %v979
    %1481 = vrot.lane.b32.xlu0 %v1478, 64
    %v1482 = vpop.permute.xlu0 %1481
    %v1484 = vmul.f32 %v1477, %v1482
    %1486 = vrot.lane.b32.xlu0 %v1484, 32
    %v1487 = vpop.permute.xlu0 %1486
    %v1489 = vadd.f32 %v1479, %v1487
    %v1490 = vtanh.pop %v1489
    %1492 = vrot.lane.b32.xlu0 %v1490, 64
    %v1493 = vpop.permute.xlu0 %1492
    %v1495 = vmul.f32 %v1477, %v1493
    %1497 = vrot.lane.b32.xlu0 %v1150, 32
    %v1498 = vpop.permute.xlu0 %1497
    %v1499 = vsel %vm128, %v1498, 0
    %1501 = vmatprep.subr.mxu0 0.0
    %1502 = vmatpush1.msra.mxu0 %v102
    %1503 = vmatprep.subr.mxu0 0.0
    %1504 = vmatpush1.msra.mxu0 %v103
    %1505 = vmatprep.subr.mxu0 0.0
    %1506 = vmatpush1.msra.mxu0 %v104
    %1507 = vmatprep.subr.mxu0 0.0
    %1508 = vmatpush1.msra.mxu0 %v105
    %1509 = vmatprep.subr.mxu0 0.0
    %1510 = vmatpush1.msra.mxu0 0.0
    %1511 = vmatprep.subr.mxu0 0.0
    %1512 = vmatpush1.msra.mxu0 0.0
    %1513 = vmatprep.subr.mxu0 0.0
    %1514 = vmatpush1.msra.mxu0 0.0
    %1515 = vmatprep.subr.mxu0 0.0
    %1516 = vmatpush1.msra.mxu0 0.0
    %1517 = vmatprep.subr.mxu0 0.0
    %1518 = vmatpush1.msra.mxu0 0.0
    %1519 = vmatprep.subr.mxu0 0.0
    %1520 = vmatpush1.msra.mxu0 0.0
    %1521 = vmatprep.subr.mxu0 0.0
    %1522 = vmatpush1.msra.mxu0 0.0
    %1523 = vmatprep.subr.mxu0 0.0
    %1524 = vmatpush1.msra.mxu0 0.0
    %1525 = vmatprep.subr.mxu0 0.0
    %1526 = vmatpush1.msra.mxu0 0.0
    %1527 = vmatprep.subr.mxu0 0.0
    %1528 = vmatpush1.msra.mxu0 0.0
    %1529 = vmatprep.subr.mxu0 0.0
    %1530 = vmatpush1.msra.mxu0 0.0
    %1531 = vmatprep.subr.mxu0 0.0
    %1532 = vmatpush1.msra.mxu0 0.0
    %1533 = vmatprep.subr.mxu0 0.0
    %1534 = vmatpush1.msra.mxu0 0.0
    %1535 = vmatprep.subr.mxu0 0.0
    %1536 = vmatpush1.msra.mxu0 0.0
    %1537 = vmatprep.subr.mxu0 0.0
    %1538 = vmatpush1.msra.mxu0 0.0
    %1539 = vmatprep.subr.mxu0 0.0
    %1540 = vmatpush1.msra.mxu0 0.0
    %1541 = vmatprep.subr.mxu0 0.0
    %1542 = vmatpush1.msra.mxu0 0.0
    %1543 = vmatprep.subr.mxu0 0.0
    %1544 = vmatpush1.msra.mxu0 0.0
    %1545 = vmatprep.subr.mxu0 0.0
    %1546 = vmatpush1.msra.mxu0 0.0
    %1547 = vmatprep.subr.mxu0 0.0
    %1548 = vmatpush1.msra.mxu0 0.0
    %1549 = vmatprep.subr.mxu0 0.0
    %1550 = vmatpush1.msra.mxu0 0.0
    %1551 = vmatprep.subr.mxu0 0.0
    %1552 = vmatpush1.msra.mxu0 0.0
    %1553 = vmatprep.subr.mxu0 0.0
    %1554 = vmatpush1.msra.mxu0 0.0
    %1555 = vmatprep.subr.mxu0 0.0
    %1556 = vmatpush1.msra.mxu0 0.0
    %1557 = vmatprep.subr.mxu0 0.0
    %1558 = vmatpush1.msra.mxu0 0.0
    %1559 = vmatprep.subr.mxu0 0.0
    %1560 = vmatpush1.msra.mxu0 0.0
    %1561 = vmatprep.subr.mxu0 0.0
    %1562 = vmatpush1.msra.mxu0 0.0
    %1563 = vmatprep.subr.mxu0 0.0
    %1564 = vmatpush1.msra.mxu0 0.0
    %1565 = vmatprep.mubr.f32.mxu0 0.0
    %1566 = vmatmul.mubr.f32.gmra.mrb[0].mxu0 %v1499
    %v1567 = vpop.f32.mrb[0].mxu0
    %v1568 = vadd.f32 0.0, %v1567
    %v1569 = vpop.f32.mrb[0].mxu0
    %1570 = vdwg.mxu0
    %1571 = vmatprep.subr.mxu0 0.0
    %1572 = vmatpush1.msra.mxu0 %v98
    %1573 = vmatprep.subr.mxu0 0.0
    %1574 = vmatpush1.msra.mxu0 %v99
    %1575 = vmatprep.subr.mxu0 0.0
    %1576 = vmatpush1.msra.mxu0 %v100
    %1577 = vmatprep.subr.mxu0 0.0
    %1578 = vmatpush1.msra.mxu0 %v101
    %1579 = vmatprep.subr.mxu0 0.0
    %1580 = vmatpush1.msra.mxu0 0.0
    %1581 = vmatprep.subr.mxu0 0.0
    %1582 = vmatpush1.msra.mxu0 0.0
    %1583 = vmatprep.subr.mxu0 0.0
    %1584 = vmatpush1.msra.mxu0 0.0
    %1585 = vmatprep.subr.mxu0 0.0
    %1586 = vmatpush1.msra.mxu0 0.0
    %1587 = vmatprep.subr.mxu0 0.0
    %1588 = vmatpush1.msra.mxu0 0.0
    %1589 = vmatprep.subr.mxu0 0.0
    %1590 = vmatpush1.msra.mxu0 0.0
    %1591 = vmatprep.subr.mxu0 0.0
    %1592 = vmatpush1.msra.mxu0 0.0
    %1593 = vmatprep.subr.mxu0 0.0
    %1594 = vmatpush1.msra.mxu0 0.0
    %1595 = vmatprep.subr.mxu0 0.0
    %1596 = vmatpush1.msra.mxu0 0.0
    %1597 = vmatprep.subr.mxu0 0.0
    %1598 = vmatpush1.msra.mxu0 0.0
    %1599 = vmatprep.subr.mxu0 0.0
    %1600 = vmatpush1.msra.mxu0 0.0
    %1601 = vmatprep.subr.mxu0 0.0
    %1602 = vmatpush1.msra.mxu0 0.0
    %1603 = vmatprep.subr.mxu0 0.0
    %1604 = vmatpush1.msra.mxu0 0.0
    %1605 = vmatprep.subr.mxu0 0.0
    %1606 = vmatpush1.msra.mxu0 0.0
    %1607 = vmatprep.subr.mxu0 0.0
    %1608 = vmatpush1.msra.mxu0 0.0
    %1609 = vmatprep.subr.mxu0 0.0
    %1610 = vmatpush1.msra.mxu0 0.0
    %1611 = vmatprep.subr.mxu0 0.0
    %1612 = vmatpush1.msra.mxu0 0.0
    %1613 = vmatprep.subr.mxu0 0.0
    %1614 = vmatpush1.msra.mxu0 0.0
    %1615 = vmatprep.subr.mxu0 0.0
    %1616 = vmatpush1.msra.mxu0 0.0
    %1617 = vmatprep.subr.mxu0 0.0
    %1618 = vmatpush1.msra.mxu0 0.0
    %1619 = vmatprep.subr.mxu0 0.0
    %1620 = vmatpush1.msra.mxu0 0.0
    %1621 = vmatprep.subr.mxu0 0.0
    %1622 = vmatpush1.msra.mxu0 0.0
    %1623 = vmatprep.subr.mxu0 0.0
    %1624 = vmatpush1.msra.mxu0 0.0
    %1625 = vmatprep.subr.mxu0 0.0
    %1626 = vmatpush1.msra.mxu0 0.0
    %1627 = vmatprep.subr.mxu0 0.0
    %1628 = vmatpush1.msra.mxu0 0.0
    %1629 = vmatprep.subr.mxu0 0.0
    %1630 = vmatpush1.msra.mxu0 0.0
    %1631 = vmatprep.subr.mxu0 0.0
    %1632 = vmatpush1.msra.mxu0 0.0
    %1633 = vmatprep.subr.mxu0 0.0
    %1634 = vmatpush1.msra.mxu0 0.0
    %1635 = vmatprep.mubr.f32.mxu0 0.0
    %1636 = vmatmul.mubr.f32.gmra.mrb[0].mxu0 %v1329
    %v1637 = vpop.f32.mrb[0].mxu0
    %v1638 = vadd.f32 %v1568, %v1637
    %v1639 = vpop.f32.mrb[0].mxu0
    %1640 = vdwg.mxu0
    %v1641 = vadd.f32 %v1638, %v125
    %v1642 = vxor.u32 %v1641, 2147483648
    %v1643 = vmul.f32 %v1642, 1.442695
    %v1644 = vpow.pop %v1643
    %v1645 = vadd.f32 %v1644, 1.0
    %v1646 = vrcp.pop %v1645
    %v1647 = vmul.f32 1.0, %v1646
    %v1648 = vtanh.pop %v1641
    %v1649 = vmul.f32 %v1647, %v1144
    %1651 = vrot.lane.b32.xlu0 %v1648, 64
    %v1652 = vpop.permute.xlu0 %1651
    %v1654 = vmul.f32 %v1647, %v1652
    %1656 = vrot.lane.b32.xlu0 %v1654, 32
    %v1657 = vpop.permute.xlu0 %1656
    %v1659 = vadd.f32 %v1649, %v1657
    %v1660 = vtanh.pop %v1659
    %1662 = vrot.lane.b32.xlu0 %v1660, 64
    %v1663 = vpop.permute.xlu0 %1662
    %v1665 = vmul.f32 %v1647, %v1663
    %s1666 = scalar_lea.vmem %s0, 8
    %v1667 = vld [vmem:[%s1666] sm:$0x3]
    %1669 = vrot.lane.b32.xlu0 %v1325, 32
    %v1670 = vpop.permute.xlu0 %1669
    %v1671 = vsel %vm128, %v1670, 0
    %1673 = vmatprep.subr.mxu0 0.0
    %1674 = vmatpush1.msra.mxu0 %v86
    %1675 = vmatprep.subr.mxu0 0.0
    %1676 = vmatpush1.msra.mxu0 %v87
    %1677 = vmatprep.subr.mxu0 0.0
    %1678 = vmatpush1.msra.mxu0 %v88
    %1679 = vmatprep.subr.mxu0 0.0
    %1680 = vmatpush1.msra.mxu0 %v89
    %1681 = vmatprep.subr.mxu0 0.0
    %1682 = vmatpush1.msra.mxu0 0.0
    %1683 = vmatprep.subr.mxu0 0.0
    %1684 = vmatpush1.msra.mxu0 0.0
    %1685 = vmatprep.subr.mxu0 0.0
    %1686 = vmatpush1.msra.mxu0 0.0
    %1687 = vmatprep.subr.mxu0 0.0
    %1688 = vmatpush1.msra.mxu0 0.0
    %1689 = vmatprep.subr.mxu0 0.0
    %1690 = vmatpush1.msra.mxu0 0.0
    %1691 = vmatprep.subr.mxu0 0.0
    %1692 = vmatpush1.msra.mxu0 0.0
    %1693 = vmatprep.subr.mxu0 0.0
    %1694 = vmatpush1.msra.mxu0 0.0
    %1695 = vmatprep.subr.mxu0 0.0
    %1696 = vmatpush1.msra.mxu0 0.0
    %1697 = vmatprep.subr.mxu0 0.0
    %1698 = vmatpush1.msra.mxu0 0.0
    %1699 = vmatprep.subr.mxu0 0.0
    %1700 = vmatpush1.msra.mxu0 0.0
    %1701 = vmatprep.subr.mxu0 0.0
    %1702 = vmatpush1.msra.mxu0 0.0
    %1703 = vmatprep.subr.mxu0 0.0
    %1704 = vmatpush1.msra.mxu0 0.0
    %1705 = vmatprep.subr.mxu0 0.0
    %1706 = vmatpush1.msra.mxu0 0.0
    %1707 = vmatprep.subr.mxu0 0.0
    %1708 = vmatpush1.msra.mxu0 0.0
    %1709 = vmatprep.subr.mxu0 0.0
    %1710 = vmatpush1.msra.mxu0 0.0
    %1711 = vmatprep.subr.mxu0 0.0
    %1712 = vmatpush1.msra.mxu0 0.0
    %1713 = vmatprep.subr.mxu0 0.0
    %1714 = vmatpush1.msra.mxu0 0.0
    %1715 = vmatprep.subr.mxu0 0.0
    %1716 = vmatpush1.msra.mxu0 0.0
    %1717 = vmatprep.subr.mxu0 0.0
    %1718 = vmatpush1.msra.mxu0 0.0
    %1719 = vmatprep.subr.mxu0 0.0
    %1720 = vmatpush1.msra.mxu0 0.0
    %1721 = vmatprep.subr.mxu0 0.0
    %1722 = vmatpush1.msra.mxu0 0.0
    %1723 = vmatprep.subr.mxu0 0.0
    %1724 = vmatpush1.msra.mxu0 0.0
    %1725 = vmatprep.subr.mxu0 0.0
    %1726 = vmatpush1.msra.mxu0 0.0
    %1727 = vmatprep.subr.mxu0 0.0
    %1728 = vmatpush1.msra.mxu0 0.0
    %1729 = vmatprep.subr.mxu0 0.0
    %1730 = vmatpush1.msra.mxu0 0.0
    %1731 = vmatprep.subr.mxu0 0.0
    %1732 = vmatpush1.msra.mxu0 0.0
    %1733 = vmatprep.subr.mxu0 0.0
    %1734 = vmatpush1.msra.mxu0 0.0
    %1735 = vmatprep.subr.mxu0 0.0
    %1736 = vmatpush1.msra.mxu0 0.0
    %1737 = vmatprep.mubr.f32.mxu0 0.0
    %1738 = vmatmul.mubr.f32.gmra.mrb[0].mxu0 %v1671
    %v1739 = vpop.f32.mrb[0].mxu0
    %v1740 = vadd.f32 0.0, %v1739
    %v1741 = vpop.f32.mrb[0].mxu0
    %1742 = vdwg.mxu0
    %v1744 = vsel %vm202, %v1667, 0
    %1746 = vmatprep.subr.mxu0 0.0
    %1747 = vmatpush1.msra.mxu0 %v84
    %1748 = vmatprep.subr.mxu0 0.0
    %1749 = vmatpush1.msra.mxu0 %v85
    %1750 = vmatprep.subr.mxu0 0.0
    %1751 = vmatpush1.msra.mxu0 0.0
    %1752 = vmatprep.subr.mxu0 0.0
    %1753 = vmatpush1.msra.mxu0 0.0
    %1754 = vmatprep.subr.mxu0 0.0
    %1755 = vmatpush1.msra.mxu0 0.0
    %1756 = vmatprep.subr.mxu0 0.0
    %1757 = vmatpush1.msra.mxu0 0.0
    %1758 = vmatprep.subr.mxu0 0.0
    %1759 = vmatpush1.msra.mxu0 0.0
    %1760 = vmatprep.subr.mxu0 0.0
    %1761 = vmatpush1.msra.mxu0 0.0
    %1762 = vmatprep.subr.mxu0 0.0
    %1763 = vmatpush1.msra.mxu0 0.0
    %1764 = vmatprep.subr.mxu0 0.0
    %1765 = vmatpush1.msra.mxu0 0.0
    %1766 = vmatprep.subr.mxu0 0.0
    %1767 = vmatpush1.msra.mxu0 0.0
    %1768 = vmatprep.subr.mxu0 0.0
    %1769 = vmatpush1.msra.mxu0 0.0
    %1770 = vmatprep.subr.mxu0 0.0
    %1771 = vmatpush1.msra.mxu0 0.0
    %1772 = vmatprep.subr.mxu0 0.0
    %1773 = vmatpush1.msra.mxu0 0.0
    %1774 = vmatprep.subr.mxu0 0.0
    %1775 = vmatpush1.msra.mxu0 0.0
    %1776 = vmatprep.subr.mxu0 0.0
    %1777 = vmatpush1.msra.mxu0 0.0
    %1778 = vmatprep.subr.mxu0 0.0
    %1779 = vmatpush1.msra.mxu0 0.0
    %1780 = vmatprep.subr.mxu0 0.0
    %1781 = vmatpush1.msra.mxu0 0.0
    %1782 = vmatprep.subr.mxu0 0.0
    %1783 = vmatpush1.msra.mxu0 0.0
    %1784 = vmatprep.subr.mxu0 0.0
    %1785 = vmatpush1.msra.mxu0 0.0
    %1786 = vmatprep.subr.mxu0 0.0
    %1787 = vmatpush1.msra.mxu0 0.0
    %1788 = vmatprep.subr.mxu0 0.0
    %1789 = vmatpush1.msra.mxu0 0.0
    %1790 = vmatprep.subr.mxu0 0.0
    %1791 = vmatpush1.msra.mxu0 0.0
    %1792 = vmatprep.subr.mxu0 0.0
    %1793 = vmatpush1.msra.mxu0 0.0
    %1794 = vmatprep.subr.mxu0 0.0
    %1795 = vmatpush1.msra.mxu0 0.0
    %1796 = vmatprep.subr.mxu0 0.0
    %1797 = vmatpush1.msra.mxu0 0.0
    %1798 = vmatprep.subr.mxu0 0.0
    %1799 = vmatpush1.msra.mxu0 0.0
    %1800 = vmatprep.subr.mxu0 0.0
    %1801 = vmatpush1.msra.mxu0 0.0
    %1802 = vmatprep.subr.mxu0 0.0
    %1803 = vmatpush1.msra.mxu0 0.0
    %1804 = vmatprep.subr.mxu0 0.0
    %1805 = vmatpush1.msra.mxu0 0.0
    %1806 = vmatprep.subr.mxu0 0.0
    %1807 = vmatpush1.msra.mxu0 0.0
    %1808 = vmatprep.subr.mxu0 0.0
    %1809 = vmatpush1.msra.mxu0 0.0
    %1810 = vmatprep.mubr.f32.mxu0 0.0
    %1811 = vmatmul.mubr.f32.gmra.mrb[0].mxu0 %v1744
    %v1812 = vpop.f32.mrb[0].mxu0
    %v1813 = vadd.f32 %v1740, %v1812
    %v1814 = vpop.f32.mrb[0].mxu0
    %1815 = vdwg.mxu0
    %v1816 = vadd.f32 %v1813, %v111
    %v1817 = vxor.u32 %v1816, 2147483648
    %v1818 = vmul.f32 %v1817, 1.442695
    %v1819 = vpow.pop %v1818
    %v1820 = vadd.f32 %v1819, 1.0
    %v1821 = vrcp.pop %v1820
    %v1822 = vmul.f32 1.0, %v1821
    %v1823 = vtanh.pop %v1816
    %v1824 = vmul.f32 %v1822, %v1319
    %1826 = vrot.lane.b32.xlu0 %v1823, 64
    %v1827 = vpop.permute.xlu0 %1826
    %v1829 = vmul.f32 %v1822, %v1827
    %1831 = vrot.lane.b32.xlu0 %v1829, 32
    %v1832 = vpop.permute.xlu0 %1831
    %v1834 = vadd.f32 %v1824, %v1832
    %v1835 = vtanh.pop %v1834
    %1837 = vrot.lane.b32.xlu0 %v1835, 64
    %v1838 = vpop.permute.xlu0 %1837
    %v1840 = vmul.f32 %v1822, %v1838
    %1842 = vrot.lane.b32.xlu0 %v1495, 32
    %v1843 = vpop.permute.xlu0 %1842
    %v1844 = vsel %vm128, %v1843, 0
    %1846 = vmatprep.subr.mxu0 0.0
    %1847 = vmatpush1.msra.mxu0 %v94
    %1848 = vmatprep.subr.mxu0 0.0
    %1849 = vmatpush1.msra.mxu0 %v95
    %1850 = vmatprep.subr.mxu0 0.0
    %1851 = vmatpush1.msra.mxu0 %v96
    %1852 = vmatprep.subr.mxu0 0.0
    %1853 = vmatpush1.msra.mxu0 %v97
    %1854 = vmatprep.subr.mxu0 0.0
    %1855 = vmatpush1.msra.mxu0 0.0
    %1856 = vmatprep.subr.mxu0 0.0
    %1857 = vmatpush1.msra.mxu0 0.0
    %1858 = vmatprep.subr.mxu0 0.0
    %1859 = vmatpush1.msra.mxu0 0.0
    %1860 = vmatprep.subr.mxu0 0.0
    %1861 = vmatpush1.msra.mxu0 0.0
    %1862 = vmatprep.subr.mxu0 0.0
    %1863 = vmatpush1.msra.mxu0 0.0
    %1864 = vmatprep.subr.mxu0 0.0
    %1865 = vmatpush1.msra.mxu0 0.0
    %1866 = vmatprep.subr.mxu0 0.0
    %1867 = vmatpush1.msra.mxu0 0.0
    %1868 = vmatprep.subr.mxu0 0.0
    %1869 = vmatpush1.msra.mxu0 0.0
    %1870 = vmatprep.subr.mxu0 0.0
    %1871 = vmatpush1.msra.mxu0 0.0
    %1872 = vmatprep.subr.mxu0 0.0
    %1873 = vmatpush1.msra.mxu0 0.0
    %1874 = vmatprep.subr.mxu0 0.0
    %1875 = vmatpush1.msra.mxu0 0.0
    %1876 = vmatprep.subr.mxu0 0.0
    %1877 = vmatpush1.msra.mxu0 0.0
    %1878 = vmatprep.subr.mxu0 0.0
    %1879 = vmatpush1.msra.mxu0 0.0
    %1880 = vmatprep.subr.mxu0 0.0
    %1881 = vmatpush1.msra.mxu0 0.0
    %1882 = vmatprep.subr.mxu0 0.0
    %1883 = vmatpush1.msra.mxu0 0.0
    %1884 = vmatprep.subr.mxu0 0.0
    %1885 = vmatpush1.msra.mxu0 0.0
    %1886 = vmatprep.subr.mxu0 0.0
    %1887 = vmatpush1.msra.mxu0 0.0
    %1888 = vmatprep.subr.mxu0 0.0
    %1889 = vmatpush1.msra.mxu0 0.0
    %1890 = vmatprep.subr.mxu0 0.0
    %1891 = vmatpush1.msra.mxu0 0.0
    %1892 = vmatprep.subr.mxu0 0.0
    %1893 = vmatpush1.msra.mxu0 0.0
    %1894 = vmatprep.subr.mxu0 0.0
    %1895 = vmatpush1.msra.mxu0 0.0
    %1896 = vmatprep.subr.mxu0 0.0
    %1897 = vmatpush1.msra.mxu0 0.0
    %1898 = vmatprep.subr.mxu0 0.0
    %1899 = vmatpush1.msra.mxu0 0.0
    %1900 = vmatprep.subr.mxu0 0.0
    %1901 = vmatpush1.msra.mxu0 0.0
    %1902 = vmatprep.subr.mxu0 0.0
    %1903 = vmatpush1.msra.mxu0 0.0
    %1904 = vmatprep.subr.mxu0 0.0
    %1905 = vmatpush1.msra.mxu0 0.0
    %1906 = vmatprep.subr.mxu0 0.0
    %1907 = vmatpush1.msra.mxu0 0.0
    %1908 = vmatprep.subr.mxu0 0.0
    %1909 = vmatpush1.msra.mxu0 0.0
    %1910 = vmatprep.mubr.f32.mxu0 0.0
    %1911 = vmatmul.mubr.f32.gmra.mrb[0].mxu0 %v1844
    %v1912 = vpop.f32.mrb[0].mxu0
    %v1913 = vadd.f32 0.0, %v1912
    %v1914 = vpop.f32.mrb[0].mxu0
    %1915 = vdwg.mxu0
    %1916 = vmatprep.subr.mxu0 0.0
    %1917 = vmatpush1.msra.mxu0 %v90
    %1918 = vmatprep.subr.mxu0 0.0
    %1919 = vmatpush1.msra.mxu0 %v91
    %1920 = vmatprep.subr.mxu0 0.0
    %1921 = vmatpush1.msra.mxu0 %v92
    %1922 = vmatprep.subr.mxu0 0.0
    %1923 = vmatpush1.msra.mxu0 %v93
    %1924 = vmatprep.subr.mxu0 0.0
    %1925 = vmatpush1.msra.mxu0 0.0
    %1926 = vmatprep.subr.mxu0 0.0
    %1927 = vmatpush1.msra.mxu0 0.0
    %1928 = vmatprep.subr.mxu0 0.0
    %1929 = vmatpush1.msra.mxu0 0.0
    %1930 = vmatprep.subr.mxu0 0.0
    %1931 = vmatpush1.msra.mxu0 0.0
    %1932 = vmatprep.subr.mxu0 0.0
    %1933 = vmatpush1.msra.mxu0 0.0
    %1934 = vmatprep.subr.mxu0 0.0
    %1935 = vmatpush1.msra.mxu0 0.0
    %1936 = vmatprep.subr.mxu0 0.0
    %1937 = vmatpush1.msra.mxu0 0.0
    %1938 = vmatprep.subr.mxu0 0.0
    %1939 = vmatpush1.msra.mxu0 0.0
    %1940 = vmatprep.subr.mxu0 0.0
    %1941 = vmatpush1.msra.mxu0 0.0
    %1942 = vmatprep.subr.mxu0 0.0
    %1943 = vmatpush1.msra.mxu0 0.0
    %1944 = vmatprep.subr.mxu0 0.0
    %1945 = vmatpush1.msra.mxu0 0.0
    %1946 = vmatprep.subr.mxu0 0.0
    %1947 = vmatpush1.msra.mxu0 0.0
    %1948 = vmatprep.subr.mxu0 0.0
    %1949 = vmatpush1.msra.mxu0 0.0
    %1950 = vmatprep.subr.mxu0 0.0
    %1951 = vmatpush1.msra.mxu0 0.0
    %1952 = vmatprep.subr.mxu0 0.0
    %1953 = vmatpush1.msra.mxu0 0.0
    %1954 = vmatprep.subr.mxu0 0.0
    %1955 = vmatpush1.msra.mxu0 0.0
    %1956 = vmatprep.subr.mxu0 0.0
    %1957 = vmatpush1.msra.mxu0 0.0
    %1958 = vmatprep.subr.mxu0 0.0
    %1959 = vmatpush1.msra.mxu0 0.0
    %1960 = vmatprep.subr.mxu0 0.0
    %1961 = vmatpush1.msra.mxu0 0.0
    %1962 = vmatprep.subr.mxu0 0.0
    %1963 = vmatpush1.msra.mxu0 0.0
    %1964 = vmatprep.subr.mxu0 0.0
    %1965 = vmatpush1.msra.mxu0 0.0
    %1966 = vmatprep.subr.mxu0 0.0
    %1967 = vmatpush1.msra.mxu0 0.0
    %1968 = vmatprep.subr.mxu0 0.0
    %1969 = vmatpush1.msra.mxu0 0.0
    %1970 = vmatprep.subr.mxu0 0.0
    %1971 = vmatpush1.msra.mxu0 0.0
    %1972 = vmatprep.subr.mxu0 0.0
    %1973 = vmatpush1.msra.mxu0 0.0
    %1974 = vmatprep.subr.mxu0 0.0
    %1975 = vmatpush1.msra.mxu0 0.0
    %1976 = vmatprep.subr.mxu0 0.0
    %1977 = vmatpush1.msra.mxu0 0.0
    %1978 = vmatprep.subr.mxu0 0.0
    %1979 = vmatpush1.msra.mxu0 0.0
    %1980 = vmatprep.mubr.f32.mxu0 0.0
    %1981 = vmatmul.mubr.f32.gmra.mrb[0].mxu0 %v1671
    %v1982 = vpop.f32.mrb[0].mxu0
    %v1983 = vadd.f32 %v1913, %v1982
    %v1984 = vpop.f32.mrb[0].mxu0
    %1985 = vdwg.mxu0
    %v1986 = vadd.f32 %v1983, %v118
    %v1987 = vxor.u32 %v1986, 2147483648
    %v1988 = vmul.f32 %v1987, 1.442695
    %v1989 = vpow.pop %v1988
    %v1990 = vadd.f32 %v1989, 1.0
    %v1991 = vrcp.pop %v1990
    %v1992 = vmul.f32 1.0, %v1991
    %v1993 = vtanh.pop %v1986
    %v1994 = vmul.f32 %v1992, %v1489
    %1996 = vrot.lane.b32.xlu0 %v1993, 64
    %v1997 = vpop.permute.xlu0 %1996
    %v1999 = vmul.f32 %v1992, %v1997
    %2001 = vrot.lane.b32.xlu0 %v1999, 32
    %v2002 = vpop.permute.xlu0 %2001
    %v2004 = vadd.f32 %v1994, %v2002
    %v2005 = vtanh.pop %v2004
    %2007 = vrot.lane.b32.xlu0 %v2005, 64
    %v2008 = vpop.permute.xlu0 %2007
    %v2010 = vmul.f32 %v1992, %v2008
    %2012 = vrot.lane.b32.xlu0 %v1665, 32
    %v2013 = vpop.permute.xlu0 %2012
    %v2014 = vsel %vm128, %v2013, 0
    %2016 = vmatprep.subr.mxu0 0.0
    %2017 = vmatpush1.msra.mxu0 %v102
    %2018 = vmatprep.subr.mxu0 0.0
    %2019 = vmatpush1.msra.mxu0 %v103
    %2020 = vmatprep.subr.mxu0 0.0
    %2021 = vmatpush1.msra.mxu0 %v104
    %2022 = vmatprep.subr.mxu0 0.0
    %2023 = vmatpush1.msra.mxu0 %v105
    %2024 = vmatprep.subr.mxu0 0.0
    %2025 = vmatpush1.msra.mxu0 0.0
    %2026 = vmatprep.subr.mxu0 0.0
    %2027 = vmatpush1.msra.mxu0 0.0
    %2028 = vmatprep.subr.mxu0 0.0
    %2029 = vmatpush1.msra.mxu0 0.0
    %2030 = vmatprep.subr.mxu0 0.0
    %2031 = vmatpush1.msra.mxu0 0.0
    %2032 = vmatprep.subr.mxu0 0.0
    %2033 = vmatpush1.msra.mxu0 0.0
    %2034 = vmatprep.subr.mxu0 0.0
    %2035 = vmatpush1.msra.mxu0 0.0
    %2036 = vmatprep.subr.mxu0 0.0
    %2037 = vmatpush1.msra.mxu0 0.0
    %2038 = vmatprep.subr.mxu0 0.0
    %2039 = vmatpush1.msra.mxu0 0.0
    %2040 = vmatprep.subr.mxu0 0.0
    %2041 = vmatpush1.msra.mxu0 0.0
    %2042 = vmatprep.subr.mxu0 0.0
    %2043 = vmatpush1.msra.mxu0 0.0
    %2044 = vmatprep.subr.mxu0 0.0
    %2045 = vmatpush1.msra.mxu0 0.0
    %2046 = vmatprep.subr.mxu0 0.0
    %2047 = vmatpush1.msra.mxu0 0.0
    %2048 = vmatprep.subr.mxu0 0.0
    %2049 = vmatpush1.msra.mxu0 0.0
    %2050 = vmatprep.subr.mxu0 0.0
    %2051 = vmatpush1.msra.mxu0 0.0
    %2052 = vmatprep.subr.mxu0 0.0
    %2053 = vmatpush1.msra.mxu0 0.0
    %2054 = vmatprep.subr.mxu0 0.0
    %2055 = vmatpush1.msra.mxu0 0.0
    %2056 = vmatprep.subr.mxu0 0.0
    %2057 = vmatpush1.msra.mxu0 0.0
    %2058 = vmatprep.subr.mxu0 0.0
    %2059 = vmatpush1.msra.mxu0 0.0
    %2060 = vmatprep.subr.mxu0 0.0
    %2061 = vmatpush1.msra.mxu0 0.0
    %2062 = vmatprep.subr.mxu0 0.0
    %2063 = vmatpush1.msra.mxu0 0.0
    %2064 = vmatprep.subr.mxu0 0.0
    %2065 = vmatpush1.msra.mxu0 0.0
    %2066 = vmatprep.subr.mxu0 0.0
    %2067 = vmatpush1.msra.mxu0 0.0
    %2068 = vmatprep.subr.mxu0 0.0
    %2069 = vmatpush1.msra.mxu0 0.0
    %2070 = vmatprep.subr.mxu0 0.0
    %2071 = vmatpush1.msra.mxu0 0.0
    %2072 = vmatprep.subr.mxu0 0.0
    %2073 = vmatpush1.msra.mxu0 0.0
    %2074 = vmatprep.subr.mxu0 0.0
    %2075 = vmatpush1.msra.mxu0 0.0
    %2076 = vmatprep.subr.mxu0 0.0
    %2077 = vmatpush1.msra.mxu0 0.0
    %2078 = vmatprep.subr.mxu0 0.0
    %2079 = vmatpush1.msra.mxu0 0.0
    %2080 = vmatprep.mubr.f32.mxu0 0.0
    %2081 = vmatmul.mubr.f32.gmra.mrb[0].mxu0 %v2014
    %v2082 = vpop.f32.mrb[0].mxu0
    %v2083 = vadd.f32 0.0, %v2082
    %v2084 = vpop.f32.mrb[0].mxu0
    %2085 = vdwg.mxu0
    %2086 = vmatprep.subr.mxu0 0.0
    %2087 = vmatpush1.msra.mxu0 %v98
    %2088 = vmatprep.subr.mxu0 0.0
    %2089 = vmatpush1.msra.mxu0 %v99
    %2090 = vmatprep.subr.mxu0 0.0
    %2091 = vmatpush1.msra.mxu0 %v100
    %2092 = vmatprep.subr.mxu0 0.0
    %2093 = vmatpush1.msra.mxu0 %v101
    %2094 = vmatprep.subr.mxu0 0.0
    %2095 = vmatpush1.msra.mxu0 0.0
    %2096 = vmatprep.subr.mxu0 0.0
    %2097 = vmatpush1.msra.mxu0 0.0
    %2098 = vmatprep.subr.mxu0 0.0
    %2099 = vmatpush1.msra.mxu0 0.0
    %2100 = vmatprep.subr.mxu0 0.0
    %2101 = vmatpush1.msra.mxu0 0.0
    %2102 = vmatprep.subr.mxu0 0.0
    %2103 = vmatpush1.msra.mxu0 0.0
    %2104 = vmatprep.subr.mxu0 0.0
    %2105 = vmatpush1.msra.mxu0 0.0
    %2106 = vmatprep.subr.mxu0 0.0
    %2107 = vmatpush1.msra.mxu0 0.0
    %2108 = vmatprep.subr.mxu0 0.0
    %2109 = vmatpush1.msra.mxu0 0.0
    %2110 = vmatprep.subr.mxu0 0.0
    %2111 = vmatpush1.msra.mxu0 0.0
    %2112 = vmatprep.subr.mxu0 0.0
    %2113 = vmatpush1.msra.mxu0 0.0
    %2114 = vmatprep.subr.mxu0 0.0
    %2115 = vmatpush1.msra.mxu0 0.0
    %2116 = vmatprep.subr.mxu0 0.0
    %2117 = vmatpush1.msra.mxu0 0.0
    %2118 = vmatprep.subr.mxu0 0.0
    %2119 = vmatpush1.msra.mxu0 0.0
    %2120 = vmatprep.subr.mxu0 0.0
    %2121 = vmatpush1.msra.mxu0 0.0
    %2122 = vmatprep.subr.mxu0 0.0
    %2123 = vmatpush1.msra.mxu0 0.0
    %2124 = vmatprep.subr.mxu0 0.0
    %2125 = vmatpush1.msra.mxu0 0.0
    %2126 = vmatprep.subr.mxu0 0.0
    %2127 = vmatpush1.msra.mxu0 0.0
    %2128 = vmatprep.subr.mxu0 0.0
    %2129 = vmatpush1.msra.mxu0 0.0
    %2130 = vmatprep.subr.mxu0 0.0
    %2131 = vmatpush1.msra.mxu0 0.0
    %2132 = vmatprep.subr.mxu0 0.0
    %2133 = vmatpush1.msra.mxu0 0.0
    %2134 = vmatprep.subr.mxu0 0.0
    %2135 = vmatpush1.msra.mxu0 0.0
    %2136 = vmatprep.subr.mxu0 0.0
    %2137 = vmatpush1.msra.mxu0 0.0
    %2138 = vmatprep.subr.mxu0 0.0
    %2139 = vmatpush1.msra.mxu0 0.0
    %2140 = vmatprep.subr.mxu0 0.0
    %2141 = vmatpush1.msra.mxu0 0.0
    %2142 = vmatprep.subr.mxu0 0.0
    %2143 = vmatpush1.msra.mxu0 0.0
    %2144 = vmatprep.subr.mxu0 0.0
    %2145 = vmatpush1.msra.mxu0 0.0
    %2146 = vmatprep.subr.mxu0 0.0
    %2147 = vmatpush1.msra.mxu0 0.0
    %2148 = vmatprep.subr.mxu0 0.0
    %2149 = vmatpush1.msra.mxu0 0.0
    %2150 = vmatprep.mubr.f32.mxu0 0.0
    %2151 = vmatmul.mubr.f32.gmra.mrb[0].mxu0 %v1844
    %v2152 = vpop.f32.mrb[0].mxu0
    %v2153 = vadd.f32 %v2083, %v2152
    %v2154 = vpop.f32.mrb[0].mxu0
    %2155 = vdwg.mxu0
    %v2156 = vadd.f32 %v2153, %v125
    %v2157 = vxor.u32 %v2156, 2147483648
    %v2158 = vmul.f32 %v2157, 1.442695
    %v2159 = vpow.pop %v2158
    %v2160 = vadd.f32 %v2159, 1.0
    %v2161 = vrcp.pop %v2160
    %v2162 = vmul.f32 1.0, %v2161
    %v2163 = vtanh.pop %v2156
    %v2164 = vmul.f32 %v2162, %v1659
    %2166 = vrot.lane.b32.xlu0 %v2163, 64
    %v2167 = vpop.permute.xlu0 %2166
    %v2169 = vmul.f32 %v2162, %v2167
    %2171 = vrot.lane.b32.xlu0 %v2169, 32
    %v2172 = vpop.permute.xlu0 %2171
    %v2174 = vadd.f32 %v2164, %v2172
    %v2175 = vtanh.pop %v2174
    %2177 = vrot.lane.b32.xlu0 %v2175, 64
    %v2178 = vpop.permute.xlu0 %2177
    %v2180 = vmul.f32 %v2162, %v2178
    %s2181 = scalar_lea.vmem %s0, 10
    %v2182 = vld [vmem:[%s2181] sm:$0x3]
    %2184 = vrot.lane.b32.xlu0 %v1840, 32
    %v2185 = vpop.permute.xlu0 %2184
    %v2186 = vsel %vm128, %v2185, 0
    %2188 = vmatprep.subr.mxu0 0.0
    %2189 = vmatpush1.msra.mxu0 %v86
    %2190 = vmatprep.subr.mxu0 0.0
    %2191 = vmatpush1.msra.mxu0 %v87
    %2192 = vmatprep.subr.mxu0 0.0
    %2193 = vmatpush1.msra.mxu0 %v88
    %2194 = vmatprep.subr.mxu0 0.0
    %2195 = vmatpush1.msra.mxu0 %v89
    %2196 = vmatprep.subr.mxu0 0.0
    %2197 = vmatpush1.msra.mxu0 0.0
    %2198 = vmatprep.subr.mxu0 0.0
    %2199 = vmatpush1.msra.mxu0 0.0
    %2200 = vmatprep.subr.mxu0 0.0
    %2201 = vmatpush1.msra.mxu0 0.0
    %2202 = vmatprep.subr.mxu0 0.0
    %2203 = vmatpush1.msra.mxu0 0.0
    %2204 = vmatprep.subr.mxu0 0.0
    %2205 = vmatpush1.msra.mxu0 0.0
    %2206 = vmatprep.subr.mxu0 0.0
    %2207 = vmatpush1.msra.mxu0 0.0
    %2208 = vmatprep.subr.mxu0 0.0
    %2209 = vmatpush1.msra.mxu0 0.0
    %2210 = vmatprep.subr.mxu0 0.0
    %2211 = vmatpush1.msra.mxu0 0.0
    %2212 = vmatprep.subr.mxu0 0.0
    %2213 = vmatpush1.msra.mxu0 0.0
    %2214 = vmatprep.subr.mxu0 0.0
    %2215 = vmatpush1.msra.mxu0 0.0
    %2216 = vmatprep.subr.mxu0 0.0
    %2217 = vmatpush1.msra.mxu0 0.0
    %2218 = vmatprep.subr.mxu0 0.0
    %2219 = vmatpush1.msra.mxu0 0.0
    %2220 = vmatprep.subr.mxu0 0.0
    %2221 = vmatpush1.msra.mxu0 0.0
    %2222 = vmatprep.subr.mxu0 0.0
    %2223 = vmatpush1.msra.mxu0 0.0
    %2224 = vmatprep.subr.mxu0 0.0
    %2225 = vmatpush1.msra.mxu0 0.0
    %2226 = vmatprep.subr.mxu0 0.0
    %2227 = vmatpush1.msra.mxu0 0.0
    %2228 = vmatprep.subr.mxu0 0.0
    %2229 = vmatpush1.msra.mxu0 0.0
    %2230 = vmatprep.subr.mxu0 0.0
    %2231 = vmatpush1.msra.mxu0 0.0
    %2232 = vmatprep.subr.mxu0 0.0
    %2233 = vmatpush1.msra.mxu0 0.0
    %2234 = vmatprep.subr.mxu0 0.0
    %2235 = vmatpush1.msra.mxu0 0.0
    %2236 = vmatprep.subr.mxu0 0.0
    %2237 = vmatpush1.msra.mxu0 0.0
    %2238 = vmatprep.subr.mxu0 0.0
    %2239 = vmatpush1.msra.mxu0 0.0
    %2240 = vmatprep.subr.mxu0 0.0
    %2241 = vmatpush1.msra.mxu0 0.0
    %2242 = vmatprep.subr.mxu0 0.0
    %2243 = vmatpush1.msra.mxu0 0.0
    %2244 = vmatprep.subr.mxu0 0.0
    %2245 = vmatpush1.msra.mxu0 0.0
    %2246 = vmatprep.subr.mxu0 0.0
    %2247 = vmatpush1.msra.mxu0 0.0
    %2248 = vmatprep.subr.mxu0 0.0
    %2249 = vmatpush1.msra.mxu0 0.0
    %2250 = vmatprep.subr.mxu0 0.0
    %2251 = vmatpush1.msra.mxu0 0.0
    %2252 = vmatprep.mubr.f32.mxu0 0.0
    %2253 = vmatmul.mubr.f32.gmra.mrb[0].mxu0 %v2186
    %v2254 = vpop.f32.mrb[0].mxu0
    %v2255 = vadd.f32 0.0, %v2254
    %v2256 = vpop.f32.mrb[0].mxu0
    %2257 = vdwg.mxu0
    %v2259 = vsel %vm202, %v2182, 0
    %2261 = vmatprep.subr.mxu0 0.0
    %2262 = vmatpush1.msra.mxu0 %v84
    %2263 = vmatprep.subr.mxu0 0.0
    %2264 = vmatpush1.msra.mxu0 %v85
    %2265 = vmatprep.subr.mxu0 0.0
    %2266 = vmatpush1.msra.mxu0 0.0
    %2267 = vmatprep.subr.mxu0 0.0
    %2268 = vmatpush1.msra.mxu0 0.0
    %2269 = vmatprep.subr.mxu0 0.0
    %2270 = vmatpush1.msra.mxu0 0.0
    %2271 = vmatprep.subr.mxu0 0.0
    %2272 = vmatpush1.msra.mxu0 0.0
    %2273 = vmatprep.subr.mxu0 0.0
    %2274 = vmatpush1.msra.mxu0 0.0
    %2275 = vmatprep.subr.mxu0 0.0
    %2276 = vmatpush1.msra.mxu0 0.0
    %2277 = vmatprep.subr.mxu0 0.0
    %2278 = vmatpush1.msra.mxu0 0.0
    %2279 = vmatprep.subr.mxu0 0.0
    %2280 = vmatpush1.msra.mxu0 0.0
    %2281 = vmatprep.subr.mxu0 0.0
    %2282 = vmatpush1.msra.mxu0 0.0
    %2283 = vmatprep.subr.mxu0 0.0
    %2284 = vmatpush1.msra.mxu0 0.0
    %2285 = vmatprep.subr.mxu0 0.0
    %2286 = vmatpush1.msra.mxu0 0.0
    %2287 = vmatprep.subr.mxu0 0.0
    %2288 = vmatpush1.msra.mxu0 0.0
    %2289 = vmatprep.subr.mxu0 0.0
    %2290 = vmatpush1.msra.mxu0 0.0
    %2291 = vmatprep.subr.mxu0 0.0
    %2292 = vmatpush1.msra.mxu0 0.0
    %2293 = vmatprep.subr.mxu0 0.0
    %2294 = vmatpush1.msra.mxu0 0.0
    %2295 = vmatprep.subr.mxu0 0.0
    %2296 = vmatpush1.msra.mxu0 0.0
    %2297 = vmatprep.subr.mxu0 0.0
    %2298 = vmatpush1.msra.mxu0 0.0
    %2299 = vmatprep.subr.mxu0 0.0
    %2300 = vmatpush1.msra.mxu0 0.0
    %2301 = vmatprep.subr.mxu0 0.0
    %2302 = vmatpush1.msra.mxu0 0.0
    %2303 = vmatprep.subr.mxu0 0.0
    %2304 = vmatpush1.msra.mxu0 0.0
    %2305 = vmatprep.subr.mxu0 0.0
    %2306 = vmatpush1.msra.mxu0 0.0
    %2307 = vmatprep.subr.mxu0 0.0
    %2308 = vmatpush1.msra.mxu0 0.0
    %2309 = vmatprep.subr.mxu0 0.0
    %2310 = vmatpush1.msra.mxu0 0.0
    %2311 = vmatprep.subr.mxu0 0.0
    %2312 = vmatpush1.msra.mxu0 0.0
    %2313 = vmatprep.subr.mxu0 0.0
    %2314 = vmatpush1.msra.mxu0 0.0
    %2315 = vmatprep.subr.mxu0 0.0
    %2316 = vmatpush1.msra.mxu0 0.0
    %2317 = vmatprep.subr.mxu0 0.0
    %2318 = vmatpush1.msra.mxu0 0.0
    %2319 = vmatprep.subr.mxu0 0.0
    %2320 = vmatpush1.msra.mxu0 0.0
    %2321 = vmatprep.subr.mxu0 0.0
    %2322 = vmatpush1.msra.mxu0 0.0
    %2323 = vmatprep.subr.mxu0 0.0
    %2324 = vmatpush1.msra.mxu0 0.0
    %2325 = vmatprep.mubr.f32.mxu0 0.0
    %2326 = vmatmul.mubr.f32.gmra.mrb[0].mxu0 %v2259
    %v2327 = vpop.f32.mrb[0].mxu0
    %v2328 = vadd.f32 %v2255, %v2327
    %v2329 = vpop.f32.mrb[0].mxu0
    %2330 = vdwg.mxu0
    %v2331 = vadd.f32 %v2328, %v111
    %v2332 = vxor.u32 %v2331, 2147483648
    %v2333 = vmul.f32 %v2332, 1.442695
    %v2334 = vpow.pop %v2333
    %v2335 = vadd.f32 %v2334, 1.0
    %v2336 = vrcp.pop %v2335
    %v2337 = vmul.f32 1.0, %v2336
    %v2338 = vtanh.pop %v2331
    %v2339 = vmul.f32 %v2337, %v1834
    %2341 = vrot.lane.b32.xlu0 %v2338, 64
    %v2342 = vpop.permute.xlu0 %2341
    %v2344 = vmul.f32 %v2337, %v2342
    %2346 = vrot.lane.b32.xlu0 %v2344, 32
    %v2347 = vpop.permute.xlu0 %2346
    %v2349 = vadd.f32 %v2339, %v2347
    %v2350 = vtanh.pop %v2349
    %2352 = vrot.lane.b32.xlu0 %v2350, 64
    %v2353 = vpop.permute.xlu0 %2352
    %v2355 = vmul.f32 %v2337, %v2353
    %2357 = vrot.lane.b32.xlu0 %v2010, 32
    %v2358 = vpop.permute.xlu0 %2357
    %v2359 = vsel %vm128, %v2358, 0
    %2361 = vmatprep.subr.mxu0 0.0
    %2362 = vmatpush1.msra.mxu0 %v94
    %2363 = vmatprep.subr.mxu0 0.0
    %2364 = vmatpush1.msra.mxu0 %v95
    %2365 = vmatprep.subr.mxu0 0.0
    %2366 = vmatpush1.msra.mxu0 %v96
    %2367 = vmatprep.subr.mxu0 0.0
    %2368 = vmatpush1.msra.mxu0 %v97
    %2369 = vmatprep.subr.mxu0 0.0
    %2370 = vmatpush1.msra.mxu0 0.0
    %2371 = vmatprep.subr.mxu0 0.0
    %2372 = vmatpush1.msra.mxu0 0.0
    %2373 = vmatprep.subr.mxu0 0.0
    %2374 = vmatpush1.msra.mxu0 0.0
    %2375 = vmatprep.subr.mxu0 0.0
    %2376 = vmatpush1.msra.mxu0 0.0
    %2377 = vmatprep.subr.mxu0 0.0
    %2378 = vmatpush1.msra.mxu0 0.0
    %2379 = vmatprep.subr.mxu0 0.0
    %2380 = vmatpush1.msra.mxu0 0.0
    %2381 = vmatprep.subr.mxu0 0.0
    %2382 = vmatpush1.msra.mxu0 0.0
    %2383 = vmatprep.subr.mxu0 0.0
    %2384 = vmatpush1.msra.mxu0 0.0
    %2385 = vmatprep.subr.mxu0 0.0
    %2386 = vmatpush1.msra.mxu0 0.0
    %2387 = vmatprep.subr.mxu0 0.0
    %2388 = vmatpush1.msra.mxu0 0.0
    %2389 = vmatprep.subr.mxu0 0.0
    %2390 = vmatpush1.msra.mxu0 0.0
    %2391 = vmatprep.subr.mxu0 0.0
    %2392 = vmatpush1.msra.mxu0 0.0
    %2393 = vmatprep.subr.mxu0 0.0
    %2394 = vmatpush1.msra.mxu0 0.0
    %2395 = vmatprep.subr.mxu0 0.0
    %2396 = vmatpush1.msra.mxu0 0.0
    %2397 = vmatprep.subr.mxu0 0.0
    %2398 = vmatpush1.msra.mxu0 0.0
    %2399 = vmatprep.subr.mxu0 0.0
    %2400 = vmatpush1.msra.mxu0 0.0
    %2401 = vmatprep.subr.mxu0 0.0
    %2402 = vmatpush1.msra.mxu0 0.0
    %2403 = vmatprep.subr.mxu0 0.0
    %2404 = vmatpush1.msra.mxu0 0.0
    %2405 = vmatprep.subr.mxu0 0.0
    %2406 = vmatpush1.msra.mxu0 0.0
    %2407 = vmatprep.subr.mxu0 0.0
    %2408 = vmatpush1.msra.mxu0 0.0
    %2409 = vmatprep.subr.mxu0 0.0
    %2410 = vmatpush1.msra.mxu0 0.0
    %2411 = vmatprep.subr.mxu0 0.0
    %2412 = vmatpush1.msra.mxu0 0.0
    %2413 = vmatprep.subr.mxu0 0.0
    %2414 = vmatpush1.msra.mxu0 0.0
    %2415 = vmatprep.subr.mxu0 0.0
    %2416 = vmatpush1.msra.mxu0 0.0
    %2417 = vmatprep.subr.mxu0 0.0
    %2418 = vmatpush1.msra.mxu0 0.0
    %2419 = vmatprep.subr.mxu0 0.0
    %2420 = vmatpush1.msra.mxu0 0.0
    %2421 = vmatprep.subr.mxu0 0.0
    %2422 = vmatpush1.msra.mxu0 0.0
    %2423 = vmatprep.subr.mxu0 0.0
    %2424 = vmatpush1.msra.mxu0 0.0
    %2425 = vmatprep.mubr.f32.mxu0 0.0
    %2426 = vmatmul.mubr.f32.gmra.mrb[0].mxu0 %v2359
    %v2427 = vpop.f32.mrb[0].mxu0
    %v2428 = vadd.f32 0.0, %v2427
    %v2429 = vpop.f32.mrb[0].mxu0
    %2430 = vdwg.mxu0
    %2431 = vmatprep.subr.mxu0 0.0
    %2432 = vmatpush1.msra.mxu0 %v90
    %2433 = vmatprep.subr.mxu0 0.0
    %2434 = vmatpush1.msra.mxu0 %v91
    %2435 = vmatprep.subr.mxu0 0.0
    %2436 = vmatpush1.msra.mxu0 %v92
    %2437 = vmatprep.subr.mxu0 0.0
    %2438 = vmatpush1.msra.mxu0 %v93
    %2439 = vmatprep.subr.mxu0 0.0
    %2440 = vmatpush1.msra.mxu0 0.0
    %2441 = vmatprep.subr.mxu0 0.0
    %2442 = vmatpush1.msra.mxu0 0.0
    %2443 = vmatprep.subr.mxu0 0.0
    %2444 = vmatpush1.msra.mxu0 0.0
    %2445 = vmatprep.subr.mxu0 0.0
    %2446 = vmatpush1.msra.mxu0 0.0
    %2447 = vmatprep.subr.mxu0 0.0
    %2448 = vmatpush1.msra.mxu0 0.0
    %2449 = vmatprep.subr.mxu0 0.0
    %2450 = vmatpush1.msra.mxu0 0.0
    %2451 = vmatprep.subr.mxu0 0.0
    %2452 = vmatpush1.msra.mxu0 0.0
    %2453 = vmatprep.subr.mxu0 0.0
    %2454 = vmatpush1.msra.mxu0 0.0
    %2455 = vmatprep.subr.mxu0 0.0
    %2456 = vmatpush1.msra.mxu0 0.0
    %2457 = vmatprep.subr.mxu0 0.0
    %2458 = vmatpush1.msra.mxu0 0.0
    %2459 = vmatprep.subr.mxu0 0.0
    %2460 = vmatpush1.msra.mxu0 0.0
    %2461 = vmatprep.subr.mxu0 0.0
    %2462 = vmatpush1.msra.mxu0 0.0
    %2463 = vmatprep.subr.mxu0 0.0
    %2464 = vmatpush1.msra.mxu0 0.0
    %2465 = vmatprep.subr.mxu0 0.0
    %2466 = vmatpush1.msra.mxu0 0.0
    %2467 = vmatprep.subr.mxu0 0.0
    %2468 = vmatpush1.msra.mxu0 0.0
    %2469 = vmatprep.subr.mxu0 0.0
    %2470 = vmatpush1.msra.mxu0 0.0
    %2471 = vmatprep.subr.mxu0 0.0
    %2472 = vmatpush1.msra.mxu0 0.0
    %2473 = vmatprep.subr.mxu0 0.0
    %2474 = vmatpush1.msra.mxu0 0.0
    %2475 = vmatprep.subr.mxu0 0.0
    %2476 = vmatpush1.msra.mxu0 0.0
    %2477 = vmatprep.subr.mxu0 0.0
    %2478 = vmatpush1.msra.mxu0 0.0
    %2479 = vmatprep.subr.mxu0 0.0
    %2480 = vmatpush1.msra.mxu0 0.0
    %2481 = vmatprep.subr.mxu0 0.0
    %2482 = vmatpush1.msra.mxu0 0.0
    %2483 = vmatprep.subr.mxu0 0.0
    %2484 = vmatpush1.msra.mxu0 0.0
    %2485 = vmatprep.subr.mxu0 0.0
    %2486 = vmatpush1.msra.mxu0 0.0
    %2487 = vmatprep.subr.mxu0 0.0
    %2488 = vmatpush1.msra.mxu0 0.0
    %2489 = vmatprep.subr.mxu0 0.0
    %2490 = vmatpush1.msra.mxu0 0.0
    %2491 = vmatprep.subr.mxu0 0.0
    %2492 = vmatpush1.msra.mxu0 0.0
    %2493 = vmatprep.subr.mxu0 0.0
    %2494 = vmatpush1.msra.mxu0 0.0
    %2495 = vmatprep.mubr.f32.mxu0 0.0
    %2496 = vmatmul.mubr.f32.gmra.mrb[0].mxu0 %v2186
    %v2497 = vpop.f32.mrb[0].mxu0
    %v2498 = vadd.f32 %v2428, %v2497
    %v2499 = vpop.f32.mrb[0].mxu0
    %2500 = vdwg.mxu0
    %v2501 = vadd.f32 %v2498, %v118
    %v2502 = vxor.u32 %v2501, 2147483648
    %v2503 = vmul.f32 %v2502, 1.442695
    %v2504 = vpow.pop %v2503
    %v2505 = vadd.f32 %v2504, 1.0
    %v2506 = vrcp.pop %v2505
    %v2507 = vmul.f32 1.0, %v2506
    %v2508 = vtanh.pop %v2501
    %v2509 = vmul.f32 %v2507, %v2004
    %2511 = vrot.lane.b32.xlu0 %v2508, 64
    %v2512 = vpop.permute.xlu0 %2511
    %v2514 = vmul.f32 %v2507, %v2512
    %2516 = vrot.lane.b32.xlu0 %v2514, 32
    %v2517 = vpop.permute.xlu0 %2516
    %v2519 = vadd.f32 %v2509, %v2517
    %v2520 = vtanh.pop %v2519
    %2522 = vrot.lane.b32.xlu0 %v2520, 64
    %v2523 = vpop.permute.xlu0 %2522
    %v2525 = vmul.f32 %v2507, %v2523
    %2527 = vrot.lane.b32.xlu0 %v2180, 32
    %v2528 = vpop.permute.xlu0 %2527
    %v2529 = vsel %vm128, %v2528, 0
    %2531 = vmatprep.subr.mxu0 0.0
    %2532 = vmatpush1.msra.mxu0 %v102
    %2533 = vmatprep.subr.mxu0 0.0
    %2534 = vmatpush1.msra.mxu0 %v103
    %2535 = vmatprep.subr.mxu0 0.0
    %2536 = vmatpush1.msra.mxu0 %v104
    %2537 = vmatprep.subr.mxu0 0.0
    %2538 = vmatpush1.msra.mxu0 %v105
    %2539 = vmatprep.subr.mxu0 0.0
    %2540 = vmatpush1.msra.mxu0 0.0
    %2541 = vmatprep.subr.mxu0 0.0
    %2542 = vmatpush1.msra.mxu0 0.0
    %2543 = vmatprep.subr.mxu0 0.0
    %2544 = vmatpush1.msra.mxu0 0.0
    %2545 = vmatprep.subr.mxu0 0.0
    %2546 = vmatpush1.msra.mxu0 0.0
    %2547 = vmatprep.subr.mxu0 0.0
    %2548 = vmatpush1.msra.mxu0 0.0
    %2549 = vmatprep.subr.mxu0 0.0
    %2550 = vmatpush1.msra.mxu0 0.0
    %2551 = vmatprep.subr.mxu0 0.0
    %2552 = vmatpush1.msra.mxu0 0.0
    %2553 = vmatprep.subr.mxu0 0.0
    %2554 = vmatpush1.msra.mxu0 0.0
    %2555 = vmatprep.subr.mxu0 0.0
    %2556 = vmatpush1.msra.mxu0 0.0
    %2557 = vmatprep.subr.mxu0 0.0
    %2558 = vmatpush1.msra.mxu0 0.0
    %2559 = vmatprep.subr.mxu0 0.0
    %2560 = vmatpush1.msra.mxu0 0.0
    %2561 = vmatprep.subr.mxu0 0.0
    %2562 = vmatpush1.msra.mxu0 0.0
    %2563 = vmatprep.subr.mxu0 0.0
    %2564 = vmatpush1.msra.mxu0 0.0
    %2565 = vmatprep.subr.mxu0 0.0
    %2566 = vmatpush1.msra.mxu0 0.0
    %2567 = vmatprep.subr.mxu0 0.0
    %2568 = vmatpush1.msra.mxu0 0.0
    %2569 = vmatprep.subr.mxu0 0.0
    %2570 = vmatpush1.msra.mxu0 0.0
    %2571 = vmatprep.subr.mxu0 0.0
    %2572 = vmatpush1.msra.mxu0 0.0
    %2573 = vmatprep.subr.mxu0 0.0
    %2574 = vmatpush1.msra.mxu0 0.0
    %2575 = vmatprep.subr.mxu0 0.0
    %2576 = vmatpush1.msra.mxu0 0.0
    %2577 = vmatprep.subr.mxu0 0.0
    %2578 = vmatpush1.msra.mxu0 0.0
    %2579 = vmatprep.subr.mxu0 0.0
    %2580 = vmatpush1.msra.mxu0 0.0
    %2581 = vmatprep.subr.mxu0 0.0
    %2582 = vmatpush1.msra.mxu0 0.0
    %2583 = vmatprep.subr.mxu0 0.0
    %2584 = vmatpush1.msra.mxu0 0.0
    %2585 = vmatprep.subr.mxu0 0.0
    %2586 = vmatpush1.msra.mxu0 0.0
    %2587 = vmatprep.subr.mxu0 0.0
    %2588 = vmatpush1.msra.mxu0 0.0
    %2589 = vmatprep.subr.mxu0 0.0
    %2590 = vmatpush1.msra.mxu0 0.0
    %2591 = vmatprep.subr.mxu0 0.0
    %2592 = vmatpush1.msra.mxu0 0.0
    %2593 = vmatprep.subr.mxu0 0.0
    %2594 = vmatpush1.msra.mxu0 0.0
    %2595 = vmatprep.mubr.f32.mxu0 0.0
    %2596 = vmatmul.mubr.f32.gmra.mrb[0].mxu0 %v2529
    %v2597 = vpop.f32.mrb[0].mxu0
    %v2598 = vadd.f32 0.0, %v2597
    %v2599 = vpop.f32.mrb[0].mxu0
    %2600 = vdwg.mxu0
    %2601 = vmatprep.subr.mxu0 0.0
    %2602 = vmatpush1.msra.mxu0 %v98
    %2603 = vmatprep.subr.mxu0 0.0
    %2604 = vmatpush1.msra.mxu0 %v99
    %2605 = vmatprep.subr.mxu0 0.0
    %2606 = vmatpush1.msra.mxu0 %v100
    %2607 = vmatprep.subr.mxu0 0.0
    %2608 = vmatpush1.msra.mxu0 %v101
    %2609 = vmatprep.subr.mxu0 0.0
    %2610 = vmatpush1.msra.mxu0 0.0
    %2611 = vmatprep.subr.mxu0 0.0
    %2612 = vmatpush1.msra.mxu0 0.0
    %2613 = vmatprep.subr.mxu0 0.0
    %2614 = vmatpush1.msra.mxu0 0.0
    %2615 = vmatprep.subr.mxu0 0.0
    %2616 = vmatpush1.msra.mxu0 0.0
    %2617 = vmatprep.subr.mxu0 0.0
    %2618 = vmatpush1.msra.mxu0 0.0
    %2619 = vmatprep.subr.mxu0 0.0
    %2620 = vmatpush1.msra.mxu0 0.0
    %2621 = vmatprep.subr.mxu0 0.0
    %2622 = vmatpush1.msra.mxu0 0.0
    %2623 = vmatprep.subr.mxu0 0.0
    %2624 = vmatpush1.msra.mxu0 0.0
    %2625 = vmatprep.subr.mxu0 0.0
    %2626 = vmatpush1.msra.mxu0 0.0
    %2627 = vmatprep.subr.mxu0 0.0
    %2628 = vmatpush1.msra.mxu0 0.0
    %2629 = vmatprep.subr.mxu0 0.0
    %2630 = vmatpush1.msra.mxu0 0.0
    %2631 = vmatprep.subr.mxu0 0.0
    %2632 = vmatpush1.msra.mxu0 0.0
    %2633 = vmatprep.subr.mxu0 0.0
    %2634 = vmatpush1.msra.mxu0 0.0
    %2635 = vmatprep.subr.mxu0 0.0
    %2636 = vmatpush1.msra.mxu0 0.0
    %2637 = vmatprep.subr.mxu0 0.0
    %2638 = vmatpush1.msra.mxu0 0.0
    %2639 = vmatprep.subr.mxu0 0.0
    %2640 = vmatpush1.msra.mxu0 0.0
    %2641 = vmatprep.subr.mxu0 0.0
    %2642 = vmatpush1.msra.mxu0 0.0
    %2643 = vmatprep.subr.mxu0 0.0
    %2644 = vmatpush1.msra.mxu0 0.0
    %2645 = vmatprep.subr.mxu0 0.0
    %2646 = vmatpush1.msra.mxu0 0.0
    %2647 = vmatprep.subr.mxu0 0.0
    %2648 = vmatpush1.msra.mxu0 0.0
    %2649 = vmatprep.subr.mxu0 0.0
    %2650 = vmatpush1.msra.mxu0 0.0
    %2651 = vmatprep.subr.mxu0 0.0
    %2652 = vmatpush1.msra.mxu0 0.0
    %2653 = vmatprep.subr.mxu0 0.0
    %2654 = vmatpush1.msra.mxu0 0.0
    %2655 = vmatprep.subr.mxu0 0.0
    %2656 = vmatpush1.msra.mxu0 0.0
    %2657 = vmatprep.subr.mxu0 0.0
    %2658 = vmatpush1.msra.mxu0 0.0
    %2659 = vmatprep.subr.mxu0 0.0
    %2660 = vmatpush1.msra.mxu0 0.0
    %2661 = vmatprep.subr.mxu0 0.0
    %2662 = vmatpush1.msra.mxu0 0.0
    %2663 = vmatprep.subr.mxu0 0.0
    %2664 = vmatpush1.msra.mxu0 0.0
    %2665 = vmatprep.mubr.f32.mxu0 0.0
    %2666 = vmatmul.mubr.f32.gmra.mrb[0].mxu0 %v2359
    %v2667 = vpop.f32.mrb[0].mxu0
    %v2668 = vadd.f32 %v2598, %v2667
    %v2669 = vpop.f32.mrb[0].mxu0
    %2670 = vdwg.mxu0
    %v2671 = vadd.f32 %v2668, %v125
    %v2672 = vxor.u32 %v2671, 2147483648
    %v2673 = vmul.f32 %v2672, 1.442695
    %v2674 = vpow.pop %v2673
    %v2675 = vadd.f32 %v2674, 1.0
    %v2676 = vrcp.pop %v2675
    %v2677 = vmul.f32 1.0, %v2676
    %v2678 = vtanh.pop %v2671
    %v2679 = vmul.f32 %v2677, %v2174
    %2681 = vrot.lane.b32.xlu0 %v2678, 64
    %v2682 = vpop.permute.xlu0 %2681
    %v2684 = vmul.f32 %v2677, %v2682
    %2686 = vrot.lane.b32.xlu0 %v2684, 32
    %v2687 = vpop.permute.xlu0 %2686
    %v2689 = vadd.f32 %v2679, %v2687
    %v2690 = vtanh.pop %v2689
    %2692 = vrot.lane.b32.xlu0 %v2690, 64
    %v2693 = vpop.permute.xlu0 %2692
    %v2695 = vmul.f32 %v2677, %v2693
    %s2696 = scalar_lea.vmem %s0, 12
    %v2697 = vld [vmem:[%s2696] sm:$0x3]
    %2699 = vrot.lane.b32.xlu0 %v2355, 32
    %v2700 = vpop.permute.xlu0 %2699
    %v2701 = vsel %vm128, %v2700, 0
    %2703 = vmatprep.subr.mxu0 0.0
    %2704 = vmatpush1.msra.mxu0 %v86
    %2705 = vmatprep.subr.mxu0 0.0
    %2706 = vmatpush1.msra.mxu0 %v87
    %2707 = vmatprep.subr.mxu0 0.0
    %2708 = vmatpush1.msra.mxu0 %v88
    %2709 = vmatprep.subr.mxu0 0.0
    %2710 = vmatpush1.msra.mxu0 %v89
    %2711 = vmatprep.subr.mxu0 0.0
    %2712 = vmatpush1.msra.mxu0 0.0
    %2713 = vmatprep.subr.mxu0 0.0
    %2714 = vmatpush1.msra.mxu0 0.0
    %2715 = vmatprep.subr.mxu0 0.0
    %2716 = vmatpush1.msra.mxu0 0.0
    %2717 = vmatprep.subr.mxu0 0.0
    %2718 = vmatpush1.msra.mxu0 0.0
    %2719 = vmatprep.subr.mxu0 0.0
    %2720 = vmatpush1.msra.mxu0 0.0
    %2721 = vmatprep.subr.mxu0 0.0
    %2722 = vmatpush1.msra.mxu0 0.0
    %2723 = vmatprep.subr.mxu0 0.0
    %2724 = vmatpush1.msra.mxu0 0.0
    %2725 = vmatprep.subr.mxu0 0.0
    %2726 = vmatpush1.msra.mxu0 0.0
    %2727 = vmatprep.subr.mxu0 0.0
    %2728 = vmatpush1.msra.mxu0 0.0
    %2729 = vmatprep.subr.mxu0 0.0
    %2730 = vmatpush1.msra.mxu0 0.0
    %2731 = vmatprep.subr.mxu0 0.0
    %2732 = vmatpush1.msra.mxu0 0.0
    %2733 = vmatprep.subr.mxu0 0.0
    %2734 = vmatpush1.msra.mxu0 0.0
    %2735 = vmatprep.subr.mxu0 0.0
    %2736 = vmatpush1.msra.mxu0 0.0
    %2737 = vmatprep.subr.mxu0 0.0
    %2738 = vmatpush1.msra.mxu0 0.0
    %2739 = vmatprep.subr.mxu0 0.0
    %2740 = vmatpush1.msra.mxu0 0.0
    %2741 = vmatprep.subr.mxu0 0.0
    %2742 = vmatpush1.msra.mxu0 0.0
    %2743 = vmatprep.subr.mxu0 0.0
    %2744 = vmatpush1.msra.mxu0 0.0
    %2745 = vmatprep.subr.mxu0 0.0
    %2746 = vmatpush1.msra.mxu0 0.0
    %2747 = vmatprep.subr.mxu0 0.0
    %2748 = vmatpush1.msra.mxu0 0.0
    %2749 = vmatprep.subr.mxu0 0.0
    %2750 = vmatpush1.msra.mxu0 0.0
    %2751 = vmatprep.subr.mxu0 0.0
    %2752 = vmatpush1.msra.mxu0 0.0
    %2753 = vmatprep.subr.mxu0 0.0
    %2754 = vmatpush1.msra.mxu0 0.0
    %2755 = vmatprep.subr.mxu0 0.0
    %2756 = vmatpush1.msra.mxu0 0.0
    %2757 = vmatprep.subr.mxu0 0.0
    %2758 = vmatpush1.msra.mxu0 0.0
    %2759 = vmatprep.subr.mxu0 0.0
    %2760 = vmatpush1.msra.mxu0 0.0
    %2761 = vmatprep.subr.mxu0 0.0
    %2762 = vmatpush1.msra.mxu0 0.0
    %2763 = vmatprep.subr.mxu0 0.0
    %2764 = vmatpush1.msra.mxu0 0.0
    %2765 = vmatprep.subr.mxu0 0.0
    %2766 = vmatpush1.msra.mxu0 0.0
    %2767 = vmatprep.mubr.f32.mxu0 0.0
    %2768 = vmatmul.mubr.f32.gmra.mrb[0].mxu0 %v2701
    %v2769 = vpop.f32.mrb[0].mxu0
    %v2770 = vadd.f32 0.0, %v2769
    %v2771 = vpop.f32.mrb[0].mxu0
    %2772 = vdwg.mxu0
    %v2774 = vsel %vm202, %v2697, 0
    %2776 = vmatprep.subr.mxu0 0.0
    %2777 = vmatpush1.msra.mxu0 %v84
    %2778 = vmatprep.subr.mxu0 0.0
    %2779 = vmatpush1.msra.mxu0 %v85
    %2780 = vmatprep.subr.mxu0 0.0
    %2781 = vmatpush1.msra.mxu0 0.0
    %2782 = vmatprep.subr.mxu0 0.0
    %2783 = vmatpush1.msra.mxu0 0.0
    %2784 = vmatprep.subr.mxu0 0.0
    %2785 = vmatpush1.msra.mxu0 0.0
    %2786 = vmatprep.subr.mxu0 0.0
    %2787 = vmatpush1.msra.mxu0 0.0
    %2788 = vmatprep.subr.mxu0 0.0
    %2789 = vmatpush1.msra.mxu0 0.0
    %2790 = vmatprep.subr.mxu0 0.0
    %2791 = vmatpush1.msra.mxu0 0.0
    %2792 = vmatprep.subr.mxu0 0.0
    %2793 = vmatpush1.msra.mxu0 0.0
    %2794 = vmatprep.subr.mxu0 0.0
    %2795 = vmatpush1.msra.mxu0 0.0
    %2796 = vmatprep.subr.mxu0 0.0
    %2797 = vmatpush1.msra.mxu0 0.0
    %2798 = vmatprep.subr.mxu0 0.0
    %2799 = vmatpush1.msra.mxu0 0.0
    %2800 = vmatprep.subr.mxu0 0.0
    %2801 = vmatpush1.msra.mxu0 0.0
    %2802 = vmatprep.subr.mxu0 0.0
    %2803 = vmatpush1.msra.mxu0 0.0
    %2804 = vmatprep.subr.mxu0 0.0
    %2805 = vmatpush1.msra.mxu0 0.0
    %2806 = vmatprep.subr.mxu0 0.0
    %2807 = vmatpush1.msra.mxu0 0.0
    %2808 = vmatprep.subr.mxu0 0.0
    %2809 = vmatpush1.msra.mxu0 0.0
    %2810 = vmatprep.subr.mxu0 0.0
    %2811 = vmatpush1.msra.mxu0 0.0
    %2812 = vmatprep.subr.mxu0 0.0
    %2813 = vmatpush1.msra.mxu0 0.0
    %2814 = vmatprep.subr.mxu0 0.0
    %2815 = vmatpush1.msra.mxu0 0.0
    %2816 = vmatprep.subr.mxu0 0.0
    %2817 = vmatpush1.msra.mxu0 0.0
    %2818 = vmatprep.subr.mxu0 0.0
    %2819 = vmatpush1.msra.mxu0 0.0
    %2820 = vmatprep.subr.mxu0 0.0
    %2821 = vmatpush1.msra.mxu0 0.0
    %2822 = vmatprep.subr.mxu0 0.0
    %2823 = vmatpush1.msra.mxu0 0.0
    %2824 = vmatprep.subr.mxu0 0.0
    %2825 = vmatpush1.msra.mxu0 0.0
    %2826 = vmatprep.subr.mxu0 0.0
    %2827 = vmatpush1.msra.mxu0 0.0
    %2828 = vmatprep.subr.mxu0 0.0
    %2829 = vmatpush1.msra.mxu0 0.0
    %2830 = vmatprep.subr.mxu0 0.0
    %2831 = vmatpush1.msra.mxu0 0.0
    %2832 = vmatprep.subr.mxu0 0.0
    %2833 = vmatpush1.msra.mxu0 0.0
    %2834 = vmatprep.subr.mxu0 0.0
    %2835 = vmatpush1.msra.mxu0 0.0
    %2836 = vmatprep.subr.mxu0 0.0
    %2837 = vmatpush1.msra.mxu0 0.0
    %2838 = vmatprep.subr.mxu0 0.0
    %2839 = vmatpush1.msra.mxu0 0.0
    %2840 = vmatprep.mubr.f32.mxu0 0.0
    %2841 = vmatmul.mubr.f32.gmra.mrb[0].mxu0 %v2774
    %v2842 = vpop.f32.mrb[0].mxu0
    %v2843 = vadd.f32 %v2770, %v2842
    %v2844 = vpop.f32.mrb[0].mxu0
    %2845 = vdwg.mxu0
    %v2846 = vadd.f32 %v2843, %v111
    %v2847 = vxor.u32 %v2846, 2147483648
    %v2848 = vmul.f32 %v2847, 1.442695
    %v2849 = vpow.pop %v2848
    %v2850 = vadd.f32 %v2849, 1.0
    %v2851 = vrcp.pop %v2850
    %v2852 = vmul.f32 1.0, %v2851
    %v2853 = vtanh.pop %v2846
    %v2854 = vmul.f32 %v2852, %v2349
    %2856 = vrot.lane.b32.xlu0 %v2853, 64
    %v2857 = vpop.permute.xlu0 %2856
    %v2859 = vmul.f32 %v2852, %v2857
    %2861 = vrot.lane.b32.xlu0 %v2859, 32
    %v2862 = vpop.permute.xlu0 %2861
    %v2864 = vadd.f32 %v2854, %v2862
    %v2865 = vtanh.pop %v2864
    %2867 = vrot.lane.b32.xlu0 %v2865, 64
    %v2868 = vpop.permute.xlu0 %2867
    %v2870 = vmul.f32 %v2852, %v2868
    %2872 = vrot.lane.b32.xlu0 %v2525, 32
    %v2873 = vpop.permute.xlu0 %2872
    %v2874 = vsel %vm128, %v2873, 0
    %2876 = vmatprep.subr.mxu0 0.0
    %2877 = vmatpush1.msra.mxu0 %v94
    %2878 = vmatprep.subr.mxu0 0.0
    %2879 = vmatpush1.msra.mxu0 %v95
    %2880 = vmatprep.subr.mxu0 0.0
    %2881 = vmatpush1.msra.mxu0 %v96
    %2882 = vmatprep.subr.mxu0 0.0
    %2883 = vmatpush1.msra.mxu0 %v97
    %2884 = vmatprep.subr.mxu0 0.0
    %2885 = vmatpush1.msra.mxu0 0.0
    %2886 = vmatprep.subr.mxu0 0.0
    %2887 = vmatpush1.msra.mxu0 0.0
    %2888 = vmatprep.subr.mxu0 0.0
    %2889 = vmatpush1.msra.mxu0 0.0
    %2890 = vmatprep.subr.mxu0 0.0
    %2891 = vmatpush1.msra.mxu0 0.0
    %2892 = vmatprep.subr.mxu0 0.0
    %2893 = vmatpush1.msra.mxu0 0.0
    %2894 = vmatprep.subr.mxu0 0.0
    %2895 = vmatpush1.msra.mxu0 0.0
    %2896 = vmatprep.subr.mxu0 0.0
    %2897 = vmatpush1.msra.mxu0 0.0
    %2898 = vmatprep.subr.mxu0 0.0
    %2899 = vmatpush1.msra.mxu0 0.0
    %2900 = vmatprep.subr.mxu0 0.0
    %2901 = vmatpush1.msra.mxu0 0.0
    %2902 = vmatprep.subr.mxu0 0.0
    %2903 = vmatpush1.msra.mxu0 0.0
    %2904 = vmatprep.subr.mxu0 0.0
    %2905 = vmatpush1.msra.mxu0 0.0
    %2906 = vmatprep.subr.mxu0 0.0
    %2907 = vmatpush1.msra.mxu0 0.0
    %2908 = vmatprep.subr.mxu0 0.0
    %2909 = vmatpush1.msra.mxu0 0.0
    %2910 = vmatprep.subr.mxu0 0.0
    %2911 = vmatpush1.msra.mxu0 0.0
    %2912 = vmatprep.subr.mxu0 0.0
    %2913 = vmatpush1.msra.mxu0 0.0
    %2914 = vmatprep.subr.mxu0 0.0
    %2915 = vmatpush1.msra.mxu0 0.0
    %2916 = vmatprep.subr.mxu0 0.0
    %2917 = vmatpush1.msra.mxu0 0.0
    %2918 = vmatprep.subr.mxu0 0.0
    %2919 = vmatpush1.msra.mxu0 0.0
    %2920 = vmatprep.subr.mxu0 0.0
    %2921 = vmatpush1.msra.mxu0 0.0
    %2922 = vmatprep.subr.mxu0 0.0
    %2923 = vmatpush1.msra.mxu0 0.0
    %2924 = vmatprep.subr.mxu0 0.0
    %2925 = vmatpush1.msra.mxu0 0.0
    %2926 = vmatprep.subr.mxu0 0.0
    %2927 = vmatpush1.msra.mxu0 0.0
    %2928 = vmatprep.subr.mxu0 0.0
    %2929 = vmatpush1.msra.mxu0 0.0
    %2930 = vmatprep.subr.mxu0 0.0
    %2931 = vmatpush1.msra.mxu0 0.0
    %2932 = vmatprep.subr.mxu0 0.0
    %2933 = vmatpush1.msra.mxu0 0.0
    %2934 = vmatprep.subr.mxu0 0.0
    %2935 = vmatpush1.msra.mxu0 0.0
    %2936 = vmatprep.subr.mxu0 0.0
    %2937 = vmatpush1.msra.mxu0 0.0
    %2938 = vmatprep.subr.mxu0 0.0
    %2939 = vmatpush1.msra.mxu0 0.0
    %2940 = vmatprep.mubr.f32.mxu0 0.0
    %2941 = vmatmul.mubr.f32.gmra.mrb[0].mxu0 %v2874
    %v2942 = vpop.f32.mrb[0].mxu0
    %v2943 = vadd.f32 0.0, %v2942
    %v2944 = vpop.f32.mrb[0].mxu0
    %2945 = vdwg.mxu0
    %2946 = vmatprep.subr.mxu0 0.0
    %2947 = vmatpush1.msra.mxu0 %v90
    %2948 = vmatprep.subr.mxu0 0.0
    %2949 = vmatpush1.msra.mxu0 %v91
    %2950 = vmatprep.subr.mxu0 0.0
    %2951 = vmatpush1.msra.mxu0 %v92
    %2952 = vmatprep.subr.mxu0 0.0
    %2953 = vmatpush1.msra.mxu0 %v93
    %2954 = vmatprep.subr.mxu0 0.0
    %2955 = vmatpush1.msra.mxu0 0.0
    %2956 = vmatprep.subr.mxu0 0.0
    %2957 = vmatpush1.msra.mxu0 0.0
    %2958 = vmatprep.subr.mxu0 0.0
    %2959 = vmatpush1.msra.mxu0 0.0
    %2960 = vmatprep.subr.mxu0 0.0
    %2961 = vmatpush1.msra.mxu0 0.0
    %2962 = vmatprep.subr.mxu0 0.0
    %2963 = vmatpush1.msra.mxu0 0.0
    %2964 = vmatprep.subr.mxu0 0.0
    %2965 = vmatpush1.msra.mxu0 0.0
    %2966 = vmatprep.subr.mxu0 0.0
    %2967 = vmatpush1.msra.mxu0 0.0
    %2968 = vmatprep.subr.mxu0 0.0
    %2969 = vmatpush1.msra.mxu0 0.0
    %2970 = vmatprep.subr.mxu0 0.0
    %2971 = vmatpush1.msra.mxu0 0.0
    %2972 = vmatprep.subr.mxu0 0.0
    %2973 = vmatpush1.msra.mxu0 0.0
    %2974 = vmatprep.subr.mxu0 0.0
    %2975 = vmatpush1.msra.mxu0 0.0
    %2976 = vmatprep.subr.mxu0 0.0
    %2977 = vmatpush1.msra.mxu0 0.0
    %2978 = vmatprep.subr.mxu0 0.0
    %2979 = vmatpush1.msra.mxu0 0.0
    %2980 = vmatprep.subr.mxu0 0.0
    %2981 = vmatpush1.msra.mxu0 0.0
    %2982 = vmatprep.subr.mxu0 0.0
    %2983 = vmatpush1.msra.mxu0 0.0
    %2984 = vmatprep.subr.mxu0 0.0
    %2985 = vmatpush1.msra.mxu0 0.0
    %2986 = vmatprep.subr.mxu0 0.0
    %2987 = vmatpush1.msra.mxu0 0.0
    %2988 = vmatprep.subr.mxu0 0.0
    %2989 = vmatpush1.msra.mxu0 0.0
    %2990 = vmatprep.subr.mxu0 0.0
    %2991 = vmatpush1.msra.mxu0 0.0
    %2992 = vmatprep.subr.mxu0 0.0
    %2993 = vmatpush1.msra.mxu0 0.0
    %2994 = vmatprep.subr.mxu0 0.0
    %2995 = vmatpush1.msra.mxu0 0.0
    %2996 = vmatprep.subr.mxu0 0.0
    %2997 = vmatpush1.msra.mxu0 0.0
    %2998 = vmatprep.subr.mxu0 0.0
    %2999 = vmatpush1.msra.mxu0 0.0
    %3000 = vmatprep.subr.mxu0 0.0
    %3001 = vmatpush1.msra.mxu0 0.0
    %3002 = vmatprep.subr.mxu0 0.0
    %3003 = vmatpush1.msra.mxu0 0.0
    %3004 = vmatprep.subr.mxu0 0.0
    %3005 = vmatpush1.msra.mxu0 0.0
    %3006 = vmatprep.subr.mxu0 0.0
    %3007 = vmatpush1.msra.mxu0 0.0
    %3008 = vmatprep.subr.mxu0 0.0
    %3009 = vmatpush1.msra.mxu0 0.0
    %3010 = vmatprep.mubr.f32.mxu0 0.0
    %3011 = vmatmul.mubr.f32.gmra.mrb[0].mxu0 %v2701
    %v3012 = vpop.f32.mrb[0].mxu0
    %v3013 = vadd.f32 %v2943, %v3012
    %v3014 = vpop.f32.mrb[0].mxu0
    %3015 = vdwg.mxu0
    %v3016 = vadd.f32 %v3013, %v118
    %v3017 = vxor.u32 %v3016, 2147483648
    %v3018 = vmul.f32 %v3017, 1.442695
    %v3019 = vpow.pop %v3018
    %v3020 = vadd.f32 %v3019, 1.0
    %v3021 = vrcp.pop %v3020
    %v3022 = vmul.f32 1.0, %v3021
    %v3023 = vtanh.pop %v3016
    %v3024 = vmul.f32 %v3022, %v2519
    %3026 = vrot.lane.b32.xlu0 %v3023, 64
    %v3027 = vpop.permute.xlu0 %3026
    %v3029 = vmul.f32 %v3022, %v3027
    %3031 = vrot.lane.b32.xlu0 %v3029, 32
    %v3032 = vpop.permute.xlu0 %3031
    %v3034 = vadd.f32 %v3024, %v3032
    %v3035 = vtanh.pop %v3034
    %3037 = vrot.lane.b32.xlu0 %v3035, 64
    %v3038 = vpop.permute.xlu0 %3037
    %v3040 = vmul.f32 %v3022, %v3038
    %3042 = vrot.lane.b32.xlu0 %v2695, 32
    %v3043 = vpop.permute.xlu0 %3042
    %v3044 = vsel %vm128, %v3043, 0
    %3046 = vmatprep.subr.mxu0 0.0
    %3047 = vmatpush1.msra.mxu0 %v102
    %3048 = vmatprep.subr.mxu0 0.0
    %3049 = vmatpush1.msra.mxu0 %v103
    %3050 = vmatprep.subr.mxu0 0.0
    %3051 = vmatpush1.msra.mxu0 %v104
    %3052 = vmatprep.subr.mxu0 0.0
    %3053 = vmatpush1.msra.mxu0 %v105
    %3054 = vmatprep.subr.mxu0 0.0
    %3055 = vmatpush1.msra.mxu0 0.0
    %3056 = vmatprep.subr.mxu0 0.0
    %3057 = vmatpush1.msra.mxu0 0.0
    %3058 = vmatprep.subr.mxu0 0.0
    %3059 = vmatpush1.msra.mxu0 0.0
    %3060 = vmatprep.subr.mxu0 0.0
    %3061 = vmatpush1.msra.mxu0 0.0
    %3062 = vmatprep.subr.mxu0 0.0
    %3063 = vmatpush1.msra.mxu0 0.0
    %3064 = vmatprep.subr.mxu0 0.0
    %3065 = vmatpush1.msra.mxu0 0.0
    %3066 = vmatprep.subr.mxu0 0.0
    %3067 = vmatpush1.msra.mxu0 0.0
    %3068 = vmatprep.subr.mxu0 0.0
    %3069 = vmatpush1.msra.mxu0 0.0
    %3070 = vmatprep.subr.mxu0 0.0
    %3071 = vmatpush1.msra.mxu0 0.0
    %3072 = vmatprep.subr.mxu0 0.0
    %3073 = vmatpush1.msra.mxu0 0.0
    %3074 = vmatprep.subr.mxu0 0.0
    %3075 = vmatpush1.msra.mxu0 0.0
    %3076 = vmatprep.subr.mxu0 0.0
    %3077 = vmatpush1.msra.mxu0 0.0
    %3078 = vmatprep.subr.mxu0 0.0
    %3079 = vmatpush1.msra.mxu0 0.0
    %3080 = vmatprep.subr.mxu0 0.0
    %3081 = vmatpush1.msra.mxu0 0.0
    %3082 = vmatprep.subr.mxu0 0.0
    %3083 = vmatpush1.msra.mxu0 0.0
    %3084 = vmatprep.subr.mxu0 0.0
    %3085 = vmatpush1.msra.mxu0 0.0
    %3086 = vmatprep.subr.mxu0 0.0
    %3087 = vmatpush1.msra.mxu0 0.0
    %3088 = vmatprep.subr.mxu0 0.0
    %3089 = vmatpush1.msra.mxu0 0.0
    %3090 = vmatprep.subr.mxu0 0.0
    %3091 = vmatpush1.msra.mxu0 0.0
    %3092 = vmatprep.subr.mxu0 0.0
    %3093 = vmatpush1.msra.mxu0 0.0
    %3094 = vmatprep.subr.mxu0 0.0
    %3095 = vmatpush1.msra.mxu0 0.0
    %3096 = vmatprep.subr.mxu0 0.0
    %3097 = vmatpush1.msra.mxu0 0.0
    %3098 = vmatprep.subr.mxu0 0.0
    %3099 = vmatpush1.msra.mxu0 0.0
    %3100 = vmatprep.subr.mxu0 0.0
    %3101 = vmatpush1.msra.mxu0 0.0
    %3102 = vmatprep.subr.mxu0 0.0
    %3103 = vmatpush1.msra.mxu0 0.0
    %3104 = vmatprep.subr.mxu0 0.0
    %3105 = vmatpush1.msra.mxu0 0.0
    %3106 = vmatprep.subr.mxu0 0.0
    %3107 = vmatpush1.msra.mxu0 0.0
    %3108 = vmatprep.subr.mxu0 0.0
    %3109 = vmatpush1.msra.mxu0 0.0
    %3110 = vmatprep.mubr.f32.mxu0 0.0
    %3111 = vmatmul.mubr.f32.gmra.mrb[0].mxu0 %v3044
    %v3112 = vpop.f32.mrb[0].mxu0
    %v3113 = vadd.f32 0.0, %v3112
    %v3114 = vpop.f32.mrb[0].mxu0
    %3115 = vdwg.mxu0
    %3116 = vmatprep.subr.mxu0 0.0
    %3117 = vmatpush1.msra.mxu0 %v98
    %3118 = vmatprep.subr.mxu0 0.0
    %3119 = vmatpush1.msra.mxu0 %v99
    %3120 = vmatprep.subr.mxu0 0.0
    %3121 = vmatpush1.msra.mxu0 %v100
    %3122 = vmatprep.subr.mxu0 0.0
    %3123 = vmatpush1.msra.mxu0 %v101
    %3124 = vmatprep.subr.mxu0 0.0
    %3125 = vmatpush1.msra.mxu0 0.0
    %3126 = vmatprep.subr.mxu0 0.0
    %3127 = vmatpush1.msra.mxu0 0.0
    %3128 = vmatprep.subr.mxu0 0.0
    %3129 = vmatpush1.msra.mxu0 0.0
    %3130 = vmatprep.subr.mxu0 0.0
    %3131 = vmatpush1.msra.mxu0 0.0
    %3132 = vmatprep.subr.mxu0 0.0
    %3133 = vmatpush1.msra.mxu0 0.0
    %3134 = vmatprep.subr.mxu0 0.0
    %3135 = vmatpush1.msra.mxu0 0.0
    %3136 = vmatprep.subr.mxu0 0.0
    %3137 = vmatpush1.msra.mxu0 0.0
    %3138 = vmatprep.subr.mxu0 0.0
    %3139 = vmatpush1.msra.mxu0 0.0
    %3140 = vmatprep.subr.mxu0 0.0
    %3141 = vmatpush1.msra.mxu0 0.0
    %3142 = vmatprep.subr.mxu0 0.0
    %3143 = vmatpush1.msra.mxu0 0.0
    %3144 = vmatprep.subr.mxu0 0.0
    %3145 = vmatpush1.msra.mxu0 0.0
    %3146 = vmatprep.subr.mxu0 0.0
    %3147 = vmatpush1.msra.mxu0 0.0
    %3148 = vmatprep.subr.mxu0 0.0
    %3149 = vmatpush1.msra.mxu0 0.0
    %3150 = vmatprep.subr.mxu0 0.0
    %3151 = vmatpush1.msra.mxu0 0.0
    %3152 = vmatprep.subr.mxu0 0.0
    %3153 = vmatpush1.msra.mxu0 0.0
    %3154 = vmatprep.subr.mxu0 0.0
    %3155 = vmatpush1.msra.mxu0 0.0
    %3156 = vmatprep.subr.mxu0 0.0
    %3157 = vmatpush1.msra.mxu0 0.0
    %3158 = vmatprep.subr.mxu0 0.0
    %3159 = vmatpush1.msra.mxu0 0.0
    %3160 = vmatprep.subr.mxu0 0.0
    %3161 = vmatpush1.msra.mxu0 0.0
    %3162 = vmatprep.subr.mxu0 0.0
    %3163 = vmatpush1.msra.mxu0 0.0
    %3164 = vmatprep.subr.mxu0 0.0
    %3165 = vmatpush1.msra.mxu0 0.0
    %3166 = vmatprep.subr.mxu0 0.0
    %3167 = vmatpush1.msra.mxu0 0.0
    %3168 = vmatprep.subr.mxu0 0.0
    %3169 = vmatpush1.msra.mxu0 0.0
    %3170 = vmatprep.subr.mxu0 0.0
    %3171 = vmatpush1.msra.mxu0 0.0
    %3172 = vmatprep.subr.mxu0 0.0
    %3173 = vmatpush1.msra.mxu0 0.0
    %3174 = vmatprep.subr.mxu0 0.0
    %3175 = vmatpush1.msra.mxu0 0.0
    %3176 = vmatprep.subr.mxu0 0.0
    %3177 = vmatpush1.msra.mxu0 0.0
    %3178 = vmatprep.subr.mxu0 0.0
    %3179 = vmatpush1.msra.mxu0 0.0
    %3180 = vmatprep.mubr.f32.mxu0 0.0
    %3181 = vmatmul.mubr.f32.gmra.mrb[0].mxu0 %v2874
    %v3182 = vpop.f32.mrb[0].mxu0
    %v3183 = vadd.f32 %v3113, %v3182
    %v3184 = vpop.f32.mrb[0].mxu0
    %3185 = vdwg.mxu0
    %v3186 = vadd.f32 %v3183, %v125
    %v3187 = vxor.u32 %v3186, 2147483648
    %v3188 = vmul.f32 %v3187, 1.442695
    %v3189 = vpow.pop %v3188
    %v3190 = vadd.f32 %v3189, 1.0
    %v3191 = vrcp.pop %v3190
    %v3192 = vmul.f32 1.0, %v3191
    %v3193 = vtanh.pop %v3186
    %v3194 = vmul.f32 %v3192, %v2689
    %3196 = vrot.lane.b32.xlu0 %v3193, 64
    %v3197 = vpop.permute.xlu0 %3196
    %v3199 = vmul.f32 %v3192, %v3197
    %3201 = vrot.lane.b32.xlu0 %v3199, 32
    %v3202 = vpop.permute.xlu0 %3201
    %v3204 = vadd.f32 %v3194, %v3202
    %v3205 = vtanh.pop %v3204
    %3207 = vrot.lane.b32.xlu0 %v3205, 64
    %v3208 = vpop.permute.xlu0 %3207
    %v3210 = vmul.f32 %v3192, %v3208
    %s3211 = scalar_lea.vmem %s0, 14
    %v3212 = vld [vmem:[%s3211] sm:$0x3]
    %3214 = vrot.lane.b32.xlu0 %v2870, 32
    %v3215 = vpop.permute.xlu0 %3214
    %v3216 = vsel %vm128, %v3215, 0
    %3218 = vmatprep.subr.mxu0 0.0
    %3219 = vmatpush1.msra.mxu0 %v86
    %3220 = vmatprep.subr.mxu0 0.0
    %3221 = vmatpush1.msra.mxu0 %v87
    %3222 = vmatprep.subr.mxu0 0.0
    %3223 = vmatpush1.msra.mxu0 %v88
    %3224 = vmatprep.subr.mxu0 0.0
    %3225 = vmatpush1.msra.mxu0 %v89
    %3226 = vmatprep.subr.mxu0 0.0
    %3227 = vmatpush1.msra.mxu0 0.0
    %3228 = vmatprep.subr.mxu0 0.0
    %3229 = vmatpush1.msra.mxu0 0.0
    %3230 = vmatprep.subr.mxu0 0.0
    %3231 = vmatpush1.msra.mxu0 0.0
    %3232 = vmatprep.subr.mxu0 0.0
    %3233 = vmatpush1.msra.mxu0 0.0
    %3234 = vmatprep.subr.mxu0 0.0
    %3235 = vmatpush1.msra.mxu0 0.0
    %3236 = vmatprep.subr.mxu0 0.0
    %3237 = vmatpush1.msra.mxu0 0.0
    %3238 = vmatprep.subr.mxu0 0.0
    %3239 = vmatpush1.msra.mxu0 0.0
    %3240 = vmatprep.subr.mxu0 0.0
    %3241 = vmatpush1.msra.mxu0 0.0
    %3242 = vmatprep.subr.mxu0 0.0
    %3243 = vmatpush1.msra.mxu0 0.0
    %3244 = vmatprep.subr.mxu0 0.0
    %3245 = vmatpush1.msra.mxu0 0.0
    %3246 = vmatprep.subr.mxu0 0.0
    %3247 = vmatpush1.msra.mxu0 0.0
    %3248 = vmatprep.subr.mxu0 0.0
    %3249 = vmatpush1.msra.mxu0 0.0
    %3250 = vmatprep.subr.mxu0 0.0
    %3251 = vmatpush1.msra.mxu0 0.0
    %3252 = vmatprep.subr.mxu0 0.0
    %3253 = vmatpush1.msra.mxu0 0.0
    %3254 = vmatprep.subr.mxu0 0.0
    %3255 = vmatpush1.msra.mxu0 0.0
    %3256 = vmatprep.subr.mxu0 0.0
    %3257 = vmatpush1.msra.mxu0 0.0
    %3258 = vmatprep.subr.mxu0 0.0
    %3259 = vmatpush1.msra.mxu0 0.0
    %3260 = vmatprep.subr.mxu0 0.0
    %3261 = vmatpush1.msra.mxu0 0.0
    %3262 = vmatprep.subr.mxu0 0.0
    %3263 = vmatpush1.msra.mxu0 0.0
    %3264 = vmatprep.subr.mxu0 0.0
    %3265 = vmatpush1.msra.mxu0 0.0
    %3266 = vmatprep.subr.mxu0 0.0
    %3267 = vmatpush1.msra.mxu0 0.0
    %3268 = vmatprep.subr.mxu0 0.0
    %3269 = vmatpush1.msra.mxu0 0.0
    %3270 = vmatprep.subr.mxu0 0.0
    %3271 = vmatpush1.msra.mxu0 0.0
    %3272 = vmatprep.subr.mxu0 0.0
    %3273 = vmatpush1.msra.mxu0 0.0
    %3274 = vmatprep.subr.mxu0 0.0
    %3275 = vmatpush1.msra.mxu0 0.0
    %3276 = vmatprep.subr.mxu0 0.0
    %3277 = vmatpush1.msra.mxu0 0.0
    %3278 = vmatprep.subr.mxu0 0.0
    %3279 = vmatpush1.msra.mxu0 0.0
    %3280 = vmatprep.subr.mxu0 0.0
    %3281 = vmatpush1.msra.mxu0 0.0
    %3282 = vmatprep.mubr.f32.mxu0 0.0
    %3283 = vmatmul.mubr.f32.gmra.mrb[0].mxu0 %v3216
    %v3284 = vpop.f32.mrb[0].mxu0
    %v3285 = vadd.f32 0.0, %v3284
    %v3286 = vpop.f32.mrb[0].mxu0
    %3287 = vdwg.mxu0
    %v3289 = vsel %vm202, %v3212, 0
    %3291 = vmatprep.subr.mxu0 0.0
    %3292 = vmatpush1.msra.mxu0 %v84
    %3293 = vmatprep.subr.mxu0 0.0
    %3294 = vmatpush1.msra.mxu0 %v85
    %3295 = vmatprep.subr.mxu0 0.0
    %3296 = vmatpush1.msra.mxu0 0.0
    %3297 = vmatprep.subr.mxu0 0.0
    %3298 = vmatpush1.msra.mxu0 0.0
    %3299 = vmatprep.subr.mxu0 0.0
    %3300 = vmatpush1.msra.mxu0 0.0
    %3301 = vmatprep.subr.mxu0 0.0
    %3302 = vmatpush1.msra.mxu0 0.0
    %3303 = vmatprep.subr.mxu0 0.0
    %3304 = vmatpush1.msra.mxu0 0.0
    %3305 = vmatprep.subr.mxu0 0.0
    %3306 = vmatpush1.msra.mxu0 0.0
    %3307 = vmatprep.subr.mxu0 0.0
    %3308 = vmatpush1.msra.mxu0 0.0
    %3309 = vmatprep.subr.mxu0 0.0
    %3310 = vmatpush1.msra.mxu0 0.0
    %3311 = vmatprep.subr.mxu0 0.0
    %3312 = vmatpush1.msra.mxu0 0.0
    %3313 = vmatprep.subr.mxu0 0.0
    %3314 = vmatpush1.msra.mxu0 0.0
    %3315 = vmatprep.subr.mxu0 0.0
    %3316 = vmatpush1.msra.mxu0 0.0
    %3317 = vmatprep.subr.mxu0 0.0
    %3318 = vmatpush1.msra.mxu0 0.0
    %3319 = vmatprep.subr.mxu0 0.0
    %3320 = vmatpush1.msra.mxu0 0.0
    %3321 = vmatprep.subr.mxu0 0.0
    %3322 = vmatpush1.msra.mxu0 0.0
    %3323 = vmatprep.subr.mxu0 0.0
    %3324 = vmatpush1.msra.mxu0 0.0
    %3325 = vmatprep.subr.mxu0 0.0
    %3326 = vmatpush1.msra.mxu0 0.0
    %3327 = vmatprep.subr.mxu0 0.0
    %3328 = vmatpush1.msra.mxu0 0.0
    %3329 = vmatprep.subr.mxu0 0.0
    %3330 = vmatpush1.msra.mxu0 0.0
    %3331 = vmatprep.subr.mxu0 0.0
    %3332 = vmatpush1.msra.mxu0 0.0
    %3333 = vmatprep.subr.mxu0 0.0
    %3334 = vmatpush1.msra.mxu0 0.0
    %3335 = vmatprep.subr.mxu0 0.0
    %3336 = vmatpush1.msra.mxu0 0.0
    %3337 = vmatprep.subr.mxu0 0.0
    %3338 = vmatpush1.msra.mxu0 0.0
    %3339 = vmatprep.subr.mxu0 0.0
    %3340 = vmatpush1.msra.mxu0 0.0
    %3341 = vmatprep.subr.mxu0 0.0
    %3342 = vmatpush1.msra.mxu0 0.0
    %3343 = vmatprep.subr.mxu0 0.0
    %3344 = vmatpush1.msra.mxu0 0.0
    %3345 = vmatprep.subr.mxu0 0.0
    %3346 = vmatpush1.msra.mxu0 0.0
    %3347 = vmatprep.subr.mxu0 0.0
    %3348 = vmatpush1.msra.mxu0 0.0
    %3349 = vmatprep.subr.mxu0 0.0
    %3350 = vmatpush1.msra.mxu0 0.0
    %3351 = vmatprep.subr.mxu0 0.0
    %3352 = vmatpush1.msra.mxu0 0.0
    %3353 = vmatprep.subr.mxu0 0.0
    %3354 = vmatpush1.msra.mxu0 0.0
    %3355 = vmatprep.mubr.f32.mxu0 0.0
    %3356 = vmatmul.mubr.f32.gmra.mrb[0].mxu0 %v3289
    %v3357 = vpop.f32.mrb[0].mxu0
    %v3358 = vadd.f32 %v3285, %v3357
    %v3359 = vpop.f32.mrb[0].mxu0
    %3360 = vdwg.mxu0
    %v3361 = vadd.f32 %v3358, %v111
    %v3362 = vxor.u32 %v3361, 2147483648
    %v3363 = vmul.f32 %v3362, 1.442695
    %v3364 = vpow.pop %v3363
    %v3365 = vadd.f32 %v3364, 1.0
    %v3366 = vrcp.pop %v3365
    %v3367 = vmul.f32 1.0, %v3366
    %v3368 = vtanh.pop %v3361
    %v3369 = vmul.f32 %v3367, %v2864
    %3371 = vrot.lane.b32.xlu0 %v3368, 64
    %v3372 = vpop.permute.xlu0 %3371
    %v3374 = vmul.f32 %v3367, %v3372
    %3376 = vrot.lane.b32.xlu0 %v3374, 32
    %v3377 = vpop.permute.xlu0 %3376
    %v3379 = vadd.f32 %v3369, %v3377
    %v3380 = vtanh.pop %v3379
    %3382 = vrot.lane.b32.xlu0 %v3380, 64
    %v3383 = vpop.permute.xlu0 %3382
    %v3385 = vmul.f32 %v3367, %v3383
    %3387 = vrot.lane.b32.xlu0 %v3040, 32
    %v3388 = vpop.permute.xlu0 %3387
    %v3389 = vsel %vm128, %v3388, 0
    %3391 = vmatprep.subr.mxu0 0.0
    %3392 = vmatpush1.msra.mxu0 %v94
    %3393 = vmatprep.subr.mxu0 0.0
    %3394 = vmatpush1.msra.mxu0 %v95
    %3395 = vmatprep.subr.mxu0 0.0
    %3396 = vmatpush1.msra.mxu0 %v96
    %3397 = vmatprep.subr.mxu0 0.0
    %3398 = vmatpush1.msra.mxu0 %v97
    %3399 = vmatprep.subr.mxu0 0.0
    %3400 = vmatpush1.msra.mxu0 0.0
    %3401 = vmatprep.subr.mxu0 0.0
    %3402 = vmatpush1.msra.mxu0 0.0
    %3403 = vmatprep.subr.mxu0 0.0
    %3404 = vmatpush1.msra.mxu0 0.0
    %3405 = vmatprep.subr.mxu0 0.0
    %3406 = vmatpush1.msra.mxu0 0.0
    %3407 = vmatprep.subr.mxu0 0.0
    %3408 = vmatpush1.msra.mxu0 0.0
    %3409 = vmatprep.subr.mxu0 0.0
    %3410 = vmatpush1.msra.mxu0 0.0
    %3411 = vmatprep.subr.mxu0 0.0
    %3412 = vmatpush1.msra.mxu0 0.0
    %3413 = vmatprep.subr.mxu0 0.0
    %3414 = vmatpush1.msra.mxu0 0.0
    %3415 = vmatprep.subr.mxu0 0.0
    %3416 = vmatpush1.msra.mxu0 0.0
    %3417 = vmatprep.subr.mxu0 0.0
    %3418 = vmatpush1.msra.mxu0 0.0
    %3419 = vmatprep.subr.mxu0 0.0
    %3420 = vmatpush1.msra.mxu0 0.0
    %3421 = vmatprep.subr.mxu0 0.0
    %3422 = vmatpush1.msra.mxu0 0.0
    %3423 = vmatprep.subr.mxu0 0.0
    %3424 = vmatpush1.msra.mxu0 0.0
    %3425 = vmatprep.subr.mxu0 0.0
    %3426 = vmatpush1.msra.mxu0 0.0
    %3427 = vmatprep.subr.mxu0 0.0
    %3428 = vmatpush1.msra.mxu0 0.0
    %3429 = vmatprep.subr.mxu0 0.0
    %3430 = vmatpush1.msra.mxu0 0.0
    %3431 = vmatprep.subr.mxu0 0.0
    %3432 = vmatpush1.msra.mxu0 0.0
    %3433 = vmatprep.subr.mxu0 0.0
    %3434 = vmatpush1.msra.mxu0 0.0
    %3435 = vmatprep.subr.mxu0 0.0
    %3436 = vmatpush1.msra.mxu0 0.0
    %3437 = vmatprep.subr.mxu0 0.0
    %3438 = vmatpush1.msra.mxu0 0.0
    %3439 = vmatprep.subr.mxu0 0.0
    %3440 = vmatpush1.msra.mxu0 0.0
    %3441 = vmatprep.subr.mxu0 0.0
    %3442 = vmatpush1.msra.mxu0 0.0
    %3443 = vmatprep.subr.mxu0 0.0
    %3444 = vmatpush1.msra.mxu0 0.0
    %3445 = vmatprep.subr.mxu0 0.0
    %3446 = vmatpush1.msra.mxu0 0.0
    %3447 = vmatprep.subr.mxu0 0.0
    %3448 = vmatpush1.msra.mxu0 0.0
    %3449 = vmatprep.subr.mxu0 0.0
    %3450 = vmatpush1.msra.mxu0 0.0
    %3451 = vmatprep.subr.mxu0 0.0
    %3452 = vmatpush1.msra.mxu0 0.0
    %3453 = vmatprep.subr.mxu0 0.0
    %3454 = vmatpush1.msra.mxu0 0.0
    %3455 = vmatprep.mubr.f32.mxu0 0.0
    %3456 = vmatmul.mubr.f32.gmra.mrb[0].mxu0 %v3389
    %v3457 = vpop.f32.mrb[0].mxu0
    %v3458 = vadd.f32 0.0, %v3457
    %v3459 = vpop.f32.mrb[0].mxu0
    %3460 = vdwg.mxu0
    %3461 = vmatprep.subr.mxu0 0.0
    %3462 = vmatpush1.msra.mxu0 %v90
    %3463 = vmatprep.subr.mxu0 0.0
    %3464 = vmatpush1.msra.mxu0 %v91
    %3465 = vmatprep.subr.mxu0 0.0
    %3466 = vmatpush1.msra.mxu0 %v92
    %3467 = vmatprep.subr.mxu0 0.0
    %3468 = vmatpush1.msra.mxu0 %v93
    %3469 = vmatprep.subr.mxu0 0.0
    %3470 = vmatpush1.msra.mxu0 0.0
    %3471 = vmatprep.subr.mxu0 0.0
    %3472 = vmatpush1.msra.mxu0 0.0
    %3473 = vmatprep.subr.mxu0 0.0
    %3474 = vmatpush1.msra.mxu0 0.0
    %3475 = vmatprep.subr.mxu0 0.0
    %3476 = vmatpush1.msra.mxu0 0.0
    %3477 = vmatprep.subr.mxu0 0.0
    %3478 = vmatpush1.msra.mxu0 0.0
    %3479 = vmatprep.subr.mxu0 0.0
    %3480 = vmatpush1.msra.mxu0 0.0
    %3481 = vmatprep.subr.mxu0 0.0
    %3482 = vmatpush1.msra.mxu0 0.0
    %3483 = vmatprep.subr.mxu0 0.0
    %3484 = vmatpush1.msra.mxu0 0.0
    %3485 = vmatprep.subr.mxu0 0.0
    %3486 = vmatpush1.msra.mxu0 0.0
    %3487 = vmatprep.subr.mxu0 0.0
    %3488 = vmatpush1.msra.mxu0 0.0
    %3489 = vmatprep.subr.mxu0 0.0
    %3490 = vmatpush1.msra.mxu0 0.0
    %3491 = vmatprep.subr.mxu0 0.0
    %3492 = vmatpush1.msra.mxu0 0.0
    %3493 = vmatprep.subr.mxu0 0.0
    %3494 = vmatpush1.msra.mxu0 0.0
    %3495 = vmatprep.subr.mxu0 0.0
    %3496 = vmatpush1.msra.mxu0 0.0
    %3497 = vmatprep.subr.mxu0 0.0
    %3498 = vmatpush1.msra.mxu0 0.0
    %3499 = vmatprep.subr.mxu0 0.0
    %3500 = vmatpush1.msra.mxu0 0.0
    %3501 = vmatprep.subr.mxu0 0.0
    %3502 = vmatpush1.msra.mxu0 0.0
    %3503 = vmatprep.subr.mxu0 0.0
    %3504 = vmatpush1.msra.mxu0 0.0
    %3505 = vmatprep.subr.mxu0 0.0
    %3506 = vmatpush1.msra.mxu0 0.0
    %3507 = vmatprep.subr.mxu0 0.0
    %3508 = vmatpush1.msra.mxu0 0.0
    %3509 = vmatprep.subr.mxu0 0.0
    %3510 = vmatpush1.msra.mxu0 0.0
    %3511 = vmatprep.subr.mxu0 0.0
    %3512 = vmatpush1.msra.mxu0 0.0
    %3513 = vmatprep.subr.mxu0 0.0
    %3514 = vmatpush1.msra.mxu0 0.0
    %3515 = vmatprep.subr.mxu0 0.0
    %3516 = vmatpush1.msra.mxu0 0.0
    %3517 = vmatprep.subr.mxu0 0.0
    %3518 = vmatpush1.msra.mxu0 0.0
    %3519 = vmatprep.subr.mxu0 0.0
    %3520 = vmatpush1.msra.mxu0 0.0
    %3521 = vmatprep.subr.mxu0 0.0
    %3522 = vmatpush1.msra.mxu0 0.0
    %3523 = vmatprep.subr.mxu0 0.0
    %3524 = vmatpush1.msra.mxu0 0.0
    %3525 = vmatprep.mubr.f32.mxu0 0.0
    %3526 = vmatmul.mubr.f32.gmra.mrb[0].mxu0 %v3216
    %v3527 = vpop.f32.mrb[0].mxu0
    %v3528 = vadd.f32 %v3458, %v3527
    %v3529 = vpop.f32.mrb[0].mxu0
    %3530 = vdwg.mxu0
    %v3531 = vadd.f32 %v3528, %v118
    %v3532 = vxor.u32 %v3531, 2147483648
    %v3533 = vmul.f32 %v3532, 1.442695
    %v3534 = vpow.pop %v3533
    %v3535 = vadd.f32 %v3534, 1.0
    %v3536 = vrcp.pop %v3535
    %v3537 = vmul.f32 1.0, %v3536
    %v3538 = vtanh.pop %v3531
    %v3539 = vmul.f32 %v3537, %v3034
    %3541 = vrot.lane.b32.xlu0 %v3538, 64
    %v3542 = vpop.permute.xlu0 %3541
    %v3544 = vmul.f32 %v3537, %v3542
    %3546 = vrot.lane.b32.xlu0 %v3544, 32
    %v3547 = vpop.permute.xlu0 %3546
    %v3549 = vadd.f32 %v3539, %v3547
    %v3550 = vtanh.pop %v3549
    %3552 = vrot.lane.b32.xlu0 %v3550, 64
    %v3553 = vpop.permute.xlu0 %3552
    %v3555 = vmul.f32 %v3537, %v3553
    %3557 = vrot.lane.b32.xlu0 %v3210, 32
    %v3558 = vpop.permute.xlu0 %3557
    %v3559 = vsel %vm128, %v3558, 0
    %3561 = vmatprep.subr.mxu0 0.0
    %3562 = vmatpush1.msra.mxu0 %v102
    %3563 = vmatprep.subr.mxu0 0.0
    %3564 = vmatpush1.msra.mxu0 %v103
    %3565 = vmatprep.subr.mxu0 0.0
    %3566 = vmatpush1.msra.mxu0 %v104
    %3567 = vmatprep.subr.mxu0 0.0
    %3568 = vmatpush1.msra.mxu0 %v105
    %3569 = vmatprep.subr.mxu0 0.0
    %3570 = vmatpush1.msra.mxu0 0.0
    %3571 = vmatprep.subr.mxu0 0.0
    %3572 = vmatpush1.msra.mxu0 0.0
    %3573 = vmatprep.subr.mxu0 0.0
    %3574 = vmatpush1.msra.mxu0 0.0
    %3575 = vmatprep.subr.mxu0 0.0
    %3576 = vmatpush1.msra.mxu0 0.0
    %3577 = vmatprep.subr.mxu0 0.0
    %3578 = vmatpush1.msra.mxu0 0.0
    %3579 = vmatprep.subr.mxu0 0.0
    %3580 = vmatpush1.msra.mxu0 0.0
    %3581 = vmatprep.subr.mxu0 0.0
    %3582 = vmatpush1.msra.mxu0 0.0
    %3583 = vmatprep.subr.mxu0 0.0
    %3584 = vmatpush1.msra.mxu0 0.0
    %3585 = vmatprep.subr.mxu0 0.0
    %3586 = vmatpush1.msra.mxu0 0.0
    %3587 = vmatprep.subr.mxu0 0.0
    %3588 = vmatpush1.msra.mxu0 0.0
    %3589 = vmatprep.subr.mxu0 0.0
    %3590 = vmatpush1.msra.mxu0 0.0
    %3591 = vmatprep.subr.mxu0 0.0
    %3592 = vmatpush1.msra.mxu0 0.0
    %3593 = vmatprep.subr.mxu0 0.0
    %3594 = vmatpush1.msra.mxu0 0.0
    %3595 = vmatprep.subr.mxu0 0.0
    %3596 = vmatpush1.msra.mxu0 0.0
    %3597 = vmatprep.subr.mxu0 0.0
    %3598 = vmatpush1.msra.mxu0 0.0
    %3599 = vmatprep.subr.mxu0 0.0
    %3600 = vmatpush1.msra.mxu0 0.0
    %3601 = vmatprep.subr.mxu0 0.0
    %3602 = vmatpush1.msra.mxu0 0.0
    %3603 = vmatprep.subr.mxu0 0.0
    %3604 = vmatpush1.msra.mxu0 0.0
    %3605 = vmatprep.subr.mxu0 0.0
    %3606 = vmatpush1.msra.mxu0 0.0
    %3607 = vmatprep.subr.mxu0 0.0
    %3608 = vmatpush1.msra.mxu0 0.0
    %3609 = vmatprep.subr.mxu0 0.0
    %3610 = vmatpush1.msra.mxu0 0.0
    %3611 = vmatprep.subr.mxu0 0.0
    %3612 = vmatpush1.msra.mxu0 0.0
    %3613 = vmatprep.subr.mxu0 0.0
    %3614 = vmatpush1.msra.mxu0 0.0
    %3615 = vmatprep.subr.mxu0 0.0
    %3616 = vmatpush1.msra.mxu0 0.0
    %3617 = vmatprep.subr.mxu0 0.0
    %3618 = vmatpush1.msra.mxu0 0.0
    %3619 = vmatprep.subr.mxu0 0.0
    %3620 = vmatpush1.msra.mxu0 0.0
    %3621 = vmatprep.subr.mxu0 0.0
    %3622 = vmatpush1.msra.mxu0 0.0
    %3623 = vmatprep.subr.mxu0 0.0
    %3624 = vmatpush1.msra.mxu0 0.0
    %3625 = vmatprep.mubr.f32.mxu0 0.0
    %3626 = vmatmul.mubr.f32.gmra.mrb[0].mxu0 %v3559
    %v3627 = vpop.f32.mrb[0].mxu0
    %v3628 = vadd.f32 0.0, %v3627
    %v3629 = vpop.f32.mrb[0].mxu0
    %3630 = vdwg.mxu0
    %3631 = vmatprep.subr.mxu0 0.0
    %3632 = vmatpush1.msra.mxu0 %v98
    %3633 = vmatprep.subr.mxu0 0.0
    %3634 = vmatpush1.msra.mxu0 %v99
    %3635 = vmatprep.subr.mxu0 0.0
    %3636 = vmatpush1.msra.mxu0 %v100
    %3637 = vmatprep.subr.mxu0 0.0
    %3638 = vmatpush1.msra.mxu0 %v101
    %3639 = vmatprep.subr.mxu0 0.0
    %3640 = vmatpush1.msra.mxu0 0.0
    %3641 = vmatprep.subr.mxu0 0.0
    %3642 = vmatpush1.msra.mxu0 0.0
    %3643 = vmatprep.subr.mxu0 0.0
    %3644 = vmatpush1.msra.mxu0 0.0
    %3645 = vmatprep.subr.mxu0 0.0
    %3646 = vmatpush1.msra.mxu0 0.0
    %3647 = vmatprep.subr.mxu0 0.0
    %3648 = vmatpush1.msra.mxu0 0.0
    %3649 = vmatprep.subr.mxu0 0.0
    %3650 = vmatpush1.msra.mxu0 0.0
    %3651 = vmatprep.subr.mxu0 0.0
    %3652 = vmatpush1.msra.mxu0 0.0
    %3653 = vmatprep.subr.mxu0 0.0
    %3654 = vmatpush1.msra.mxu0 0.0
    %3655 = vmatprep.subr.mxu0 0.0
    %3656 = vmatpush1.msra.mxu0 0.0
    %3657 = vmatprep.subr.mxu0 0.0
    %3658 = vmatpush1.msra.mxu0 0.0
    %3659 = vmatprep.subr.mxu0 0.0
    %3660 = vmatpush1.msra.mxu0 0.0
    %3661 = vmatprep.subr.mxu0 0.0
    %3662 = vmatpush1.msra.mxu0 0.0
    %3663 = vmatprep.subr.mxu0 0.0
    %3664 = vmatpush1.msra.mxu0 0.0
    %3665 = vmatprep.subr.mxu0 0.0
    %3666 = vmatpush1.msra.mxu0 0.0
    %3667 = vmatprep.subr.mxu0 0.0
    %3668 = vmatpush1.msra.mxu0 0.0
    %3669 = vmatprep.subr.mxu0 0.0
    %3670 = vmatpush1.msra.mxu0 0.0
    %3671 = vmatprep.subr.mxu0 0.0
    %3672 = vmatpush1.msra.mxu0 0.0
    %3673 = vmatprep.subr.mxu0 0.0
    %3674 = vmatpush1.msra.mxu0 0.0
    %3675 = vmatprep.subr.mxu0 0.0
    %3676 = vmatpush1.msra.mxu0 0.0
    %3677 = vmatprep.subr.mxu0 0.0
    %3678 = vmatpush1.msra.mxu0 0.0
    %3679 = vmatprep.subr.mxu0 0.0
    %3680 = vmatpush1.msra.mxu0 0.0
    %3681 = vmatprep.subr.mxu0 0.0
    %3682 = vmatpush1.msra.mxu0 0.0
    %3683 = vmatprep.subr.mxu0 0.0
    %3684 = vmatpush1.msra.mxu0 0.0
    %3685 = vmatprep.subr.mxu0 0.0
    %3686 = vmatpush1.msra.mxu0 0.0
    %3687 = vmatprep.subr.mxu0 0.0
    %3688 = vmatpush1.msra.mxu0 0.0
    %3689 = vmatprep.subr.mxu0 0.0
    %3690 = vmatpush1.msra.mxu0 0.0
    %3691 = vmatprep.subr.mxu0 0.0
    %3692 = vmatpush1.msra.mxu0 0.0
    %3693 = vmatprep.subr.mxu0 0.0
    %3694 = vmatpush1.msra.mxu0 0.0
    %3695 = vmatprep.mubr.f32.mxu0 0.0
    %3696 = vmatmul.mubr.f32.gmra.mrb[0].mxu0 %v3389
    %v3697 = vpop.f32.mrb[0].mxu0
    %v3698 = vadd.f32 %v3628, %v3697
    %v3699 = vpop.f32.mrb[0].mxu0
    %3700 = vdwg.mxu0
    %v3701 = vadd.f32 %v3698, %v125
    %v3702 = vxor.u32 %v3701, 2147483648
    %v3703 = vmul.f32 %v3702, 1.442695
    %v3704 = vpow.pop %v3703
    %v3705 = vadd.f32 %v3704, 1.0
    %v3706 = vrcp.pop %v3705
    %v3707 = vmul.f32 1.0, %v3706
    %v3708 = vtanh.pop %v3701
    %v3709 = vmul.f32 %v3707, %v3204
    %3711 = vrot.lane.b32.xlu0 %v3708, 64
    %v3712 = vpop.permute.xlu0 %3711
    %v3714 = vmul.f32 %v3707, %v3712
    %3716 = vrot.lane.b32.xlu0 %v3714, 32
    %v3717 = vpop.permute.xlu0 %3716
    %v3719 = vadd.f32 %v3709, %v3717
    %v3720 = vtanh.pop %v3719
    %3722 = vrot.lane.b32.xlu0 %v3720, 64
    %v3723 = vpop.permute.xlu0 %3722
    %v3725 = vmul.f32 %v3707, %v3723
    %3727 = vrot.lane.b32.xlu0 %v3555, 32
    %v3728 = vpop.permute.xlu0 %3727
    %v3729 = vsel %vm128, %v3728, 0
    %3731 = vmatprep.subr.mxu0 0.0
    %3732 = vmatpush1.msra.mxu0 %v94
    %3733 = vmatprep.subr.mxu0 0.0
    %3734 = vmatpush1.msra.mxu0 %v95
    %3735 = vmatprep.subr.mxu0 0.0
    %3736 = vmatpush1.msra.mxu0 %v96
    %3737 = vmatprep.subr.mxu0 0.0
    %3738 = vmatpush1.msra.mxu0 %v97
    %3739 = vmatprep.subr.mxu0 0.0
    %3740 = vmatpush1.msra.mxu0 0.0
    %3741 = vmatprep.subr.mxu0 0.0
    %3742 = vmatpush1.msra.mxu0 0.0
    %3743 = vmatprep.subr.mxu0 0.0
    %3744 = vmatpush1.msra.mxu0 0.0
    %3745 = vmatprep.subr.mxu0 0.0
    %3746 = vmatpush1.msra.mxu0 0.0
    %3747 = vmatprep.subr.mxu0 0.0
    %3748 = vmatpush1.msra.mxu0 0.0
    %3749 = vmatprep.subr.mxu0 0.0
    %3750 = vmatpush1.msra.mxu0 0.0
    %3751 = vmatprep.subr.mxu0 0.0
    %3752 = vmatpush1.msra.mxu0 0.0
    %3753 = vmatprep.subr.mxu0 0.0
    %3754 = vmatpush1.msra.mxu0 0.0
    %3755 = vmatprep.subr.mxu0 0.0
    %3756 = vmatpush1.msra.mxu0 0.0
    %3757 = vmatprep.subr.mxu0 0.0
    %3758 = vmatpush1.msra.mxu0 0.0
    %3759 = vmatprep.subr.mxu0 0.0
    %3760 = vmatpush1.msra.mxu0 0.0
    %3761 = vmatprep.subr.mxu0 0.0
    %3762 = vmatpush1.msra.mxu0 0.0
    %3763 = vmatprep.subr.mxu0 0.0
    %3764 = vmatpush1.msra.mxu0 0.0
    %3765 = vmatprep.subr.mxu0 0.0
    %3766 = vmatpush1.msra.mxu0 0.0
    %3767 = vmatprep.subr.mxu0 0.0
    %3768 = vmatpush1.msra.mxu0 0.0
    %3769 = vmatprep.subr.mxu0 0.0
    %3770 = vmatpush1.msra.mxu0 0.0
    %3771 = vmatprep.subr.mxu0 0.0
    %3772 = vmatpush1.msra.mxu0 0.0
    %3773 = vmatprep.subr.mxu0 0.0
    %3774 = vmatpush1.msra.mxu0 0.0
    %3775 = vmatprep.subr.mxu0 0.0
    %3776 = vmatpush1.msra.mxu0 0.0
    %3777 = vmatprep.subr.mxu0 0.0
    %3778 = vmatpush1.msra.mxu0 0.0
    %3779 = vmatprep.subr.mxu0 0.0
    %3780 = vmatpush1.msra.mxu0 0.0
    %3781 = vmatprep.subr.mxu0 0.0
    %3782 = vmatpush1.msra.mxu0 0.0
    %3783 = vmatprep.subr.mxu0 0.0
    %3784 = vmatpush1.msra.mxu0 0.0
    %3785 = vmatprep.subr.mxu0 0.0
    %3786 = vmatpush1.msra.mxu0 0.0
    %3787 = vmatprep.subr.mxu0 0.0
    %3788 = vmatpush1.msra.mxu0 0.0
    %3789 = vmatprep.subr.mxu0 0.0
    %3790 = vmatpush1.msra.mxu0 0.0
    %3791 = vmatprep.subr.mxu0 0.0
    %3792 = vmatpush1.msra.mxu0 0.0
    %3793 = vmatprep.subr.mxu0 0.0
    %3794 = vmatpush1.msra.mxu0 0.0
    %3795 = vmatprep.mubr.f32.mxu0 0.0
    %3796 = vmatmul.mubr.f32.gmra.mrb[0].mxu0 %v3729
    %v3797 = vpop.f32.mrb[0].mxu0
    %v3798 = vadd.f32 0.0, %v3797
    %v3799 = vpop.f32.mrb[0].mxu0
    %3800 = vdwg.mxu0
    %3802 = vrot.lane.b32.xlu0 %v3385, 32
    %v3803 = vpop.permute.xlu0 %3802
    %v3804 = vsel %vm128, %v3803, 0
    %3806 = vmatprep.subr.mxu0 0.0
    %3807 = vmatpush1.msra.mxu0 %v90
    %3808 = vmatprep.subr.mxu0 0.0
    %3809 = vmatpush1.msra.mxu0 %v91
    %3810 = vmatprep.subr.mxu0 0.0
    %3811 = vmatpush1.msra.mxu0 %v92
    %3812 = vmatprep.subr.mxu0 0.0
    %3813 = vmatpush1.msra.mxu0 %v93
    %3814 = vmatprep.subr.mxu0 0.0
    %3815 = vmatpush1.msra.mxu0 0.0
    %3816 = vmatprep.subr.mxu0 0.0
    %3817 = vmatpush1.msra.mxu0 0.0
    %3818 = vmatprep.subr.mxu0 0.0
    %3819 = vmatpush1.msra.mxu0 0.0
    %3820 = vmatprep.subr.mxu0 0.0
    %3821 = vmatpush1.msra.mxu0 0.0
    %3822 = vmatprep.subr.mxu0 0.0
    %3823 = vmatpush1.msra.mxu0 0.0
    %3824 = vmatprep.subr.mxu0 0.0
    %3825 = vmatpush1.msra.mxu0 0.0
    %3826 = vmatprep.subr.mxu0 0.0
    %3827 = vmatpush1.msra.mxu0 0.0
    %3828 = vmatprep.subr.mxu0 0.0
    %3829 = vmatpush1.msra.mxu0 0.0
    %3830 = vmatprep.subr.mxu0 0.0
    %3831 = vmatpush1.msra.mxu0 0.0
    %3832 = vmatprep.subr.mxu0 0.0
    %3833 = vmatpush1.msra.mxu0 0.0
    %3834 = vmatprep.subr.mxu0 0.0
    %3835 = vmatpush1.msra.mxu0 0.0
    %3836 = vmatprep.subr.mxu0 0.0
    %3837 = vmatpush1.msra.mxu0 0.0
    %3838 = vmatprep.subr.mxu0 0.0
    %3839 = vmatpush1.msra.mxu0 0.0
    %3840 = vmatprep.subr.mxu0 0.0
    %3841 = vmatpush1.msra.mxu0 0.0
    %3842 = vmatprep.subr.mxu0 0.0
    %3843 = vmatpush1.msra.mxu0 0.0
    %3844 = vmatprep.subr.mxu0 0.0
    %3845 = vmatpush1.msra.mxu0 0.0
    %3846 = vmatprep.subr.mxu0 0.0
    %3847 = vmatpush1.msra.mxu0 0.0
    %3848 = vmatprep.subr.mxu0 0.0
    %3849 = vmatpush1.msra.mxu0 0.0
    %3850 = vmatprep.subr.mxu0 0.0
    %3851 = vmatpush1.msra.mxu0 0.0
    %3852 = vmatprep.subr.mxu0 0.0
    %3853 = vmatpush1.msra.mxu0 0.0
    %3854 = vmatprep.subr.mxu0 0.0
    %3855 = vmatpush1.msra.mxu0 0.0
    %3856 = vmatprep.subr.mxu0 0.0
    %3857 = vmatpush1.msra.mxu0 0.0
    %3858 = vmatprep.subr.mxu0 0.0
    %3859 = vmatpush1.msra.mxu0 0.0
    %3860 = vmatprep.subr.mxu0 0.0
    %3861 = vmatpush1.msra.mxu0 0.0
    %3862 = vmatprep.subr.mxu0 0.0
    %3863 = vmatpush1.msra.mxu0 0.0
    %3864 = vmatprep.subr.mxu0 0.0
    %3865 = vmatpush1.msra.mxu0 0.0
    %3866 = vmatprep.subr.mxu0 0.0
    %3867 = vmatpush1.msra.mxu0 0.0
    %3868 = vmatprep.subr.mxu0 0.0
    %3869 = vmatpush1.msra.mxu0 0.0
    %3870 = vmatprep.mubr.f32.mxu0 0.0
    %3871 = vmatmul.mubr.f32.gmra.mrb[0].mxu0 %v3804
    %v3872 = vpop.f32.mrb[0].mxu0
    %v3873 = vadd.f32 %v3798, %v3872
    %v3874 = vpop.f32.mrb[0].mxu0
    %3875 = vdwg.mxu0
    %v3876 = vadd.f32 %v3873, %v118
    %v3877 = vxor.u32 %v3876, 2147483648
    %v3878 = vmul.f32 %v3877, 1.442695
    %v3879 = vpow.pop %v3878
    %v3880 = vadd.f32 %v3879, 1.0
    %v3881 = vrcp.pop %v3880
    %v3882 = vmul.f32 1.0, %v3881
    %v3883 = vtanh.pop %v3876
    %v3884 = vmul.f32 %v3882, %v3549
    %3886 = vrot.lane.b32.xlu0 %v3883, 64
    %v3887 = vpop.permute.xlu0 %3886
    %v3889 = vmul.f32 %v3882, %v3887
    %3891 = vrot.lane.b32.xlu0 %v3889, 32
    %v3892 = vpop.permute.xlu0 %3891
    %v3894 = vadd.f32 %v3884, %v3892
    %v3895 = vtanh.pop %v3894
    %3897 = vrot.lane.b32.xlu0 %v3895, 64
    %v3898 = vpop.permute.xlu0 %3897
    %v3900 = vmul.f32 %v3882, %v3898
    %3902 = vrot.lane.b32.xlu0 %v3725, 32
    %v3903 = vpop.permute.xlu0 %3902
    %v3904 = vsel %vm128, %v3903, 0
    %3906 = vmatprep.subr.mxu0 0.0
    %3907 = vmatpush1.msra.mxu0 %v102
    %3908 = vmatprep.subr.mxu0 0.0
    %3909 = vmatpush1.msra.mxu0 %v103
    %3910 = vmatprep.subr.mxu0 0.0
    %3911 = vmatpush1.msra.mxu0 %v104
    %3912 = vmatprep.subr.mxu0 0.0
    %3913 = vmatpush1.msra.mxu0 %v105
    %3914 = vmatprep.subr.mxu0 0.0
    %3915 = vmatpush1.msra.mxu0 0.0
    %3916 = vmatprep.subr.mxu0 0.0
    %3917 = vmatpush1.msra.mxu0 0.0
    %3918 = vmatprep.subr.mxu0 0.0
    %3919 = vmatpush1.msra.mxu0 0.0
    %3920 = vmatprep.subr.mxu0 0.0
    %3921 = vmatpush1.msra.mxu0 0.0
    %3922 = vmatprep.subr.mxu0 0.0
    %3923 = vmatpush1.msra.mxu0 0.0
    %3924 = vmatprep.subr.mxu0 0.0
    %3925 = vmatpush1.msra.mxu0 0.0
    %3926 = vmatprep.subr.mxu0 0.0
    %3927 = vmatpush1.msra.mxu0 0.0
    %3928 = vmatprep.subr.mxu0 0.0
    %3929 = vmatpush1.msra.mxu0 0.0
    %3930 = vmatprep.subr.mxu0 0.0
    %3931 = vmatpush1.msra.mxu0 0.0
    %3932 = vmatprep.subr.mxu0 0.0
    %3933 = vmatpush1.msra.mxu0 0.0
    %3934 = vmatprep.subr.mxu0 0.0
    %3935 = vmatpush1.msra.mxu0 0.0
    %3936 = vmatprep.subr.mxu0 0.0
    %3937 = vmatpush1.msra.mxu0 0.0
    %3938 = vmatprep.subr.mxu0 0.0
    %3939 = vmatpush1.msra.mxu0 0.0
    %3940 = vmatprep.subr.mxu0 0.0
    %3941 = vmatpush1.msra.mxu0 0.0
    %3942 = vmatprep.subr.mxu0 0.0
    %3943 = vmatpush1.msra.mxu0 0.0
    %3944 = vmatprep.subr.mxu0 0.0
    %3945 = vmatpush1.msra.mxu0 0.0
    %3946 = vmatprep.subr.mxu0 0.0
    %3947 = vmatpush1.msra.mxu0 0.0
    %3948 = vmatprep.subr.mxu0 0.0
    %3949 = vmatpush1.msra.mxu0 0.0
    %3950 = vmatprep.subr.mxu0 0.0
    %3951 = vmatpush1.msra.mxu0 0.0
    %3952 = vmatprep.subr.mxu0 0.0
    %3953 = vmatpush1.msra.mxu0 0.0
    %3954 = vmatprep.subr.mxu0 0.0
    %3955 = vmatpush1.msra.mxu0 0.0
    %3956 = vmatprep.subr.mxu0 0.0
    %3957 = vmatpush1.msra.mxu0 0.0
    %3958 = vmatprep.subr.mxu0 0.0
    %3959 = vmatpush1.msra.mxu0 0.0
    %3960 = vmatprep.subr.mxu0 0.0
    %3961 = vmatpush1.msra.mxu0 0.0
    %3962 = vmatprep.subr.mxu0 0.0
    %3963 = vmatpush1.msra.mxu0 0.0
    %3964 = vmatprep.subr.mxu0 0.0
    %3965 = vmatpush1.msra.mxu0 0.0
    %3966 = vmatprep.subr.mxu0 0.0
    %3967 = vmatpush1.msra.mxu0 0.0
    %3968 = vmatprep.subr.mxu0 0.0
    %3969 = vmatpush1.msra.mxu0 0.0
    %3970 = vmatprep.mubr.f32.mxu0 0.0
    %3971 = vmatmul.mubr.f32.gmra.mrb[0].mxu0 %v3904
    %v3972 = vpop.f32.mrb[0].mxu0
    %v3973 = vadd.f32 0.0, %v3972
    %v3974 = vpop.f32.mrb[0].mxu0
    %3975 = vdwg.mxu0
    %3976 = vmatprep.subr.mxu0 0.0
    %3977 = vmatpush1.msra.mxu0 %v98
    %3978 = vmatprep.subr.mxu0 0.0
    %3979 = vmatpush1.msra.mxu0 %v99
    %3980 = vmatprep.subr.mxu0 0.0
    %3981 = vmatpush1.msra.mxu0 %v100
    %3982 = vmatprep.subr.mxu0 0.0
    %3983 = vmatpush1.msra.mxu0 %v101
    %3984 = vmatprep.subr.mxu0 0.0
    %3985 = vmatpush1.msra.mxu0 0.0
    %3986 = vmatprep.subr.mxu0 0.0
    %3987 = vmatpush1.msra.mxu0 0.0
    %3988 = vmatprep.subr.mxu0 0.0
    %3989 = vmatpush1.msra.mxu0 0.0
    %3990 = vmatprep.subr.mxu0 0.0
    %3991 = vmatpush1.msra.mxu0 0.0
    %3992 = vmatprep.subr.mxu0 0.0
    %3993 = vmatpush1.msra.mxu0 0.0
    %3994 = vmatprep.subr.mxu0 0.0
    %3995 = vmatpush1.msra.mxu0 0.0
    %3996 = vmatprep.subr.mxu0 0.0
    %3997 = vmatpush1.msra.mxu0 0.0
    %3998 = vmatprep.subr.mxu0 0.0
    %3999 = vmatpush1.msra.mxu0 0.0
    %4000 = vmatprep.subr.mxu0 0.0
    %4001 = vmatpush1.msra.mxu0 0.0
    %4002 = vmatprep.subr.mxu0 0.0
    %4003 = vmatpush1.msra.mxu0 0.0
    %4004 = vmatprep.subr.mxu0 0.0
    %4005 = vmatpush1.msra.mxu0 0.0
    %4006 = vmatprep.subr.mxu0 0.0
    %4007 = vmatpush1.msra.mxu0 0.0
    %4008 = vmatprep.subr.mxu0 0.0
    %4009 = vmatpush1.msra.mxu0 0.0
    %4010 = vmatprep.subr.mxu0 0.0
    %4011 = vmatpush1.msra.mxu0 0.0
    %4012 = vmatprep.subr.mxu0 0.0
    %4013 = vmatpush1.msra.mxu0 0.0
    %4014 = vmatprep.subr.mxu0 0.0
    %4015 = vmatpush1.msra.mxu0 0.0
    %4016 = vmatprep.subr.mxu0 0.0
    %4017 = vmatpush1.msra.mxu0 0.0
    %4018 = vmatprep.subr.mxu0 0.0
    %4019 = vmatpush1.msra.mxu0 0.0
    %4020 = vmatprep.subr.mxu0 0.0
    %4021 = vmatpush1.msra.mxu0 0.0
    %4022 = vmatprep.subr.mxu0 0.0
    %4023 = vmatpush1.msra.mxu0 0.0
    %4024 = vmatprep.subr.mxu0 0.0
    %4025 = vmatpush1.msra.mxu0 0.0
    %4026 = vmatprep.subr.mxu0 0.0
    %4027 = vmatpush1.msra.mxu0 0.0
    %4028 = vmatprep.subr.mxu0 0.0
    %4029 = vmatpush1.msra.mxu0 0.0
    %4030 = vmatprep.subr.mxu0 0.0
    %4031 = vmatpush1.msra.mxu0 0.0
    %4032 = vmatprep.subr.mxu0 0.0
    %4033 = vmatpush1.msra.mxu0 0.0
    %4034 = vmatprep.subr.mxu0 0.0
    %4035 = vmatpush1.msra.mxu0 0.0
    %4036 = vmatprep.subr.mxu0 0.0
    %4037 = vmatpush1.msra.mxu0 0.0
    %4038 = vmatprep.subr.mxu0 0.0
    %4039 = vmatpush1.msra.mxu0 0.0
    %4040 = vmatprep.mubr.f32.mxu0 0.0
    %4041 = vmatmul.mubr.f32.gmra.mrb[0].mxu0 %v3729
    %v4042 = vpop.f32.mrb[0].mxu0
    %v4043 = vadd.f32 %v3973, %v4042
    %v4044 = vpop.f32.mrb[0].mxu0
    %4045 = vdwg.mxu0
    %v4046 = vadd.f32 %v4043, %v125
    %v4047 = vxor.u32 %v4046, 2147483648
    %v4048 = vmul.f32 %v4047, 1.442695
    %v4049 = vpow.pop %v4048
    %v4050 = vadd.f32 %v4049, 1.0
    %v4051 = vrcp.pop %v4050
    %v4052 = vmul.f32 1.0, %v4051
    %v4053 = vtanh.pop %v4046
    %v4054 = vmul.f32 %v4052, %v3719
    %4056 = vrot.lane.b32.xlu0 %v4053, 64
    %v4057 = vpop.permute.xlu0 %4056
    %v4059 = vmul.f32 %v4052, %v4057
    %4061 = vrot.lane.b32.xlu0 %v4059, 32
    %v4062 = vpop.permute.xlu0 %4061
    %v4064 = vadd.f32 %v4054, %v4062
    %v4065 = vtanh.pop %v4064
    %4067 = vrot.lane.b32.xlu0 %v4065, 64
    %v4068 = vpop.permute.xlu0 %4067
    %v4070 = vmul.f32 %v4052, %v4068
    %4072 = vrot.lane.b32.xlu0 %v4070, 32
    %v4073 = vpop.permute.xlu0 %4072
    %v4074 = vsel %vm128, %v4073, 0
    %4076 = vmatprep.subr.mxu0 0.0
    %4077 = vmatpush1.msra.mxu0 %v102
    %4078 = vmatprep.subr.mxu0 0.0
    %4079 = vmatpush1.msra.mxu0 %v103
    %4080 = vmatprep.subr.mxu0 0.0
    %4081 = vmatpush1.msra.mxu0 %v104
    %4082 = vmatprep.subr.mxu0 0.0
    %4083 = vmatpush1.msra.mxu0 %v105
    %4084 = vmatprep.subr.mxu0 0.0
    %4085 = vmatpush1.msra.mxu0 0.0
    %4086 = vmatprep.subr.mxu0 0.0
    %4087 = vmatpush1.msra.mxu0 0.0
    %4088 = vmatprep.subr.mxu0 0.0
    %4089 = vmatpush1.msra.mxu0 0.0
    %4090 = vmatprep.subr.mxu0 0.0
    %4091 = vmatpush1.msra.mxu0 0.0
    %4092 = vmatprep.subr.mxu0 0.0
    %4093 = vmatpush1.msra.mxu0 0.0
    %4094 = vmatprep.subr.mxu0 0.0
    %4095 = vmatpush1.msra.mxu0 0.0
    %4096 = vmatprep.subr.mxu0 0.0
    %4097 = vmatpush1.msra.mxu0 0.0
    %4098 = vmatprep.subr.mxu0 0.0
    %4099 = vmatpush1.msra.mxu0 0.0
    %4100 = vmatprep.subr.mxu0 0.0
    %4101 = vmatpush1.msra.mxu0 0.0
    %4102 = vmatprep.subr.mxu0 0.0
    %4103 = vmatpush1.msra.mxu0 0.0
    %4104 = vmatprep.subr.mxu0 0.0
    %4105 = vmatpush1.msra.mxu0 0.0
    %4106 = vmatprep.subr.mxu0 0.0
    %4107 = vmatpush1.msra.mxu0 0.0
    %4108 = vmatprep.subr.mxu0 0.0
    %4109 = vmatpush1.msra.mxu0 0.0
    %4110 = vmatprep.subr.mxu0 0.0
    %4111 = vmatpush1.msra.mxu0 0.0
    %4112 = vmatprep.subr.mxu0 0.0
    %4113 = vmatpush1.msra.mxu0 0.0
    %4114 = vmatprep.subr.mxu0 0.0
    %4115 = vmatpush1.msra.mxu0 0.0
    %4116 = vmatprep.subr.mxu0 0.0
    %4117 = vmatpush1.msra.mxu0 0.0
    %4118 = vmatprep.subr.mxu0 0.0
    %4119 = vmatpush1.msra.mxu0 0.0
    %4120 = vmatprep.subr.mxu0 0.0
    %4121 = vmatpush1.msra.mxu0 0.0
    %4122 = vmatprep.subr.mxu0 0.0
    %4123 = vmatpush1.msra.mxu0 0.0
    %4124 = vmatprep.subr.mxu0 0.0
    %4125 = vmatpush1.msra.mxu0 0.0
    %4126 = vmatprep.subr.mxu0 0.0
    %4127 = vmatpush1.msra.mxu0 0.0
    %4128 = vmatprep.subr.mxu0 0.0
    %4129 = vmatpush1.msra.mxu0 0.0
    %4130 = vmatprep.subr.mxu0 0.0
    %4131 = vmatpush1.msra.mxu0 0.0
    %4132 = vmatprep.subr.mxu0 0.0
    %4133 = vmatpush1.msra.mxu0 0.0
    %4134 = vmatprep.subr.mxu0 0.0
    %4135 = vmatpush1.msra.mxu0 0.0
    %4136 = vmatprep.subr.mxu0 0.0
    %4137 = vmatpush1.msra.mxu0 0.0
    %4138 = vmatprep.subr.mxu0 0.0
    %4139 = vmatpush1.msra.mxu0 0.0
    %4140 = vmatprep.mubr.f32.mxu0 0.0
    %4141 = vmatmul.mubr.f32.gmra.mrb[0].mxu0 %v4074
    %v4142 = vpop.f32.mrb[0].mxu0
    %v4143 = vadd.f32 0.0, %v4142
    %v4144 = vpop.f32.mrb[0].mxu0
    %4145 = vdwg.mxu0
    %4147 = vrot.lane.b32.xlu0 %v3900, 32
    %v4148 = vpop.permute.xlu0 %4147
    %v4149 = vsel %vm128, %v4148, 0
    %4151 = vmatprep.subr.mxu0 0.0
    %4152 = vmatpush1.msra.mxu0 %v98
    %4153 = vmatprep.subr.mxu0 0.0
    %4154 = vmatpush1.msra.mxu0 %v99
    %4155 = vmatprep.subr.mxu0 0.0
    %4156 = vmatpush1.msra.mxu0 %v100
    %4157 = vmatprep.subr.mxu0 0.0
    %4158 = vmatpush1.msra.mxu0 %v101
    %4159 = vmatprep.subr.mxu0 0.0
    %4160 = vmatpush1.msra.mxu0 0.0
    %4161 = vmatprep.subr.mxu0 0.0
    %4162 = vmatpush1.msra.mxu0 0.0
    %4163 = vmatprep.subr.mxu0 0.0
    %4164 = vmatpush1.msra.mxu0 0.0
    %4165 = vmatprep.subr.mxu0 0.0
    %4166 = vmatpush1.msra.mxu0 0.0
    %4167 = vmatprep.subr.mxu0 0.0
    %4168 = vmatpush1.msra.mxu0 0.0
    %4169 = vmatprep.subr.mxu0 0.0
    %4170 = vmatpush1.msra.mxu0 0.0
    %4171 = vmatprep.subr.mxu0 0.0
    %4172 = vmatpush1.msra.mxu0 0.0
    %4173 = vmatprep.subr.mxu0 0.0
    %4174 = vmatpush1.msra.mxu0 0.0
    %4175 = vmatprep.subr.mxu0 0.0
    %4176 = vmatpush1.msra.mxu0 0.0
    %4177 = vmatprep.subr.mxu0 0.0
    %4178 = vmatpush1.msra.mxu0 0.0
    %4179 = vmatprep.subr.mxu0 0.0
    %4180 = vmatpush1.msra.mxu0 0.0
    %4181 = vmatprep.subr.mxu0 0.0
    %4182 = vmatpush1.msra.mxu0 0.0
    %4183 = vmatprep.subr.mxu0 0.0
    %4184 = vmatpush1.msra.mxu0 0.0
    %4185 = vmatprep.subr.mxu0 0.0
    %4186 = vmatpush1.msra.mxu0 0.0
    %4187 = vmatprep.subr.mxu0 0.0
    %4188 = vmatpush1.msra.mxu0 0.0
    %4189 = vmatprep.subr.mxu0 0.0
    %4190 = vmatpush1.msra.mxu0 0.0
    %4191 = vmatprep.subr.mxu0 0.0
    %4192 = vmatpush1.msra.mxu0 0.0
    %4193 = vmatprep.subr.mxu0 0.0
    %4194 = vmatpush1.msra.mxu0 0.0
    %4195 = vmatprep.subr.mxu0 0.0
    %4196 = vmatpush1.msra.mxu0 0.0
    %4197 = vmatprep.subr.mxu0 0.0
    %4198 = vmatpush1.msra.mxu0 0.0
    %4199 = vmatprep.subr.mxu0 0.0
    %4200 = vmatpush1.msra.mxu0 0.0
    %4201 = vmatprep.subr.mxu0 0.0
    %4202 = vmatpush1.msra.mxu0 0.0
    %4203 = vmatprep.subr.mxu0 0.0
    %4204 = vmatpush1.msra.mxu0 0.0
    %4205 = vmatprep.subr.mxu0 0.0
    %4206 = vmatpush1.msra.mxu0 0.0
    %4207 = vmatprep.subr.mxu0 0.0
    %4208 = vmatpush1.msra.mxu0 0.0
    %4209 = vmatprep.subr.mxu0 0.0
    %4210 = vmatpush1.msra.mxu0 0.0
    %4211 = vmatprep.subr.mxu0 0.0
    %4212 = vmatpush1.msra.mxu0 0.0
    %4213 = vmatprep.subr.mxu0 0.0
    %4214 = vmatpush1.msra.mxu0 0.0
    %4215 = vmatprep.mubr.f32.mxu0 0.0
    %4216 = vmatmul.mubr.f32.gmra.mrb[0].mxu0 %v4149
    %v4217 = vpop.f32.mrb[0].mxu0
    %v4218 = vadd.f32 %v4143, %v4217
    %v4219 = vpop.f32.mrb[0].mxu0
    %4220 = vdwg.mxu0
    %v4221 = vadd.f32 %v4218, %v125
    %v4222 = vxor.u32 %v4221, 2147483648
    %v4223 = vmul.f32 %v4222, 1.442695
    %v4224 = vpow.pop %v4223
    %v4225 = vadd.f32 %v4224, 1.0
    %v4226 = vrcp.pop %v4225
    %v4227 = vmul.f32 1.0, %v4226
    %v4228 = vtanh.pop %v4221
    %v4229 = vmul.f32 %v4227, %v4064
    %4231 = vrot.lane.b32.xlu0 %v4228, 64
    %v4232 = vpop.permute.xlu0 %4231
    %v4234 = vmul.f32 %v4227, %v4232
    %4236 = vrot.lane.b32.xlu0 %v4234, 32
    %v4237 = vpop.permute.xlu0 %4236
    %v4239 = vadd.f32 %v4229, %v4237
    %v4240 = vtanh.pop %v4239
    %4242 = vrot.lane.b32.xlu0 %v4240, 64
    %v4243 = vpop.permute.xlu0 %4242
    %v4245 = vmul.f32 %v4227, %v4243
    %v4246 = vld [vmem:[%s10] sm:$0xff]
    %v4247 = vld [vmem:[%s10 + $0x8] sm:$0xff]
    %v4248 = vld [vmem:[%s10 + $0x10] sm:$0xff]
    %v4249 = vld [vmem:[%s10 + $0x18] sm:$0xff]
    %v4250 = vld [vmem:[#allocation2] sm:$0x1]
    %v4252 = vlaneseq
    %v4253 = vshrl.u32 %v4252, 7
    %v4254 = vsub.s32 0, %v4253
    %v4255 = vrot.slane %v4250, %v4254
    %4258 = vrot.lane.b32.xlu0 %v4245, 32
    %v4259 = vpop.permute.xlu0 %4258
    %v4260 = vsel %vm128, %v4259, 0
    %4262 = vmatprep.subr.mxu0 0.0
    %4263 = vmatpush1.msra.mxu0 %v4246
    %4264 = vmatprep.subr.mxu0 0.0
    %4265 = vmatpush1.msra.mxu0 %v4247
    %4266 = vmatprep.subr.mxu0 0.0
    %4267 = vmatpush1.msra.mxu0 %v4248
    %4268 = vmatprep.subr.mxu0 0.0
    %4269 = vmatpush1.msra.mxu0 %v4249
    %4270 = vmatprep.subr.mxu0 0.0
    %4271 = vmatpush1.msra.mxu0 0.0
    %4272 = vmatprep.subr.mxu0 0.0
    %4273 = vmatpush1.msra.mxu0 0.0
    %4274 = vmatprep.subr.mxu0 0.0
    %4275 = vmatpush1.msra.mxu0 0.0
    %4276 = vmatprep.subr.mxu0 0.0
    %4277 = vmatpush1.msra.mxu0 0.0
    %4278 = vmatprep.subr.mxu0 0.0
    %4279 = vmatpush1.msra.mxu0 0.0
    %4280 = vmatprep.subr.mxu0 0.0
    %4281 = vmatpush1.msra.mxu0 0.0
    %4282 = vmatprep.subr.mxu0 0.0
    %4283 = vmatpush1.msra.mxu0 0.0
    %4284 = vmatprep.subr.mxu0 0.0
    %4285 = vmatpush1.msra.mxu0 0.0
    %4286 = vmatprep.subr.mxu0 0.0
    %4287 = vmatpush1.msra.mxu0 0.0
    %4288 = vmatprep.subr.mxu0 0.0
    %4289 = vmatpush1.msra.mxu0 0.0
    %4290 = vmatprep.subr.mxu0 0.0
    %4291 = vmatpush1.msra.mxu0 0.0
    %4292 = vmatprep.subr.mxu0 0.0
    %4293 = vmatpush1.msra.mxu0 0.0
    %4294 = vmatprep.subr.mxu0 0.0
    %4295 = vmatpush1.msra.mxu0 0.0
    %4296 = vmatprep.subr.mxu0 0.0
    %4297 = vmatpush1.msra.mxu0 0.0
    %4298 = vmatprep.subr.mxu0 0.0
    %4299 = vmatpush1.msra.mxu0 0.0
    %4300 = vmatprep.subr.mxu0 0.0
    %4301 = vmatpush1.msra.mxu0 0.0
    %4302 = vmatprep.subr.mxu0 0.0
    %4303 = vmatpush1.msra.mxu0 0.0
    %4304 = vmatprep.subr.mxu0 0.0
    %4305 = vmatpush1.msra.mxu0 0.0
    %4306 = vmatprep.subr.mxu0 0.0
    %4307 = vmatpush1.msra.mxu0 0.0
    %4308 = vmatprep.subr.mxu0 0.0
    %4309 = vmatpush1.msra.mxu0 0.0
    %4310 = vmatprep.subr.mxu0 0.0
    %4311 = vmatpush1.msra.mxu0 0.0
    %4312 = vmatprep.subr.mxu0 0.0
    %4313 = vmatpush1.msra.mxu0 0.0
    %4314 = vmatprep.subr.mxu0 0.0
    %4315 = vmatpush1.msra.mxu0 0.0
    %4316 = vmatprep.subr.mxu0 0.0
    %4317 = vmatpush1.msra.mxu0 0.0
    %4318 = vmatprep.subr.mxu0 0.0
    %4319 = vmatpush1.msra.mxu0 0.0
    %4320 = vmatprep.subr.mxu0 0.0
    %4321 = vmatpush1.msra.mxu0 0.0
    %4322 = vmatprep.subr.mxu0 0.0
    %4323 = vmatpush1.msra.mxu0 0.0
    %4324 = vmatprep.subr.mxu0 0.0
    %4325 = vmatpush1.msra.mxu0 0.0
    %4326 = vmatprep.mubr.f32.mxu0 0.0
    %4327 = vmatmul.mubr.f32.gmra.mrb[0].mxu0 %v4260
    %v4328 = vpop.f32.mrb[0].mxu0
    %v4329 = vadd.f32 %v4255, %v4328
    %v4330 = vpop.f32.mrb[0].mxu0
    %4331 = vdwg.mxu0
    %vm4332 = vcmask 1024
    %4333 = vst.msk [vmem:[%s12] sm:$0x3] %vm4332, %v4329
    // Predicated region
    $region62: #{lstm_model_forward.1} parent=1 // pred_check
      _
    $region63: #{lstm_model_forward.1} parent=1 // pred_check_branch
      %4335 = sbr.rel (0) target = $region65
    $region64: #{lstm_model_forward.1} parent=1 // pred_region
      _
    $region65: #{lstm_model_forward.1} parent=1 // pred_fallthru
      _
    // Predicated region
    $region66: #{lstm_model_forward.1} parent=1 // pred_check
      _
    $region67: #{lstm_model_forward.1} parent=1 // pred_check_branch
      %4337 = sbr.rel (0) target = $region69
    $region68: #{lstm_model_forward.1} parent=1 // pred_region
      _
    $region69: #{lstm_model_forward.1} parent=1 // pred_fallthru
      _
    %4338 = vsyncpa [#allocation4], 1
    %4339 = vsyncpa [#allocation6], 1

</llo_original>
